<compile_context>
chip_gen: v7x
topology: tpu7x:2x2x1
jax: 0.10.0
libtpu: 0.0.40
codegen_flags: <defaults>
</compile_context>

<pallas_src>
import functools

import jax
import jax.numpy as jnp
from jax.experimental import pallas as pl
from jax.experimental.pallas import tpu as pltpu


def _slab_layout(in_planes, kernels):
    """Column offsets of each (transposed) weight / bias in the packed slab."""
    K = kernels
    assert in_planes <= K
    return {
        "w0": 0,          # (K, in_planes)  layer-0 conv (BN folded), transposed
        "w1a": K,         # (K, K)          layer-1 "x" part
        "w1bc": 2 * K,    # (K, K)          layer-1 "row" part (Wb + Wc)
        "w2a": 3 * K,
        "w2bc": 4 * K,
        "w3a": 5 * K,     # (K, K)  row 0 = real out channel, rest zero-padded
        "w3bc": 6 * K,
        "b": 7 * K,       # 4 bias columns: b0', b1', b2', b3
        "cols": 7 * K + 4,
    }


def _game_pooling_kernel(x_ref, p_ref, o_ref, *, Cin, H, W, TB, temperature):
    K = p_ref.shape[0]
    HW = H * W
    N = TB * HW          # flattened (sample, row, col) -> lane axis (dense)
    G = TB * H           # number of (sample, row) groups

    c = _slab_layout(Cin, K)
    P = p_ref[...]                                       # (K, 7K+4), resident
    w0T = P[:, c["w0"]:c["w0"] + Cin]                    # (K, Cin)
    w1aT, w1bcT = P[:, c["w1a"]:c["w1a"] + K], P[:, c["w1bc"]:c["w1bc"] + K]
    w2aT, w2bcT = P[:, c["w2a"]:c["w2a"] + K], P[:, c["w2bc"]:c["w2bc"] + K]
    w3aT = P[0:1, c["w3a"]:c["w3a"] + K]                 # (1, K) only real row
    w3bcT = P[0:1, c["w3bc"]:c["w3bc"] + K]              # (1, K)
    b0 = P[:, c["b"] + 0:c["b"] + 1]                     # (K, 1) bias columns
    b1 = P[:, c["b"] + 1:c["b"] + 2]
    b2 = P[:, c["b"] + 2:c["b"] + 3]
    b3 = P[0:1, c["b"] + 3:c["b"] + 4]                   # (1, 1)

    # Channels-leading input (Cin, TB*H*W): spatial flattened on the lane axis.
    if TB == 1:
        x = x_ref[0]
    else:
        x = jnp.concatenate([x_ref[t] for t in range(TB)], axis=-1)

    def act_pool(z):
        """ReLU + per-(sample,row) max over W (the 'row' half of pool_and_cat)."""
        y = jnp.maximum(z, 0.0)                          # (Kout, N)
        row = jnp.max(y.reshape(-1, G, W), axis=-1)      # (Kout, G)
        return y, row

    def mix(y, row, waT, wbcT, b):
        """Next 1x1 conv on cat(y, row, row): waT @ y + (wbcT @ row) bcast over W."""
        z = jnp.dot(waT, y, preferred_element_type=jnp.float32) + b      # (Kout, N)
        r = jnp.dot(wbcT, row, preferred_element_type=jnp.float32)       # (Kout, G)
        z = z.reshape(-1, G, W) + r[:, :, None]
        return z.reshape(-1, N)

    # layer 0: 1x1 conv (+ folded BN/bias) -> ReLU -> row max
    y, row = act_pool(jnp.dot(w0T, x, preferred_element_type=jnp.float32) + b0)
    # layers 1, 2: split-weight conv on cat(y, row, row) -> ReLU -> row max
    y, row = act_pool(mix(y, row, w1aT, w1bcT, b1))
    y, row = act_pool(mix(y, row, w2aT, w2bcT, b2))
    # layer 3: Dropout(p=0) is identity; 1x1 conv to out_planes (=1).
    # No BN / activation / pool_and_cat after it.
    z = mix(y, row, w3aT, w3bcT, b3)                     # (1, N)

    # head: F.max_pool2d(kernel=(1, W)) -> softmax over H with temperature.
    m = jnp.max(z.reshape(TB, H, W), axis=-1)            # (TB, H)
    logits = m * (1.0 / temperature)
    logits = logits - jnp.max(logits, axis=-1, keepdims=True)
    e = jnp.exp(logits)
    denom = jnp.sum(e, axis=-1, keepdims=True)
    # Exact normalization (approx reciprocal was too lossy for sum-to-1).
    o_ref[0] = e / denom                                 # lane-dense (TB, H) store


def game_model_pooling(x_nchw, param_slab, *, temperature=1.0, block_b=None):
    """x_nchw: (B, Cin, H, W) float32. Returns (B, out_planes=1, H) float32."""
    B, Cin, H, W = x_nchw.shape
    if block_b is None:
        # Batch several samples per grid step (amortize per-step overhead) but
        # keep >= 2 grid steps so the "parallel" axis shards over both v7x TCs.
        block_b = B // 2 if (B >= 2 and B % 2 == 0) else 1
    assert B % block_b == 0
    grid_b = B // block_b

    # Free, contiguous reshape; keeps NCHW order (no HBM transpose round-trip).
    x = x_nchw.reshape(B, Cin, H * W).astype(jnp.float32)

    out = pl.pallas_call(
        functools.partial(_game_pooling_kernel, Cin=Cin, H=H, W=W, TB=block_b,
                          temperature=temperature),
        out_shape=jax.ShapeDtypeStruct((grid_b, block_b, H), jnp.float32),
        grid_spec=pltpu.PrefetchScalarGridSpec(
            num_scalar_prefetch=0,
            grid=(grid_b,),
            in_specs=[
                pl.BlockSpec((block_b, Cin, H * W), lambda b: (b, 0, 0)),
                pl.BlockSpec(param_slab.shape, lambda b: (0, 0)),   # resident slab
            ],
            out_specs=pl.BlockSpec((1, block_b, H), lambda b: (b, 0, 0)),
        ),
        compiler_params=pltpu.CompilerParams(
            dimension_semantics=("parallel",)),
    )(x, param_slab)

    # out_planes == 1, so (grid_b, block_b, H) -> (B, 1, H) is a pure reshape.
    return out.reshape(B, 1, H)


def init_params(key, in_planes=2, out_planes=1, kernels=8):
    """Raw module parameters (matching __init__ shapes) in (Cin, Cout) convention.
    Conv weights: kaiming_normal (fan_in, gain sqrt(2)); biases: Conv2d default
    uniform(+-1/sqrt(fan_in)). BatchNorm: gamma=1, beta=0 (per _init_weight) with
    non-trivial running stats (eval mode) so the BN folding is exercised."""
    K = kernels

    def kaiming(k, cin, cout):
        return jax.random.normal(k, (cin, cout), jnp.float32) * (2.0 / cin) ** 0.5

    def bias(k, cin, cout):
        bound = 1.0 / (cin ** 0.5)
        return jax.random.uniform(k, (cout,), jnp.float32, -bound, bound)

    ks = jax.random.split(key, 14)
    w0, b0 = kaiming(ks[0], in_planes, K), bias(ks[1], in_planes, K)
    w1, b1 = kaiming(ks[2], 3 * K, K), bias(ks[3], 3 * K, K)
    w2, b2 = kaiming(ks[4], 3 * K, K), bias(ks[5], 3 * K, K)
    w3, b3 = kaiming(ks[6], 3 * K, out_planes), bias(ks[7], 3 * K, out_planes)
    bns = []
    for i in range(3):
        mean = jax.random.normal(ks[8 + 2 * i], (K,), jnp.float32) * 0.1
        var = jax.random.uniform(ks[9 + 2 * i], (K,), jnp.float32, 0.5, 1.5)
        bns.append((jnp.ones((K,), jnp.float32), jnp.zeros((K,), jnp.float32),
                    mean, var))
    return {"convs": (w0, b0, w1, b1, w2, b2, w3, b3), "bns": bns}


def pack_params(raw, *, in_planes=2, out_planes=1, kernels=8, eps=1e-5):
    """Fold eval-mode BN + biases into the convs, split the 3K-wide weights into
    (x, row) parts, transpose for the channels-leading kernel layout, and pack
    everything into a single (K, 7K+4) f32 slab."""
    # TODO(synk): head packing assumes out_planes == 1 (zero-padded to K rows).
    assert out_planes == 1
    K = kernels
    w0, b0, w1, b1, w2, b2, w3, b3 = raw["convs"]
    bns = raw["bns"]

    def fold(w, b, p):
        g, be, m, v = p
        s = g / jnp.sqrt(v + eps)
        return w * s[None, :], b * s + (be - m * s)

    def split(w):             # (3K, Kout) -> part for x and part for the row max
        return w[:K], w[K:2 * K] + w[2 * K:]   # concat is (x, row, row) => Wb + Wc

    w0f, b0f = fold(w0, b0, bns[0])
    w1f, b1f = fold(w1, b1, bns[1])
    w2f, b2f = fold(w2, b2, bns[2])
    w1a, w1bc = split(w1f)
    w2a, w2bc = split(w2f)
    w3a, w3bc = split(w3)     # last layer has no BN

    c = _slab_layout(in_planes, K)
    slab = jnp.zeros((K, c["cols"]), jnp.float32)
    slab = slab.at[:, c["w0"]:c["w0"] + in_planes].set(w0f.T)
    slab = slab.at[:, c["w1a"]:c["w1a"] + K].set(w1a.T)
    slab = slab.at[:, c["w1bc"]:c["w1bc"] + K].set(w1bc.T)
    slab = slab.at[:, c["w2a"]:c["w2a"] + K].set(w2a.T)
    slab = slab.at[:, c["w2bc"]:c["w2bc"] + K].set(w2bc.T)
    slab = slab.at[:out_planes, c["w3a"]:c["w3a"] + K].set(w3a.T)
    slab = slab.at[:out_planes, c["w3bc"]:c["w3bc"] + K].set(w3bc.T)
    slab = slab.at[:, c["b"] + 0].set(b0f)
    slab = slab.at[:, c["b"] + 1].set(b1f)
    slab = slab.at[:, c["b"] + 2].set(b2f)
    slab = slab.at[:out_planes, c["b"] + 3].set(b3)
    return slab


def reference_forward(x_nchw, raw, *, temperature=1.0, eps=1e-5):
    """Pure-JAX mirror of GameModelPooling.forward (default config, eval mode)."""
    w0, b0, w1, b1, w2, b2, w3, b3 = raw["convs"]
    bns = raw["bns"]
    x = jnp.transpose(x_nchw, (0, 2, 3, 1)).astype(jnp.float32)   # NHWC

    def conv1x1(h, w, b):
        return jnp.einsum("bhwc,cd->bhwd", h, w) + b

    def bn(h, p):
        g, be, m, v = p
        return (h - m) * (g / jnp.sqrt(v + eps)) + be

    def pool_and_cat(h):
        row = jnp.broadcast_to(jnp.max(h, axis=2, keepdims=True), h.shape)
        return jnp.concatenate([h, row, row], axis=-1)   # x_col == x_row (module bug)

    h = x
    for i, (w, b) in enumerate(((w0, b0), (w1, b1), (w2, b2))):
        h = pool_and_cat(jax.nn.relu(bn(conv1x1(h, w, b), bns[i])))
    h = conv1x1(h, w3, b3)                               # Dropout(p=0) == identity
    m = jnp.transpose(jnp.max(h, axis=2), (0, 2, 1))     # (B, out_planes, H)
    return jax.nn.softmax(m / temperature, axis=-1)


if __name__ == "__main__":
    key = jax.random.PRNGKey(0)
    kx, kp = jax.random.split(key)

    B, Cin, H, W = 4, 2, 16, 16                 # in_planes=2
    x = jax.random.normal(kx, (B, Cin, H, W), jnp.float32)

    raw = init_params(kp, in_planes=Cin, out_planes=1, kernels=8)
    slab = pack_params(raw, in_planes=Cin, out_planes=1, kernels=8)

    out = game_model_pooling(x, slab, temperature=1.0)
    out = jax.block_until_ready(out)
    assert out.shape == (B, 1, H), out.shape

    # final softmax over H must sum to 1 per (batch, channel)
    sums = jnp.sum(out, axis=-1)
    assert bool(jnp.allclose(sums, 1.0, atol=2e-3)), float(jnp.max(jnp.abs(sums - 1.0)))

    # cross-check against a pure-JAX reference of the PyTorch forward pass
    ref = reference_forward(x, raw, temperature=1.0)
    assert bool(jnp.allclose(out, ref, atol=2e-3, rtol=2e-3)), \
        float(jnp.max(jnp.abs(out - ref)))

    print("KERNEL_OK")
</pallas_src>

<mosaic_0001>
module attributes {stable_mosaic.version = 11 : i64} {
  func.func @_game_pooling_kernel(%arg0: i32, %arg1: memref<2x2x256xf32, #tpu.memory_space<vmem>>, %arg2: memref<8x60xf32, #tpu.memory_space<vmem>>, %arg3: memref<1x2x16xf32, #tpu.memory_space<vmem>>) attributes {dimension_semantics = [#tpu.dimension_semantics<parallel>], iteration_bounds = array<i64: 2>, scalar_prefetch = 0 : i64, scratch_operands = 0 : i64, tpu.core_type = #tpu.core_type<tc>, window_params = [{transform_indices = @transform_0, window_bounds = array<i64: 2, 2, 256>}, {pipeline_mode = #tpu.pipeline_mode<synchronous>, transform_indices = @transform_1, window_bounds = array<i64: 8, 60>}, {transform_indices = @transform_2, window_bounds = array<i64: 1, 2, 16>}]} {
    %c0 = arith.constant 0 : index
    %c0_0 = arith.constant 0 : index
    %0 = vector.load %arg2[%c0, %c0_0] : memref<8x60xf32, #tpu.memory_space<vmem>>, vector<8x60xf32>
    %1 = vector.extract_strided_slice %0 {offsets = [0, 0], sizes = [8, 2], strides = [1, 1]} : vector<8x60xf32> to vector<8x2xf32>
    %2 = vector.extract_strided_slice %0 {offsets = [0, 8], sizes = [8, 8], strides = [1, 1]} : vector<8x60xf32> to vector<8x8xf32>
    %3 = vector.extract_strided_slice %0 {offsets = [0, 16], sizes = [8, 8], strides = [1, 1]} : vector<8x60xf32> to vector<8x8xf32>
    %4 = vector.extract_strided_slice %0 {offsets = [0, 24], sizes = [8, 8], strides = [1, 1]} : vector<8x60xf32> to vector<8x8xf32>
    %5 = vector.extract_strided_slice %0 {offsets = [0, 32], sizes = [8, 8], strides = [1, 1]} : vector<8x60xf32> to vector<8x8xf32>
    %6 = vector.extract_strided_slice %0 {offsets = [0, 40], sizes = [1, 8], strides = [1, 1]} : vector<8x60xf32> to vector<1x8xf32>
    %7 = vector.extract_strided_slice %0 {offsets = [0, 48], sizes = [1, 8], strides = [1, 1]} : vector<8x60xf32> to vector<1x8xf32>
    %8 = vector.extract_strided_slice %0 {offsets = [0, 56], sizes = [8, 1], strides = [1, 1]} : vector<8x60xf32> to vector<8x1xf32>
    %9 = vector.extract_strided_slice %0 {offsets = [0, 57], sizes = [8, 1], strides = [1, 1]} : vector<8x60xf32> to vector<8x1xf32>
    %10 = vector.extract_strided_slice %0 {offsets = [0, 58], sizes = [8, 1], strides = [1, 1]} : vector<8x60xf32> to vector<8x1xf32>
    %11 = vector.extract_strided_slice %0 {offsets = [0, 59], sizes = [1, 1], strides = [1, 1]} : vector<8x60xf32> to vector<1x1xf32>
    %c0_1 = arith.constant 0 : index
    %c0_2 = arith.constant 0 : index
    %c0_3 = arith.constant 0 : index
    %12 = vector.load %arg1[%c0_1, %c0_2, %c0_3] : memref<2x2x256xf32, #tpu.memory_space<vmem>>, vector<1x2x256xf32>
    %13 = vector.shape_cast %12 : vector<1x2x256xf32> to vector<2x256xf32>
    %c1 = arith.constant 1 : index
    %c0_4 = arith.constant 0 : index
    %c0_5 = arith.constant 0 : index
    %14 = vector.load %arg1[%c1, %c0_4, %c0_5] : memref<2x2x256xf32, #tpu.memory_space<vmem>>, vector<1x2x256xf32>
    %15 = vector.shape_cast %14 : vector<1x2x256xf32> to vector<2x256xf32>
    %16 = tpu.concatenate %13, %15 in 1 : vector<2x256xf32>, vector<2x256xf32> -> vector<2x512xf32>
    %cst = arith.constant dense<0.000000e+00> : vector<8x512xf32>
    %17 = tpu.matmul %1, %16, %cst {dimension_numbers = #tpu.dot_dimension_numbers<[1], [0], [0], [1], [0, 0, 1, 1], [], []>} : vector<8x2xf32>, vector<2x512xf32>, vector<8x512xf32> -> vector<8x512xf32>
    %18 = vector.broadcast %8 : vector<8x1xf32> to vector<8x512xf32>
    %19 = arith.addf %17, %18 : vector<8x512xf32>
    %cst_6 = arith.constant 0.000000e+00 : f32
    %20 = vector.broadcast %cst_6 : f32 to vector<8x512xf32>
    %21 = arith.maximumf %19, %20 : vector<8x512xf32>
    %22 = vector.shape_cast %21 : vector<8x512xf32> to vector<8x32x16xf32>
    %cst_7 = arith.constant dense<0xFF800000> : vector<8x32xf32>
    %23 = vector.multi_reduction <maximumf>, %22, %cst_7 [2] : vector<8x32x16xf32> to vector<8x32xf32>
    %cst_8 = arith.constant dense<0.000000e+00> : vector<8x512xf32>
    %24 = tpu.matmul %2, %21, %cst_8 {dimension_numbers = #tpu.dot_dimension_numbers<[1], [0], [0], [1], [0, 0, 1, 1], [], []>} : vector<8x8xf32>, vector<8x512xf32>, vector<8x512xf32> -> vector<8x512xf32>
    %25 = vector.broadcast %9 : vector<8x1xf32> to vector<8x512xf32>
    %26 = arith.addf %24, %25 : vector<8x512xf32>
    %cst_9 = arith.constant dense<0.000000e+00> : vector<8x32xf32>
    %27 = tpu.matmul %3, %23, %cst_9 {dimension_numbers = #tpu.dot_dimension_numbers<[1], [0], [0], [1], [0, 0, 1, 1], [], []>} : vector<8x8xf32>, vector<8x32xf32>, vector<8x32xf32> -> vector<8x32xf32>
    %28 = vector.shape_cast %26 : vector<8x512xf32> to vector<8x32x16xf32>
    %29 = vector.shape_cast %27 : vector<8x32xf32> to vector<8x32x1xf32>
    %30 = vector.broadcast %29 : vector<8x32x1xf32> to vector<8x32x16xf32>
    %31 = arith.addf %28, %30 : vector<8x32x16xf32>
    %32 = vector.shape_cast %31 : vector<8x32x16xf32> to vector<8x512xf32>
    %cst_10 = arith.constant 0.000000e+00 : f32
    %33 = vector.broadcast %cst_10 : f32 to vector<8x512xf32>
    %34 = arith.maximumf %32, %33 : vector<8x512xf32>
    %35 = vector.shape_cast %34 : vector<8x512xf32> to vector<8x32x16xf32>
    %cst_11 = arith.constant dense<0xFF800000> : vector<8x32xf32>
    %36 = vector.multi_reduction <maximumf>, %35, %cst_11 [2] : vector<8x32x16xf32> to vector<8x32xf32>
    %cst_12 = arith.constant dense<0.000000e+00> : vector<8x512xf32>
    %37 = tpu.matmul %4, %34, %cst_12 {dimension_numbers = #tpu.dot_dimension_numbers<[1], [0], [0], [1], [0, 0, 1, 1], [], []>} : vector<8x8xf32>, vector<8x512xf32>, vector<8x512xf32> -> vector<8x512xf32>
    %38 = vector.broadcast %10 : vector<8x1xf32> to vector<8x512xf32>
    %39 = arith.addf %37, %38 : vector<8x512xf32>
    %cst_13 = arith.constant dense<0.000000e+00> : vector<8x32xf32>
    %40 = tpu.matmul %5, %36, %cst_13 {dimension_numbers = #tpu.dot_dimension_numbers<[1], [0], [0], [1], [0, 0, 1, 1], [], []>} : vector<8x8xf32>, vector<8x32xf32>, vector<8x32xf32> -> vector<8x32xf32>
    %41 = vector.shape_cast %39 : vector<8x512xf32> to vector<8x32x16xf32>
    %42 = vector.shape_cast %40 : vector<8x32xf32> to vector<8x32x1xf32>
    %43 = vector.broadcast %42 : vector<8x32x1xf32> to vector<8x32x16xf32>
    %44 = arith.addf %41, %43 : vector<8x32x16xf32>
    %45 = vector.shape_cast %44 : vector<8x32x16xf32> to vector<8x512xf32>
    %cst_14 = arith.constant 0.000000e+00 : f32
    %46 = vector.broadcast %cst_14 : f32 to vector<8x512xf32>
    %47 = arith.maximumf %45, %46 : vector<8x512xf32>
    %48 = vector.shape_cast %47 : vector<8x512xf32> to vector<8x32x16xf32>
    %cst_15 = arith.constant dense<0xFF800000> : vector<8x32xf32>
    %49 = vector.multi_reduction <maximumf>, %48, %cst_15 [2] : vector<8x32x16xf32> to vector<8x32xf32>
    %cst_16 = arith.constant dense<0.000000e+00> : vector<1x512xf32>
    %50 = tpu.matmul %6, %47, %cst_16 {dimension_numbers = #tpu.dot_dimension_numbers<[1], [0], [0], [1], [0, 0, 1, 1], [], []>} : vector<1x8xf32>, vector<8x512xf32>, vector<1x512xf32> -> vector<1x512xf32>
    %51 = vector.broadcast %11 : vector<1x1xf32> to vector<1x512xf32>
    %52 = arith.addf %50, %51 : vector<1x512xf32>
    %cst_17 = arith.constant dense<0.000000e+00> : vector<1x32xf32>
    %53 = tpu.matmul %7, %49, %cst_17 {dimension_numbers = #tpu.dot_dimension_numbers<[1], [0], [0], [1], [0, 0, 1, 1], [], []>} : vector<1x8xf32>, vector<8x32xf32>, vector<1x32xf32> -> vector<1x32xf32>
    %54 = vector.shape_cast %52 : vector<1x512xf32> to vector<1x32x16xf32>
    %55 = vector.shape_cast %53 : vector<1x32xf32> to vector<1x32x1xf32>
    %56 = vector.broadcast %55 : vector<1x32x1xf32> to vector<1x32x16xf32>
    %57 = arith.addf %54, %56 : vector<1x32x16xf32>
    %58 = vector.shape_cast %57 : vector<1x32x16xf32> to vector<1x512xf32>
    %59 = vector.shape_cast %58 : vector<1x512xf32> to vector<2x16x16xf32>
    %cst_18 = arith.constant dense<0xFF800000> : vector<2x16xf32>
    %60 = vector.multi_reduction <maximumf>, %59, %cst_18 [2] : vector<2x16x16xf32> to vector<2x16xf32>
    %cst_19 = arith.constant 1.000000e+00 : f32
    %61 = vector.broadcast %cst_19 : f32 to vector<2x16xf32>
    %62 = arith.mulf %60, %61 : vector<2x16xf32>
    %cst_20 = arith.constant dense<0xFF800000> : vector<2xf32>
    %63 = vector.multi_reduction <maximumf>, %62, %cst_20 [1] : vector<2x16xf32> to vector<2xf32>
    %64 = vector.shape_cast %63 : vector<2xf32> to vector<2x1xf32>
    %65 = vector.broadcast %64 : vector<2x1xf32> to vector<2x16xf32>
    %66 = arith.subf %62, %65 : vector<2x16xf32>
    %67 = math.exp %66 : vector<2x16xf32>
    %cst_21 = arith.constant dense<0.000000e+00> : vector<2xf32>
    %68 = vector.multi_reduction <add>, %67, %cst_21 [1] : vector<2x16xf32> to vector<2xf32>
    %69 = vector.shape_cast %68 : vector<2xf32> to vector<2x1xf32>
    %70 = vector.broadcast %69 : vector<2x1xf32> to vector<2x16xf32>
    %71 = arith.divf %67, %70 : vector<2x16xf32>
    %c0_22 = arith.constant 0 : index
    %c0_23 = arith.constant 0 : index
    %c0_24 = arith.constant 0 : index
    %72 = vector.load %arg3[%c0_22, %c0_23, %c0_24] : memref<1x2x16xf32, #tpu.memory_space<vmem>>, vector<1x2x16xf32>
    %73 = vector.shape_cast %72 : vector<1x2x16xf32> to vector<2x16xf32>
    %74 = vector.shape_cast %71 : vector<2x16xf32> to vector<1x2x16xf32>
    tpu.vector_store %arg3[%c0_22, %c0_23, %c0_24], %74 {strides = array<i32>} : memref<1x2x16xf32, #tpu.memory_space<vmem>>, vector<1x2x16xf32>,
    return
  }
  func.func @transform_0(%arg0: i32) -> (i32, i32, i32) {
    %c0_i32 = arith.constant 0 : i32
    %c0_i32_0 = arith.constant 0 : i32
    %c0_i32_1 = arith.constant 0 : i32
    return %arg0, %c0_i32, %c0_i32_0 : i32, i32, i32
  }
  func.func @transform_1(%arg0: i32) -> (i32, i32) {
    %c0_i32 = arith.constant 0 : i32
    %c0_i32_0 = arith.constant 0 : i32
    %c0_i32_1 = arith.constant 0 : i32
    return %c0_i32, %c0_i32_0 : i32, i32
  }
  func.func @transform_2(%arg0: i32) -> (i32, i32, i32) {
    %c0_i32 = arith.constant 0 : i32
    %c0_i32_0 = arith.constant 0 : i32
    %c0_i32_1 = arith.constant 0 : i32
    return %arg0, %c0_i32, %c0_i32_0 : i32, i32, i32
  }
}

</mosaic_0001>

<llo_original>
// kernel: tpu_custom_call.1
$region0: #{tpu_custom_call.1}
  #allocation0 [shape = 'u32[]', space=smem, size = 0x4, offset = 0x4, fixed_abs, tag = 'smem constant byte address 0x4 - core index']
  #allocation1 [shape = 'u32[144,128]{1,0:T(1,128)}', space=vmem, size = 0x12000, scoped, tag = 'internal scratch']
  %s0 = inlined_call_operand.hbm [shape: f32[4,2,256], index: 0, kind: input, shape index: {}]
  %s1 = inlined_call_operand.hbm [shape: f32[8,60], index: 1, kind: input, shape index: {}]
  %s2 = inlined_call_operand.hbm [shape: f32[2,2,16], index: 2, kind: output, shape index: {}]
  %s3 = sld [smem:[#allocation0]]
  $region49: #{tpu_custom_call.1} parent=0
    _
  %s5 = ssub.s32 1, %s3
  %s6 = scalar_select 0, %s5, %s3
  $region1: #{tpu_custom_call.1} parent=0
    #allocation2 [shape = 'u8[8192]{0}', space=vmem, size = 0x2000, scoped, tag = 'input window, operand 0']
    #allocation3 [shape = 's32[2]{0}', space=sflag, size = 0x8, scoped, tag = 'scoped memory for tpu_custom_call.1']
    #allocation4 [shape = 's32[2]{0}', space=sflag, size = 0x8, scoped, tag = 'scoped memory for tpu_custom_call.1']
    #allocation5 [shape = 'u8[4096]{0}', space=vmem, size = 0x1000, scoped, tag = 'input window, operand 1, single buffered']
    #allocation6 [shape = 's32[1]{0}', space=sflag, size = 0x4, scoped, tag = 'scoped memory for tpu_custom_call.1']
    #allocation7 [shape = 'u8[2048]{0}', space=vmem, size = 0x800, scoped, tag = 'output window, operand 0']
    %7 = vsyncpa [#allocation3], 0
    %s8 = scalar_lea.sflag [#allocation3], 1
    %9 = vsyncpa %s8, 0
    %10 = vsyncpa [#allocation6], 0
    %11 = vsyncpa [#allocation4], 0
    %s12 = scalar_lea.sflag [#allocation4], 1
    %13 = vsyncpa %s12, 0
    loop: start=0, step=1, limit=4
    $region2: #{tpu_custom_call.1} parent=1 // loop_pre_header
      _
    $region3: #{tpu_custom_call.1} parent=1 // loop_header
      %s15 = sphi 0, %s19
      %p16 = scmp.ge.s32.totalorder %s15, 4
      %s25 = sphi 0, %s27
      %s28 = sphi 0, %s25
      %s29 = sphi 0, %s28
      %s45 = sphi 0, %s29
      %s49 = sphi 0, %s49
      %s51 = sphi 0, %s49
      %s52 = sphi 0, %s51
      %s66 = sphi 0, %s52
      %s72 = sphi 0, %s74
      %s75 = sphi 0, %s72
      %s76 = sphi 0, %s75
      %s92 = sphi 0, %s76
    $region4: #{tpu_custom_call.1} parent=1 // loop_header_branch
      %18 = sbr.rel (%p16) target = $region8
    $region5: #{tpu_custom_call.1} parent=1 // loop_body
      %s20 = ssub.s32 %s15, 1
      %s21 = ssub.s32 %s15, 2
      %s22 = sadd.s32 %s15, 1
      %s23 = ssub.s32 %s15, %s22
      %p24 = scmp.eq.s32.totalorder %s23, 0
      %s26 = sadd.s32 %s25, 1
      %s27 = scalar_select %p24, %s25, %s26
      %p30 = pneg %p24
      %p31 = scmp.eq.s32.totalorder %s15, 1
      %p32 = por %p30, %p31
      %p33 = scmp.ne.s32.totalorder %s25, %s28
      %p34 = scmp.eq.s32.totalorder %s15, 0
      %p35 = por %p33, %p34
      %p36 = scmp.ne.s32.totalorder %s25, %s28
      %p37 = scmp.eq.s32.totalorder %s20, 1
      %p38 = por %p36, %p37
      %p39 = scmp.ne.s32.totalorder %s28, %s29
      %p40 = scmp.eq.s32.totalorder %s20, 0
      %p41 = por %p39, %p40
      %p42 = scmp.ne.s32.totalorder %s28, %s29
      %p43 = scmp.eq.s32.totalorder %s21, 1
      %p44 = por %p42, %p43
      %p46 = scmp.ne.s32.totalorder %s29, %s45
      %p47 = scmp.eq.s32.totalorder %s21, 0
      %p48 = por %p46, %p47
      %s50 = sadd.s32 %s49, 1
      %p53 = scmp.eq.s32.totalorder %s15, 1
      %p54 = scmp.ne.s32.totalorder %s49, %s51
      %p55 = scmp.eq.s32.totalorder %s15, 0
      %p56 = por %p54, %p55
      %p57 = scmp.ne.s32.totalorder %s49, %s51
      %p58 = scmp.eq.s32.totalorder %s20, 1
      %p59 = por %p57, %p58
      %p60 = scmp.ne.s32.totalorder %s51, %s52
      %p61 = scmp.eq.s32.totalorder %s20, 0
      %p62 = por %p60, %p61
      %p63 = scmp.ne.s32.totalorder %s51, %s52
      %p64 = scmp.eq.s32.totalorder %s21, 1
      %p65 = por %p63, %p64
      %p67 = scmp.ne.s32.totalorder %s52, %s66
      %p68 = scmp.eq.s32.totalorder %s21, 0
      %p69 = por %p67, %p68
      %s70 = ssub.s32 %s15, %s22
      %p71 = scmp.eq.s32.totalorder %s70, 0
      %s73 = sadd.s32 %s72, 1
      %s74 = scalar_select %p71, %s72, %s73
      %p77 = pneg %p71
      %p78 = scmp.eq.s32.totalorder %s15, 1
      %p79 = por %p77, %p78
      %p80 = scmp.ne.s32.totalorder %s72, %s75
      %p81 = scmp.eq.s32.totalorder %s15, 0
      %p82 = por %p80, %p81
      %p83 = scmp.ne.s32.totalorder %s72, %s75
      %p84 = scmp.eq.s32.totalorder %s20, 1
      %p85 = por %p83, %p84
      %p86 = scmp.ne.s32.totalorder %s75, %s76
      %p87 = scmp.eq.s32.totalorder %s20, 0
      %p88 = por %p86, %p87
      %p89 = scmp.ne.s32.totalorder %s75, %s76
      %p90 = scmp.eq.s32.totalorder %s21, 1
      %p91 = por %p89, %p90
      %p93 = scmp.ne.s32.totalorder %s76, %s92
      %p94 = scmp.eq.s32.totalorder %s21, 0
      %p95 = por %p93, %p94
      %p96 = scmp.le.s32.totalorder 1, %s15
      %p97 = scmp.lt.s32.totalorder %s15, 3
      %p98 = pnand %p96, %p97
      %p99 = pneg %p98
      // Predicated region
      $region9: #{tpu_custom_call.1} parent=5 // pred_check
        _
      $region10: #{tpu_custom_call.1} parent=5 // pred_check_branch
        %101 = sbr.rel (%p98) target = $region12
      $region11: #{tpu_custom_call.1} parent=5 // pred_region
        %s102 = ssub.s32 %s15, 1
        // Predicated region
        $region13: #{tpu_custom_call.1} parent=11 // pred_check
          %p103 = pneg %p62
        $region14: #{tpu_custom_call.1} parent=11 // pred_check_branch
          %105 = sbr.rel (%p103) target = $region16
        $region15: #{tpu_custom_call.1} parent=11 // pred_region
          %s107 = ssub.s32 128, 128
          %108 = vsyncadd [#allocation6], %s107
          %s110 = sshll.u32 [#allocation5], 4
          %s111 = int_to_ptr.vmem [resolvable:$true] %s110
          %113 = dma.hbm_to_vmem [thread:$0]  %s1, 128, %s111, [#allocation6]
        $region16: #{tpu_custom_call.1} parent=11 // pred_fallthru
          _
      $region12: #{tpu_custom_call.1} parent=5 // pred_fallthru
        _
      %p114 = scmp.lt.s32.totalorder %s15, 2
      // Predicated region
      $region17: #{tpu_custom_call.1} parent=5 // pred_check
        %p115 = pneg %p114
      $region18: #{tpu_custom_call.1} parent=5 // pred_check_branch
        %117 = sbr.rel (%p115) target = $region20
      $region19: #{tpu_custom_call.1} parent=5 // pred_region
        // Predicated region
        $region21: #{tpu_custom_call.1} parent=19 // pred_check
          %p118 = pneg %p35
        $region22: #{tpu_custom_call.1} parent=19 // pred_check_branch
          %120 = sbr.rel (%p118) target = $region24
        $region23: #{tpu_custom_call.1} parent=19 // pred_region
          %s121 = sand.u32 %s25, 1
          %s122 = scalar_lea.sflag [#allocation3], %s121
          %s123 = sand.u32 %s25, 1
          %s124 = smul.addr %s123, 8
          %s125 = scalar_lea.vmem [#allocation2], %s124
          %s126 = smul.u32 2, %s15
          %s128 = ssub.s32 128, 128
          %129 = vsyncadd %s122, %s128
          %s130 = smul.addr %s126, 2
          %s131 = smul.addr %s130, 32
          %s132 = scalar_lea.hbm %s0, %s131
          %s133 = sshll.u32 %s125, 4
          %s134 = int_to_ptr.vmem [resolvable:$true] %s133
          %139 = dma.hbm_to_vmem [thread:$0]  %s132, 128, %s134, %s122, 64, 64, 4
        $region24: #{tpu_custom_call.1} parent=19 // pred_fallthru
          _
      $region20: #{tpu_custom_call.1} parent=5 // pred_fallthru
        _
      %p140 = scmp.le.s32.totalorder 1, %s15
      %p141 = scmp.lt.s32.totalorder %s15, 3
      %p142 = pnand %p140, %p141
      %p143 = pneg %p142
      // Predicated region
      $region25: #{tpu_custom_call.1} parent=5 // pred_check
        _
      $region26: #{tpu_custom_call.1} parent=5 // pred_check_branch
        %145 = sbr.rel (%p142) target = $region28
      $region27: #{tpu_custom_call.1} parent=5 // pred_region
        %s146 = ssub.s32 %s15, 1
        %s147 = sand.u32 %s28, 1
        %s148 = scalar_lea.sflag [#allocation3], %s147
        %s149 = sand.u32 %s28, 1
        %s150 = smul.addr %s149, 8
        %s151 = scalar_lea.vmem [#allocation2], %s150
        // Predicated region
        $region29: #{tpu_custom_call.1} parent=27 // pred_check
          %p152 = pneg %p41
        $region30: #{tpu_custom_call.1} parent=27 // pred_check_branch
          %154 = sbr.rel (%p152) target = $region32
        $region31: #{tpu_custom_call.1} parent=27 // pred_region
          %155 = dma.done %s148, 128
        $region32: #{tpu_custom_call.1} parent=27 // pred_fallthru
          _
        // Predicated region
        $region33: #{tpu_custom_call.1} parent=27 // pred_check
          %p156 = pneg %p62
        $region34: #{tpu_custom_call.1} parent=27 // pred_check_branch
          %158 = sbr.rel (%p156) target = $region36
        $region35: #{tpu_custom_call.1} parent=27 // pred_region
          %159 = dma.done [#allocation6], 128
        $region36: #{tpu_custom_call.1} parent=27 // pred_fallthru
          _
        %s160 = sand.u32 %s28, 1
        %s161 = scalar_lea.sflag [#allocation3], %s160
        %s162 = sand.u32 %s28, 1
        %s163 = smul.addr %s162, 8
        %s164 = scalar_lea.vmem [#allocation2], %s163
        %p165 = pneg %p41
        %p166 = pneg %p38
        %p167 = pneg %p62
        %p168 = pneg %p59
        %p169 = pneg %p88
        %p170 = pneg %p85
        %s171 = sand.u32 %s75, 1
        %s172 = scalar_lea.sflag [#allocation4], %s171
        %s173 = sand.u32 %s75, 1
        %s174 = smul.addr %s173, 2
        %s175 = scalar_lea.vmem [#allocation7], %s174
        %s176 = smul.u32 2, %s20
        %v177 = vld [vmem:[#allocation5] sm:$0xff]
        %v178 = vld [vmem:[%s151] sm:$0xf]
        %s179 = scalar_lea.vmem %s151, 4 [#allocation2]
        %v180 = vld [vmem:[%s179] sm:$0xf]
        %v183 = vunpack.c.l.s4 1983009808
        %v184 = vunpack.c.0.s8 %v183
        %v185 = vlaneseq
        %v186 = vshrl.u32 %v185, 7
        %v187 = vsub.s32 %v184, %v186
        %v188 = vrot.slane %v178, %v187
        %v189 = vcombine.high %v188, %v188
        %v192 = vunpack.c.l.s4 1983009808
        %v193 = vunpack.c.0.s8 %v192
        %v194 = vlaneseq
        %v195 = vshrl.u32 %v194, 7
        %v196 = vsub.s32 %v193, %v195
        %v197 = vrot.slane %v180, %v196
        %v198 = vcombine.high %v197, %v197
        %200 = vset.pattern.permute.xlu0 56
        %201 = vperm.xlu0 %200, %v177
        %v202 = vpop.permute.xlu0 %201
        %vm204 = vcmask 15360
        %v205 = vsel %vm204, %v177, 0
        %vm207 = vcmask 1041408
        %v208 = vsel %vm207, %v188, 0
        %v210 = vsel %vm207, %v189, 0
        %v212 = vsel %vm207, %v197, 0
        %v214 = vsel %vm207, %v198, 0
        %216 = vmatprep.subr.mxu0 %v210
        %217 = vmatpush1.msra.mxu0 %v208
        %218 = vmatprep.subr.mxu0 0.0
        %219 = vmatpush1.msra.mxu0 0.0
        %220 = vmatprep.subr.mxu0 0.0
        %221 = vmatpush1.msra.mxu0 0.0
        %222 = vmatprep.subr.mxu0 0.0
        %223 = vmatpush1.msra.mxu0 0.0
        %224 = vmatprep.subr.mxu0 0.0
        %225 = vmatpush1.msra.mxu0 0.0
        %226 = vmatprep.subr.mxu0 0.0
        %227 = vmatpush1.msra.mxu0 0.0
        %228 = vmatprep.subr.mxu0 0.0
        %229 = vmatpush1.msra.mxu0 0.0
        %230 = vmatprep.subr.mxu0 0.0
        %231 = vmatpush1.msra.mxu0 0.0
        %232 = vmatprep.subr.mxu0 0.0
        %233 = vmatpush1.msra.mxu0 0.0
        %234 = vmatprep.subr.mxu0 0.0
        %235 = vmatpush1.msra.mxu0 0.0
        %236 = vmatprep.subr.mxu0 0.0
        %237 = vmatpush1.msra.mxu0 0.0
        %238 = vmatprep.subr.mxu0 0.0
        %239 = vmatpush1.msra.mxu0 0.0
        %240 = vmatprep.subr.mxu0 0.0
        %241 = vmatpush1.msra.mxu0 0.0
        %242 = vmatprep.subr.mxu0 0.0
        %243 = vmatpush1.msra.mxu0 0.0
        %244 = vmatprep.subr.mxu0 0.0
        %245 = vmatpush1.msra.mxu0 0.0
        %246 = vmatprep.subr.mxu0 0.0
        %247 = vmatpush1.msra.mxu0 0.0
        %248 = vmatprep.subr.mxu0 0.0
        %249 = vmatpush1.msra.mxu0 0.0
        %250 = vmatprep.subr.mxu0 0.0
        %251 = vmatpush1.msra.mxu0 0.0
        %252 = vmatprep.subr.mxu0 0.0
        %253 = vmatpush1.msra.mxu0 0.0
        %254 = vmatprep.subr.mxu0 0.0
        %255 = vmatpush1.msra.mxu0 0.0
        %256 = vmatprep.subr.mxu0 0.0
        %257 = vmatpush1.msra.mxu0 0.0
        %258 = vmatprep.subr.mxu0 0.0
        %259 = vmatpush1.msra.mxu0 0.0
        %260 = vmatprep.subr.mxu0 0.0
        %261 = vmatpush1.msra.mxu0 0.0
        %262 = vmatprep.subr.mxu0 0.0
        %263 = vmatpush1.msra.mxu0 0.0
        %264 = vmatprep.subr.mxu0 0.0
        %265 = vmatpush1.msra.mxu0 0.0
        %266 = vmatprep.subr.mxu0 0.0
        %267 = vmatpush1.msra.mxu0 0.0
        %268 = vmatprep.subr.mxu0 0.0
        %269 = vmatpush1.msra.mxu0 0.0
        %270 = vmatprep.subr.mxu0 0.0
        %271 = vmatpush1.msra.mxu0 0.0
        %272 = vmatprep.subr.mxu0 0.0
        %273 = vmatpush1.msra.mxu0 0.0
        %274 = vmatprep.subr.mxu0 0.0
        %275 = vmatpush1.msra.mxu0 0.0
        %276 = vmatprep.subr.mxu0 0.0
        %277 = vmatpush1.msra.mxu0 0.0
        %278 = vmatprep.subr.mxu0 0.0
        %279 = vmatpush1.msra.mxu0 0.0
        %280 = vmatprep.mubr.f32.mxu0 0.0
        %281 = vmatmul.mubr.f32.gmra.mrb[0].mxu0 %v205
        %v282 = vpop.f32.mrb[0].mxu0
        %v283 = vadd.f32 %v202, %v282
        %v284 = vpop.f32.mrb[0].mxu0
        %v285 = vadd.f32 %v202, %v284
        %286 = vdwg.mxu0
        %287 = vmatprep.subr.mxu0 %v214
        %288 = vmatpush1.msra.mxu0 %v212
        %289 = vmatprep.subr.mxu0 0.0
        %290 = vmatpush1.msra.mxu0 0.0
        %291 = vmatprep.subr.mxu0 0.0
        %292 = vmatpush1.msra.mxu0 0.0
        %293 = vmatprep.subr.mxu0 0.0
        %294 = vmatpush1.msra.mxu0 0.0
        %295 = vmatprep.subr.mxu0 0.0
        %296 = vmatpush1.msra.mxu0 0.0
        %297 = vmatprep.subr.mxu0 0.0
        %298 = vmatpush1.msra.mxu0 0.0
        %299 = vmatprep.subr.mxu0 0.0
        %300 = vmatpush1.msra.mxu0 0.0
        %301 = vmatprep.subr.mxu0 0.0
        %302 = vmatpush1.msra.mxu0 0.0
        %303 = vmatprep.subr.mxu0 0.0
        %304 = vmatpush1.msra.mxu0 0.0
        %305 = vmatprep.subr.mxu0 0.0
        %306 = vmatpush1.msra.mxu0 0.0
        %307 = vmatprep.subr.mxu0 0.0
        %308 = vmatpush1.msra.mxu0 0.0
        %309 = vmatprep.subr.mxu0 0.0
        %310 = vmatpush1.msra.mxu0 0.0
        %311 = vmatprep.subr.mxu0 0.0
        %312 = vmatpush1.msra.mxu0 0.0
        %313 = vmatprep.subr.mxu0 0.0
        %314 = vmatpush1.msra.mxu0 0.0
        %315 = vmatprep.subr.mxu0 0.0
        %316 = vmatpush1.msra.mxu0 0.0
        %317 = vmatprep.subr.mxu0 0.0
        %318 = vmatpush1.msra.mxu0 0.0
        %319 = vmatprep.subr.mxu0 0.0
        %320 = vmatpush1.msra.mxu0 0.0
        %321 = vmatprep.subr.mxu0 0.0
        %322 = vmatpush1.msra.mxu0 0.0
        %323 = vmatprep.subr.mxu0 0.0
        %324 = vmatpush1.msra.mxu0 0.0
        %325 = vmatprep.subr.mxu0 0.0
        %326 = vmatpush1.msra.mxu0 0.0
        %327 = vmatprep.subr.mxu0 0.0
        %328 = vmatpush1.msra.mxu0 0.0
        %329 = vmatprep.subr.mxu0 0.0
        %330 = vmatpush1.msra.mxu0 0.0
        %331 = vmatprep.subr.mxu0 0.0
        %332 = vmatpush1.msra.mxu0 0.0
        %333 = vmatprep.subr.mxu0 0.0
        %334 = vmatpush1.msra.mxu0 0.0
        %335 = vmatprep.subr.mxu0 0.0
        %336 = vmatpush1.msra.mxu0 0.0
        %337 = vmatprep.subr.mxu0 0.0
        %338 = vmatpush1.msra.mxu0 0.0
        %339 = vmatprep.subr.mxu0 0.0
        %340 = vmatpush1.msra.mxu0 0.0
        %341 = vmatprep.subr.mxu0 0.0
        %342 = vmatpush1.msra.mxu0 0.0
        %343 = vmatprep.subr.mxu0 0.0
        %344 = vmatpush1.msra.mxu0 0.0
        %345 = vmatprep.subr.mxu0 0.0
        %346 = vmatpush1.msra.mxu0 0.0
        %347 = vmatprep.subr.mxu0 0.0
        %348 = vmatpush1.msra.mxu0 0.0
        %349 = vmatprep.subr.mxu0 0.0
        %350 = vmatpush1.msra.mxu0 0.0
        %351 = vmatprep.mubr.f32.mxu0 0.0
        %352 = vmatmul.mubr.f32.gmra.mrb[0].mxu0 %v205
        %v353 = vpop.f32.mrb[0].mxu0
        %v354 = vadd.f32 %v202, %v353
        %v355 = vpop.f32.mrb[0].mxu0
        %v356 = vadd.f32 %v202, %v355
        %357 = vdwg.mxu0
        %v358 = vmax.f32 %v283, 0.0
        %v359 = vmax.f32 %v285, 0.0
        %v360 = vmax.f32 %v354, 0.0
        %v361 = vmax.f32 %v356, 0.0
        %363 = vrot.lane.b32.xlu0 %v358, 112
        %v364 = vpop.permute.xlu0 %363
        %366 = vrot.lane.b32.xlu0 %v358, 96
        %v367 = vpop.permute.xlu0 %366
        %369 = vrot.lane.b32.xlu0 %v358, 80
        %v370 = vpop.permute.xlu0 %369
        %372 = vrot.lane.b32.xlu0 %v358, 64
        %v373 = vpop.permute.xlu0 %372
        %375 = vrot.lane.b32.xlu0 %v358, 48
        %v376 = vpop.permute.xlu0 %375
        %378 = vrot.lane.b32.xlu0 %v358, 32
        %v379 = vpop.permute.xlu0 %378
        %381 = vrot.lane.b32.xlu0 %v358, 16
        %v382 = vpop.permute.xlu0 %381
        %385 = vrot.lane.b32.xlu0 %v359, 112
        %v386 = vpop.permute.xlu0 %385
        %388 = vrot.lane.b32.xlu0 %v359, 96
        %v389 = vpop.permute.xlu0 %388
        %391 = vrot.lane.b32.xlu0 %v359, 80
        %v392 = vpop.permute.xlu0 %391
        %394 = vrot.lane.b32.xlu0 %v359, 64
        %v395 = vpop.permute.xlu0 %394
        %397 = vrot.lane.b32.xlu0 %v359, 48
        %v398 = vpop.permute.xlu0 %397
        %400 = vrot.lane.b32.xlu0 %v359, 32
        %v401 = vpop.permute.xlu0 %400
        %403 = vrot.lane.b32.xlu0 %v359, 16
        %v404 = vpop.permute.xlu0 %403
        %407 = vrot.lane.b32.xlu0 %v360, 112
        %v408 = vpop.permute.xlu0 %407
        %410 = vrot.lane.b32.xlu0 %v360, 96
        %v411 = vpop.permute.xlu0 %410
        %413 = vrot.lane.b32.xlu0 %v360, 80
        %v414 = vpop.permute.xlu0 %413
        %416 = vrot.lane.b32.xlu0 %v360, 64
        %v417 = vpop.permute.xlu0 %416
        %419 = vrot.lane.b32.xlu0 %v360, 48
        %v420 = vpop.permute.xlu0 %419
        %422 = vrot.lane.b32.xlu0 %v360, 32
        %v423 = vpop.permute.xlu0 %422
        %425 = vrot.lane.b32.xlu0 %v360, 16
        %v426 = vpop.permute.xlu0 %425
        %429 = vrot.lane.b32.xlu0 %v361, 112
        %v430 = vpop.permute.xlu0 %429
        %432 = vrot.lane.b32.xlu0 %v361, 96
        %v433 = vpop.permute.xlu0 %432
        %435 = vrot.lane.b32.xlu0 %v361, 80
        %v436 = vpop.permute.xlu0 %435
        %438 = vrot.lane.b32.xlu0 %v361, 64
        %v439 = vpop.permute.xlu0 %438
        %441 = vrot.lane.b32.xlu0 %v361, 48
        %v442 = vpop.permute.xlu0 %441
        %444 = vrot.lane.b32.xlu0 %v361, 32
        %v445 = vpop.permute.xlu0 %444
        %447 = vrot.lane.b32.xlu0 %v361, 16
        %v448 = vpop.permute.xlu0 %447
        %v450 = vcombine.low %v358, %v367
        %v451 = vcombine.high %v358, %v367
        %v453 = vunpack.c.l.s4 1983009808
        %v454 = vunpack.c.0.s8 %v453
        %v455 = vlaneseq
        %v456 = vshrl.u32 %v455, 7
        %v457 = vsub.s32 %v454, %v456
        %v458 = vrot.slane %v450, %v457
        %v460 = vunpack.c.l.s4 1983009808
        %v461 = vunpack.c.0.s8 %v460
        %v462 = vlaneseq
        %v463 = vshrl.u32 %v462, 7
        %v464 = vsub.s32 %v461, %v463
        %v465 = vrot.slane %v451, %v464
        %v466 = vcombine.low %v364, %v370
        %v467 = vcombine.high %v364, %v370
        %v469 = vunpack.c.l.s4 1983009808
        %v470 = vunpack.c.0.s8 %v469
        %v471 = vlaneseq
        %v472 = vshrl.u32 %v471, 7
        %v473 = vsub.s32 %v470, %v472
        %v474 = vrot.slane %v466, %v473
        %v476 = vunpack.c.l.s4 1983009808
        %v477 = vunpack.c.0.s8 %v476
        %v478 = vlaneseq
        %v479 = vshrl.u32 %v478, 7
        %v480 = vsub.s32 %v477, %v479
        %v481 = vrot.slane %v467, %v480
        %v482 = vcombine.low %v373, %v379
        %v483 = vcombine.high %v373, %v379
        %v485 = vunpack.c.l.s4 1983009808
        %v486 = vunpack.c.0.s8 %v485
        %v487 = vlaneseq
        %v488 = vshrl.u32 %v487, 7
        %v489 = vsub.s32 %v486, %v488
        %v490 = vrot.slane %v482, %v489
        %v492 = vunpack.c.l.s4 1983009808
        %v493 = vunpack.c.0.s8 %v492
        %v494 = vlaneseq
        %v495 = vshrl.u32 %v494, 7
        %v496 = vsub.s32 %v493, %v495
        %v497 = vrot.slane %v483, %v496
        %v498 = vcombine.low %v376, %v382
        %v499 = vcombine.high %v376, %v382
        %v501 = vunpack.c.l.s4 1983009808
        %v502 = vunpack.c.0.s8 %v501
        %v503 = vlaneseq
        %v504 = vshrl.u32 %v503, 7
        %v505 = vsub.s32 %v502, %v504
        %v506 = vrot.slane %v498, %v505
        %v508 = vunpack.c.l.s4 1983009808
        %v509 = vunpack.c.0.s8 %v508
        %v510 = vlaneseq
        %v511 = vshrl.u32 %v510, 7
        %v512 = vsub.s32 %v509, %v511
        %v513 = vrot.slane %v499, %v512
        %v514 = vcombine.low %v458, %v474
        %v515 = vcombine.high %v458, %v474
        %v517 = vunpack.c.l.s4 1934713408
        %v518 = vunpack.c.0.s8 %v517
        %v519 = vlaneseq
        %v520 = vshrl.u32 %v519, 7
        %v521 = vsub.s32 %v518, %v520
        %v522 = vrot.slane %v514, %v521
        %v524 = vunpack.c.l.s4 1934713408
        %v525 = vunpack.c.0.s8 %v524
        %v526 = vlaneseq
        %v527 = vshrl.u32 %v526, 7
        %v528 = vsub.s32 %v525, %v527
        %v529 = vrot.slane %v515, %v528
        %v530 = vcombine.low %v465, %v481
        %v531 = vcombine.high %v465, %v481
        %v533 = vunpack.c.l.s4 1934713408
        %v534 = vunpack.c.0.s8 %v533
        %v535 = vlaneseq
        %v536 = vshrl.u32 %v535, 7
        %v537 = vsub.s32 %v534, %v536
        %v538 = vrot.slane %v530, %v537
        %v540 = vunpack.c.l.s4 1934713408
        %v541 = vunpack.c.0.s8 %v540
        %v542 = vlaneseq
        %v543 = vshrl.u32 %v542, 7
        %v544 = vsub.s32 %v541, %v543
        %v545 = vrot.slane %v531, %v544
        %v546 = vcombine.low %v490, %v506
        %v547 = vcombine.high %v490, %v506
        %v549 = vunpack.c.l.s4 1934713408
        %v550 = vunpack.c.0.s8 %v549
        %v551 = vlaneseq
        %v552 = vshrl.u32 %v551, 7
        %v553 = vsub.s32 %v550, %v552
        %v554 = vrot.slane %v546, %v553
        %v556 = vunpack.c.l.s4 1934713408
        %v557 = vunpack.c.0.s8 %v556
        %v558 = vlaneseq
        %v559 = vshrl.u32 %v558, 7
        %v560 = vsub.s32 %v557, %v559
        %v561 = vrot.slane %v547, %v560
        %v562 = vcombine.low %v497, %v513
        %v563 = vcombine.high %v497, %v513
        %v565 = vunpack.c.l.s4 1934713408
        %v566 = vunpack.c.0.s8 %v565
        %v567 = vlaneseq
        %v568 = vshrl.u32 %v567, 7
        %v569 = vsub.s32 %v566, %v568
        %v570 = vrot.slane %v562, %v569
        %v572 = vunpack.c.l.s4 1934713408
        %v573 = vunpack.c.0.s8 %v572
        %v574 = vlaneseq
        %v575 = vshrl.u32 %v574, 7
        %v576 = vsub.s32 %v573, %v575
        %v577 = vrot.slane %v563, %v576
        %v578 = vcombine.low %v522, %v554
        %v579 = vcombine.high %v522, %v554
        %v580 = vcombine.low %v529, %v561
        %v581 = vcombine.high %v529, %v561
        %v582 = vcombine.low %v538, %v570
        %v583 = vcombine.high %v538, %v570
        %v584 = vcombine.low %v545, %v577
        %v585 = vcombine.high %v545, %v577
        %v586 = vcombine.low %v359, %v389
        %v587 = vcombine.high %v359, %v389
        %v589 = vunpack.c.l.s4 1983009808
        %v590 = vunpack.c.0.s8 %v589
        %v591 = vlaneseq
        %v592 = vshrl.u32 %v591, 7
        %v593 = vsub.s32 %v590, %v592
        %v594 = vrot.slane %v586, %v593
        %v596 = vunpack.c.l.s4 1983009808
        %v597 = vunpack.c.0.s8 %v596
        %v598 = vlaneseq
        %v599 = vshrl.u32 %v598, 7
        %v600 = vsub.s32 %v597, %v599
        %v601 = vrot.slane %v587, %v600
        %v602 = vcombine.low %v386, %v392
        %v603 = vcombine.high %v386, %v392
        %v605 = vunpack.c.l.s4 1983009808
        %v606 = vunpack.c.0.s8 %v605
        %v607 = vlaneseq
        %v608 = vshrl.u32 %v607, 7
        %v609 = vsub.s32 %v606, %v608
        %v610 = vrot.slane %v602, %v609
        %v612 = vunpack.c.l.s4 1983009808
        %v613 = vunpack.c.0.s8 %v612
        %v614 = vlaneseq
        %v615 = vshrl.u32 %v614, 7
        %v616 = vsub.s32 %v613, %v615
        %v617 = vrot.slane %v603, %v616
        %v618 = vcombine.low %v395, %v401
        %v619 = vcombine.high %v395, %v401
        %v621 = vunpack.c.l.s4 1983009808
        %v622 = vunpack.c.0.s8 %v621
        %v623 = vlaneseq
        %v624 = vshrl.u32 %v623, 7
        %v625 = vsub.s32 %v622, %v624
        %v626 = vrot.slane %v618, %v625
        %v628 = vunpack.c.l.s4 1983009808
        %v629 = vunpack.c.0.s8 %v628
        %v630 = vlaneseq
        %v631 = vshrl.u32 %v630, 7
        %v632 = vsub.s32 %v629, %v631
        %v633 = vrot.slane %v619, %v632
        %v634 = vcombine.low %v398, %v404
        %v635 = vcombine.high %v398, %v404
        %v637 = vunpack.c.l.s4 1983009808
        %v638 = vunpack.c.0.s8 %v637
        %v639 = vlaneseq
        %v640 = vshrl.u32 %v639, 7
        %v641 = vsub.s32 %v638, %v640
        %v642 = vrot.slane %v634, %v641
        %v644 = vunpack.c.l.s4 1983009808
        %v645 = vunpack.c.0.s8 %v644
        %v646 = vlaneseq
        %v647 = vshrl.u32 %v646, 7
        %v648 = vsub.s32 %v645, %v647
        %v649 = vrot.slane %v635, %v648
        %v650 = vcombine.low %v594, %v610
        %v651 = vcombine.high %v594, %v610
        %v653 = vunpack.c.l.s4 1934713408
        %v654 = vunpack.c.0.s8 %v653
        %v655 = vlaneseq
        %v656 = vshrl.u32 %v655, 7
        %v657 = vsub.s32 %v654, %v656
        %v658 = vrot.slane %v650, %v657
        %v660 = vunpack.c.l.s4 1934713408
        %v661 = vunpack.c.0.s8 %v660
        %v662 = vlaneseq
        %v663 = vshrl.u32 %v662, 7
        %v664 = vsub.s32 %v661, %v663
        %v665 = vrot.slane %v651, %v664
        %v666 = vcombine.low %v601, %v617
        %v667 = vcombine.high %v601, %v617
        %v669 = vunpack.c.l.s4 1934713408
        %v670 = vunpack.c.0.s8 %v669
        %v671 = vlaneseq
        %v672 = vshrl.u32 %v671, 7
        %v673 = vsub.s32 %v670, %v672
        %v674 = vrot.slane %v666, %v673
        %v676 = vunpack.c.l.s4 1934713408
        %v677 = vunpack.c.0.s8 %v676
        %v678 = vlaneseq
        %v679 = vshrl.u32 %v678, 7
        %v680 = vsub.s32 %v677, %v679
        %v681 = vrot.slane %v667, %v680
        %v682 = vcombine.low %v626, %v642
        %v683 = vcombine.high %v626, %v642
        %v685 = vunpack.c.l.s4 1934713408
        %v686 = vunpack.c.0.s8 %v685
        %v687 = vlaneseq
        %v688 = vshrl.u32 %v687, 7
        %v689 = vsub.s32 %v686, %v688
        %v690 = vrot.slane %v682, %v689
        %v692 = vunpack.c.l.s4 1934713408
        %v693 = vunpack.c.0.s8 %v692
        %v694 = vlaneseq
        %v695 = vshrl.u32 %v694, 7
        %v696 = vsub.s32 %v693, %v695
        %v697 = vrot.slane %v683, %v696
        %v698 = vcombine.low %v633, %v649
        %v699 = vcombine.high %v633, %v649
        %v701 = vunpack.c.l.s4 1934713408
        %v702 = vunpack.c.0.s8 %v701
        %v703 = vlaneseq
        %v704 = vshrl.u32 %v703, 7
        %v705 = vsub.s32 %v702, %v704
        %v706 = vrot.slane %v698, %v705
        %v708 = vunpack.c.l.s4 1934713408
        %v709 = vunpack.c.0.s8 %v708
        %v710 = vlaneseq
        %v711 = vshrl.u32 %v710, 7
        %v712 = vsub.s32 %v709, %v711
        %v713 = vrot.slane %v699, %v712
        %v714 = vcombine.low %v658, %v690
        %v715 = vcombine.high %v658, %v690
        %v716 = vcombine.low %v665, %v697
        %v717 = vcombine.high %v665, %v697
        %v718 = vcombine.low %v674, %v706
        %v719 = vcombine.high %v674, %v706
        %v720 = vcombine.low %v681, %v713
        %v721 = vcombine.high %v681, %v713
        %v722 = vcombine.low %v360, %v411
        %v723 = vcombine.high %v360, %v411
        %v725 = vunpack.c.l.s4 1983009808
        %v726 = vunpack.c.0.s8 %v725
        %v727 = vlaneseq
        %v728 = vshrl.u32 %v727, 7
        %v729 = vsub.s32 %v726, %v728
        %v730 = vrot.slane %v722, %v729
        %v732 = vunpack.c.l.s4 1983009808
        %v733 = vunpack.c.0.s8 %v732
        %v734 = vlaneseq
        %v735 = vshrl.u32 %v734, 7
        %v736 = vsub.s32 %v733, %v735
        %v737 = vrot.slane %v723, %v736
        %v738 = vcombine.low %v408, %v414
        %v739 = vcombine.high %v408, %v414
        %v741 = vunpack.c.l.s4 1983009808
        %v742 = vunpack.c.0.s8 %v741
        %v743 = vlaneseq
        %v744 = vshrl.u32 %v743, 7
        %v745 = vsub.s32 %v742, %v744
        %v746 = vrot.slane %v738, %v745
        %v748 = vunpack.c.l.s4 1983009808
        %v749 = vunpack.c.0.s8 %v748
        %v750 = vlaneseq
        %v751 = vshrl.u32 %v750, 7
        %v752 = vsub.s32 %v749, %v751
        %v753 = vrot.slane %v739, %v752
        %v754 = vcombine.low %v417, %v423
        %v755 = vcombine.high %v417, %v423
        %v757 = vunpack.c.l.s4 1983009808
        %v758 = vunpack.c.0.s8 %v757
        %v759 = vlaneseq
        %v760 = vshrl.u32 %v759, 7
        %v761 = vsub.s32 %v758, %v760
        %v762 = vrot.slane %v754, %v761
        %v764 = vunpack.c.l.s4 1983009808
        %v765 = vunpack.c.0.s8 %v764
        %v766 = vlaneseq
        %v767 = vshrl.u32 %v766, 7
        %v768 = vsub.s32 %v765, %v767
        %v769 = vrot.slane %v755, %v768
        %v770 = vcombine.low %v420, %v426
        %v771 = vcombine.high %v420, %v426
        %v773 = vunpack.c.l.s4 1983009808
        %v774 = vunpack.c.0.s8 %v773
        %v775 = vlaneseq
        %v776 = vshrl.u32 %v775, 7
        %v777 = vsub.s32 %v774, %v776
        %v778 = vrot.slane %v770, %v777
        %v780 = vunpack.c.l.s4 1983009808
        %v781 = vunpack.c.0.s8 %v780
        %v782 = vlaneseq
        %v783 = vshrl.u32 %v782, 7
        %v784 = vsub.s32 %v781, %v783
        %v785 = vrot.slane %v771, %v784
        %v786 = vcombine.low %v730, %v746
        %v787 = vcombine.high %v730, %v746
        %v789 = vunpack.c.l.s4 1934713408
        %v790 = vunpack.c.0.s8 %v789
        %v791 = vlaneseq
        %v792 = vshrl.u32 %v791, 7
        %v793 = vsub.s32 %v790, %v792
        %v794 = vrot.slane %v786, %v793
        %v796 = vunpack.c.l.s4 1934713408
        %v797 = vunpack.c.0.s8 %v796
        %v798 = vlaneseq
        %v799 = vshrl.u32 %v798, 7
        %v800 = vsub.s32 %v797, %v799
        %v801 = vrot.slane %v787, %v800
        %v802 = vcombine.low %v737, %v753
        %v803 = vcombine.high %v737, %v753
        %v805 = vunpack.c.l.s4 1934713408
        %v806 = vunpack.c.0.s8 %v805
        %v807 = vlaneseq
        %v808 = vshrl.u32 %v807, 7
        %v809 = vsub.s32 %v806, %v808
        %v810 = vrot.slane %v802, %v809
        %v812 = vunpack.c.l.s4 1934713408
        %v813 = vunpack.c.0.s8 %v812
        %v814 = vlaneseq
        %v815 = vshrl.u32 %v814, 7
        %v816 = vsub.s32 %v813, %v815
        %v817 = vrot.slane %v803, %v816
        %v818 = vcombine.low %v762, %v778
        %v819 = vcombine.high %v762, %v778
        %v821 = vunpack.c.l.s4 1934713408
        %v822 = vunpack.c.0.s8 %v821
        %v823 = vlaneseq
        %v824 = vshrl.u32 %v823, 7
        %v825 = vsub.s32 %v822, %v824
        %v826 = vrot.slane %v818, %v825
        %v828 = vunpack.c.l.s4 1934713408
        %v829 = vunpack.c.0.s8 %v828
        %v830 = vlaneseq
        %v831 = vshrl.u32 %v830, 7
        %v832 = vsub.s32 %v829, %v831
        %v833 = vrot.slane %v819, %v832
        %v834 = vcombine.low %v769, %v785
        %v835 = vcombine.high %v769, %v785
        %v837 = vunpack.c.l.s4 1934713408
        %v838 = vunpack.c.0.s8 %v837
        %v839 = vlaneseq
        %v840 = vshrl.u32 %v839, 7
        %v841 = vsub.s32 %v838, %v840
        %v842 = vrot.slane %v834, %v841
        %v844 = vunpack.c.l.s4 1934713408
        %v845 = vunpack.c.0.s8 %v844
        %v846 = vlaneseq
        %v847 = vshrl.u32 %v846, 7
        %v848 = vsub.s32 %v845, %v847
        %v849 = vrot.slane %v835, %v848
        %v850 = vcombine.low %v794, %v826
        %v851 = vcombine.high %v794, %v826
        %v852 = vcombine.low %v801, %v833
        %v853 = vcombine.high %v801, %v833
        %v854 = vcombine.low %v810, %v842
        %v855 = vcombine.high %v810, %v842
        %v856 = vcombine.low %v817, %v849
        %v857 = vcombine.high %v817, %v849
        %v858 = vcombine.low %v361, %v433
        %v859 = vcombine.high %v361, %v433
        %v861 = vunpack.c.l.s4 1983009808
        %v862 = vunpack.c.0.s8 %v861
        %v863 = vlaneseq
        %v864 = vshrl.u32 %v863, 7
        %v865 = vsub.s32 %v862, %v864
        %v866 = vrot.slane %v858, %v865
        %v868 = vunpack.c.l.s4 1983009808
        %v869 = vunpack.c.0.s8 %v868
        %v870 = vlaneseq
        %v871 = vshrl.u32 %v870, 7
        %v872 = vsub.s32 %v869, %v871
        %v873 = vrot.slane %v859, %v872
        %v874 = vcombine.low %v430, %v436
        %v875 = vcombine.high %v430, %v436
        %v877 = vunpack.c.l.s4 1983009808
        %v878 = vunpack.c.0.s8 %v877
        %v879 = vlaneseq
        %v880 = vshrl.u32 %v879, 7
        %v881 = vsub.s32 %v878, %v880
        %v882 = vrot.slane %v874, %v881
        %v884 = vunpack.c.l.s4 1983009808
        %v885 = vunpack.c.0.s8 %v884
        %v886 = vlaneseq
        %v887 = vshrl.u32 %v886, 7
        %v888 = vsub.s32 %v885, %v887
        %v889 = vrot.slane %v875, %v888
        %v890 = vcombine.low %v439, %v445
        %v891 = vcombine.high %v439, %v445
        %v893 = vunpack.c.l.s4 1983009808
        %v894 = vunpack.c.0.s8 %v893
        %v895 = vlaneseq
        %v896 = vshrl.u32 %v895, 7
        %v897 = vsub.s32 %v894, %v896
        %v898 = vrot.slane %v890, %v897
        %v900 = vunpack.c.l.s4 1983009808
        %v901 = vunpack.c.0.s8 %v900
        %v902 = vlaneseq
        %v903 = vshrl.u32 %v902, 7
        %v904 = vsub.s32 %v901, %v903
        %v905 = vrot.slane %v891, %v904
        %v906 = vcombine.low %v442, %v448
        %v907 = vcombine.high %v442, %v448
        %v909 = vunpack.c.l.s4 1983009808
        %v910 = vunpack.c.0.s8 %v909
        %v911 = vlaneseq
        %v912 = vshrl.u32 %v911, 7
        %v913 = vsub.s32 %v910, %v912
        %v914 = vrot.slane %v906, %v913
        %v916 = vunpack.c.l.s4 1983009808
        %v917 = vunpack.c.0.s8 %v916
        %v918 = vlaneseq
        %v919 = vshrl.u32 %v918, 7
        %v920 = vsub.s32 %v917, %v919
        %v921 = vrot.slane %v907, %v920
        %v922 = vcombine.low %v866, %v882
        %v923 = vcombine.high %v866, %v882
        %v925 = vunpack.c.l.s4 1934713408
        %v926 = vunpack.c.0.s8 %v925
        %v927 = vlaneseq
        %v928 = vshrl.u32 %v927, 7
        %v929 = vsub.s32 %v926, %v928
        %v930 = vrot.slane %v922, %v929
        %v932 = vunpack.c.l.s4 1934713408
        %v933 = vunpack.c.0.s8 %v932
        %v934 = vlaneseq
        %v935 = vshrl.u32 %v934, 7
        %v936 = vsub.s32 %v933, %v935
        %v937 = vrot.slane %v923, %v936
        %v938 = vcombine.low %v873, %v889
        %v939 = vcombine.high %v873, %v889
        %v941 = vunpack.c.l.s4 1934713408
        %v942 = vunpack.c.0.s8 %v941
        %v943 = vlaneseq
        %v944 = vshrl.u32 %v943, 7
        %v945 = vsub.s32 %v942, %v944
        %v946 = vrot.slane %v938, %v945
        %v948 = vunpack.c.l.s4 1934713408
        %v949 = vunpack.c.0.s8 %v948
        %v950 = vlaneseq
        %v951 = vshrl.u32 %v950, 7
        %v952 = vsub.s32 %v949, %v951
        %v953 = vrot.slane %v939, %v952
        %v954 = vcombine.low %v898, %v914
        %v955 = vcombine.high %v898, %v914
        %v957 = vunpack.c.l.s4 1934713408
        %v958 = vunpack.c.0.s8 %v957
        %v959 = vlaneseq
        %v960 = vshrl.u32 %v959, 7
        %v961 = vsub.s32 %v958, %v960
        %v962 = vrot.slane %v954, %v961
        %v964 = vunpack.c.l.s4 1934713408
        %v965 = vunpack.c.0.s8 %v964
        %v966 = vlaneseq
        %v967 = vshrl.u32 %v966, 7
        %v968 = vsub.s32 %v965, %v967
        %v969 = vrot.slane %v955, %v968
        %v970 = vcombine.low %v905, %v921
        %v971 = vcombine.high %v905, %v921
        %v973 = vunpack.c.l.s4 1934713408
        %v974 = vunpack.c.0.s8 %v973
        %v975 = vlaneseq
        %v976 = vshrl.u32 %v975, 7
        %v977 = vsub.s32 %v974, %v976
        %v978 = vrot.slane %v970, %v977
        %v980 = vunpack.c.l.s4 1934713408
        %v981 = vunpack.c.0.s8 %v980
        %v982 = vlaneseq
        %v983 = vshrl.u32 %v982, 7
        %v984 = vsub.s32 %v981, %v983
        %v985 = vrot.slane %v971, %v984
        %v986 = vcombine.low %v930, %v962
        %v987 = vcombine.high %v930, %v962
        %v988 = vcombine.low %v937, %v969
        %v989 = vcombine.high %v937, %v969
        %v990 = vcombine.low %v946, %v978
        %v991 = vcombine.high %v946, %v978
        %v992 = vcombine.low %v953, %v985
        %v993 = vcombine.high %v953, %v985
        %vm994 = vcmask 130048
        %v995 = vsel %vm994, %v578, -inf
        %996 = vmax.xlane.f32.xlu0 %v995
        %v997 = vpop.xlane.xlu0 %996
        %v998 = vsel %vm994, %v714, -inf
        %999 = vmax.xlane.f32.xlu0 %v998
        %v1000 = vpop.xlane.xlu0 %999
        %v1001 = vsel %vm994, %v850, -inf
        %1002 = vmax.xlane.f32.xlu0 %v1001
        %v1003 = vpop.xlane.xlu0 %1002
        %v1004 = vsel %vm994, %v986, -inf
        %1005 = vmax.xlane.f32.xlu0 %v1004
        %v1006 = vpop.xlane.xlu0 %1005
        %v1007 = vsel %vm994, %v579, -inf
        %1008 = vmax.xlane.f32.xlu0 %v1007
        %v1009 = vpop.xlane.xlu0 %1008
        %v1010 = vsel %vm994, %v715, -inf
        %1011 = vmax.xlane.f32.xlu0 %v1010
        %v1012 = vpop.xlane.xlu0 %1011
        %v1013 = vsel %vm994, %v851, -inf
        %1014 = vmax.xlane.f32.xlu0 %v1013
        %v1015 = vpop.xlane.xlu0 %1014
        %v1016 = vsel %vm994, %v987, -inf
        %1017 = vmax.xlane.f32.xlu0 %v1016
        %v1018 = vpop.xlane.xlu0 %1017
        %v1019 = vsel %vm994, %v580, -inf
        %1020 = vmax.xlane.f32.xlu0 %v1019
        %v1021 = vpop.xlane.xlu0 %1020
        %v1022 = vsel %vm994, %v716, -inf
        %1023 = vmax.xlane.f32.xlu0 %v1022
        %v1024 = vpop.xlane.xlu0 %1023
        %v1025 = vsel %vm994, %v852, -inf
        %1026 = vmax.xlane.f32.xlu0 %v1025
        %v1027 = vpop.xlane.xlu0 %1026
        %v1028 = vsel %vm994, %v988, -inf
        %1029 = vmax.xlane.f32.xlu0 %v1028
        %v1030 = vpop.xlane.xlu0 %1029
        %v1031 = vsel %vm994, %v581, -inf
        %1032 = vmax.xlane.f32.xlu0 %v1031
        %v1033 = vpop.xlane.xlu0 %1032
        %v1034 = vsel %vm994, %v717, -inf
        %1035 = vmax.xlane.f32.xlu0 %v1034
        %v1036 = vpop.xlane.xlu0 %1035
        %v1037 = vsel %vm994, %v853, -inf
        %1038 = vmax.xlane.f32.xlu0 %v1037
        %v1039 = vpop.xlane.xlu0 %1038
        %v1040 = vsel %vm994, %v989, -inf
        %1041 = vmax.xlane.f32.xlu0 %v1040
        %v1042 = vpop.xlane.xlu0 %1041
        %v1043 = vsel %vm994, %v582, -inf
        %1044 = vmax.xlane.f32.xlu0 %v1043
        %v1045 = vpop.xlane.xlu0 %1044
        %v1046 = vsel %vm994, %v718, -inf
        %1047 = vmax.xlane.f32.xlu0 %v1046
        %v1048 = vpop.xlane.xlu0 %1047
        %v1049 = vsel %vm994, %v854, -inf
        %1050 = vmax.xlane.f32.xlu0 %v1049
        %v1051 = vpop.xlane.xlu0 %1050
        %v1052 = vsel %vm994, %v990, -inf
        %1053 = vmax.xlane.f32.xlu0 %v1052
        %v1054 = vpop.xlane.xlu0 %1053
        %v1055 = vsel %vm994, %v583, -inf
        %1056 = vmax.xlane.f32.xlu0 %v1055
        %v1057 = vpop.xlane.xlu0 %1056
        %v1058 = vsel %vm994, %v719, -inf
        %1059 = vmax.xlane.f32.xlu0 %v1058
        %v1060 = vpop.xlane.xlu0 %1059
        %v1061 = vsel %vm994, %v855, -inf
        %1062 = vmax.xlane.f32.xlu0 %v1061
        %v1063 = vpop.xlane.xlu0 %1062
        %v1064 = vsel %vm994, %v991, -inf
        %1065 = vmax.xlane.f32.xlu0 %v1064
        %v1066 = vpop.xlane.xlu0 %1065
        %v1067 = vsel %vm994, %v584, -inf
        %1068 = vmax.xlane.f32.xlu0 %v1067
        %v1069 = vpop.xlane.xlu0 %1068
        %v1070 = vsel %vm994, %v720, -inf
        %1071 = vmax.xlane.f32.xlu0 %v1070
        %v1072 = vpop.xlane.xlu0 %1071
        %v1073 = vsel %vm994, %v856, -inf
        %1074 = vmax.xlane.f32.xlu0 %v1073
        %v1075 = vpop.xlane.xlu0 %1074
        %v1076 = vsel %vm994, %v992, -inf
        %1077 = vmax.xlane.f32.xlu0 %v1076
        %v1078 = vpop.xlane.xlu0 %1077
        %v1079 = vsel %vm994, %v585, -inf
        %1080 = vmax.xlane.f32.xlu0 %v1079
        %v1081 = vpop.xlane.xlu0 %1080
        %v1082 = vsel %vm994, %v721, -inf
        %1083 = vmax.xlane.f32.xlu0 %v1082
        %v1084 = vpop.xlane.xlu0 %1083
        %v1085 = vsel %vm994, %v857, -inf
        %1086 = vmax.xlane.f32.xlu0 %v1085
        %v1087 = vpop.xlane.xlu0 %1086
        %v1088 = vsel %vm994, %v993, -inf
        %1089 = vmax.xlane.f32.xlu0 %v1088
        %v1090 = vpop.xlane.xlu0 %1089
        %1091 = vset.pattern.permute.xlu0 57
        %1092 = vperm.xlu0 %1091, %v177
        %v1093 = vpop.permute.xlu0 %1092
        %1095 = vrot.lane.b32.xlu0 %v177, 120
        %v1096 = vpop.permute.xlu0 %1095
        %vm1097 = vcmask 64512
        %v1098 = vsel %vm1097, %v1096, 0
        %1100 = vmatprep.subr.mxu0 %v359
        %1101 = vmatpush1.msra.mxu0 %v358
        %1102 = vmatprep.subr.mxu0 0.0
        %1103 = vmatpush1.msra.mxu0 0.0
        %1104 = vmatprep.subr.mxu0 0.0
        %1105 = vmatpush1.msra.mxu0 0.0
        %1106 = vmatprep.subr.mxu0 0.0
        %1107 = vmatpush1.msra.mxu0 0.0
        %1108 = vmatprep.subr.mxu0 0.0
        %1109 = vmatpush1.msra.mxu0 0.0
        %1110 = vmatprep.subr.mxu0 0.0
        %1111 = vmatpush1.msra.mxu0 0.0
        %1112 = vmatprep.subr.mxu0 0.0
        %1113 = vmatpush1.msra.mxu0 0.0
        %1114 = vmatprep.subr.mxu0 0.0
        %1115 = vmatpush1.msra.mxu0 0.0
        %1116 = vmatprep.subr.mxu0 0.0
        %1117 = vmatpush1.msra.mxu0 0.0
        %1118 = vmatprep.subr.mxu0 0.0
        %1119 = vmatpush1.msra.mxu0 0.0
        %1120 = vmatprep.subr.mxu0 0.0
        %1121 = vmatpush1.msra.mxu0 0.0
        %1122 = vmatprep.subr.mxu0 0.0
        %1123 = vmatpush1.msra.mxu0 0.0
        %1124 = vmatprep.subr.mxu0 0.0
        %1125 = vmatpush1.msra.mxu0 0.0
        %1126 = vmatprep.subr.mxu0 0.0
        %1127 = vmatpush1.msra.mxu0 0.0
        %1128 = vmatprep.subr.mxu0 0.0
        %1129 = vmatpush1.msra.mxu0 0.0
        %1130 = vmatprep.subr.mxu0 0.0
        %1131 = vmatpush1.msra.mxu0 0.0
        %1132 = vmatprep.subr.mxu0 0.0
        %1133 = vmatpush1.msra.mxu0 0.0
        %1134 = vmatprep.subr.mxu0 0.0
        %1135 = vmatpush1.msra.mxu0 0.0
        %1136 = vmatprep.subr.mxu0 0.0
        %1137 = vmatpush1.msra.mxu0 0.0
        %1138 = vmatprep.subr.mxu0 0.0
        %1139 = vmatpush1.msra.mxu0 0.0
        %1140 = vmatprep.subr.mxu0 0.0
        %1141 = vmatpush1.msra.mxu0 0.0
        %1142 = vmatprep.subr.mxu0 0.0
        %1143 = vmatpush1.msra.mxu0 0.0
        %1144 = vmatprep.subr.mxu0 0.0
        %1145 = vmatpush1.msra.mxu0 0.0
        %1146 = vmatprep.subr.mxu0 0.0
        %1147 = vmatpush1.msra.mxu0 0.0
        %1148 = vmatprep.subr.mxu0 0.0
        %1149 = vmatpush1.msra.mxu0 0.0
        %1150 = vmatprep.subr.mxu0 0.0
        %1151 = vmatpush1.msra.mxu0 0.0
        %1152 = vmatprep.subr.mxu0 0.0
        %1153 = vmatpush1.msra.mxu0 0.0
        %1154 = vmatprep.subr.mxu0 0.0
        %1155 = vmatpush1.msra.mxu0 0.0
        %1156 = vmatprep.subr.mxu0 0.0
        %1157 = vmatpush1.msra.mxu0 0.0
        %1158 = vmatprep.subr.mxu0 0.0
        %1159 = vmatpush1.msra.mxu0 0.0
        %1160 = vmatprep.subr.mxu0 0.0
        %1161 = vmatpush1.msra.mxu0 0.0
        %1162 = vmatprep.subr.mxu0 0.0
        %1163 = vmatpush1.msra.mxu0 0.0
        %1164 = vmatprep.mubr.f32.mxu0 0.0
        %1165 = vmatmul.mubr.f32.gmra.mrb[0].mxu0 %v1098
        %v1166 = vpop.f32.mrb[0].mxu0
        %v1167 = vadd.f32 %v1093, %v1166
        %v1168 = vpop.f32.mrb[0].mxu0
        %v1169 = vadd.f32 %v1093, %v1168
        %1170 = vdwg.mxu0
        %1171 = vmatprep.subr.mxu0 %v361
        %1172 = vmatpush1.msra.mxu0 %v360
        %1173 = vmatprep.subr.mxu0 0.0
        %1174 = vmatpush1.msra.mxu0 0.0
        %1175 = vmatprep.subr.mxu0 0.0
        %1176 = vmatpush1.msra.mxu0 0.0
        %1177 = vmatprep.subr.mxu0 0.0
        %1178 = vmatpush1.msra.mxu0 0.0
        %1179 = vmatprep.subr.mxu0 0.0
        %1180 = vmatpush1.msra.mxu0 0.0
        %1181 = vmatprep.subr.mxu0 0.0
        %1182 = vmatpush1.msra.mxu0 0.0
        %1183 = vmatprep.subr.mxu0 0.0
        %1184 = vmatpush1.msra.mxu0 0.0
        %1185 = vmatprep.subr.mxu0 0.0
        %1186 = vmatpush1.msra.mxu0 0.0
        %1187 = vmatprep.subr.mxu0 0.0
        %1188 = vmatpush1.msra.mxu0 0.0
        %1189 = vmatprep.subr.mxu0 0.0
        %1190 = vmatpush1.msra.mxu0 0.0
        %1191 = vmatprep.subr.mxu0 0.0
        %1192 = vmatpush1.msra.mxu0 0.0
        %1193 = vmatprep.subr.mxu0 0.0
        %1194 = vmatpush1.msra.mxu0 0.0
        %1195 = vmatprep.subr.mxu0 0.0
        %1196 = vmatpush1.msra.mxu0 0.0
        %1197 = vmatprep.subr.mxu0 0.0
        %1198 = vmatpush1.msra.mxu0 0.0
        %1199 = vmatprep.subr.mxu0 0.0
        %1200 = vmatpush1.msra.mxu0 0.0
        %1201 = vmatprep.subr.mxu0 0.0
        %1202 = vmatpush1.msra.mxu0 0.0
        %1203 = vmatprep.subr.mxu0 0.0
        %1204 = vmatpush1.msra.mxu0 0.0
        %1205 = vmatprep.subr.mxu0 0.0
        %1206 = vmatpush1.msra.mxu0 0.0
        %1207 = vmatprep.subr.mxu0 0.0
        %1208 = vmatpush1.msra.mxu0 0.0
        %1209 = vmatprep.subr.mxu0 0.0
        %1210 = vmatpush1.msra.mxu0 0.0
        %1211 = vmatprep.subr.mxu0 0.0
        %1212 = vmatpush1.msra.mxu0 0.0
        %1213 = vmatprep.subr.mxu0 0.0
        %1214 = vmatpush1.msra.mxu0 0.0
        %1215 = vmatprep.subr.mxu0 0.0
        %1216 = vmatpush1.msra.mxu0 0.0
        %1217 = vmatprep.subr.mxu0 0.0
        %1218 = vmatpush1.msra.mxu0 0.0
        %1219 = vmatprep.subr.mxu0 0.0
        %1220 = vmatpush1.msra.mxu0 0.0
        %1221 = vmatprep.subr.mxu0 0.0
        %1222 = vmatpush1.msra.mxu0 0.0
        %1223 = vmatprep.subr.mxu0 0.0
        %1224 = vmatpush1.msra.mxu0 0.0
        %1225 = vmatprep.subr.mxu0 0.0
        %1226 = vmatpush1.msra.mxu0 0.0
        %1227 = vmatprep.subr.mxu0 0.0
        %1228 = vmatpush1.msra.mxu0 0.0
        %1229 = vmatprep.subr.mxu0 0.0
        %1230 = vmatpush1.msra.mxu0 0.0
        %1231 = vmatprep.subr.mxu0 0.0
        %1232 = vmatpush1.msra.mxu0 0.0
        %1233 = vmatprep.subr.mxu0 0.0
        %1234 = vmatpush1.msra.mxu0 0.0
        %1235 = vmatprep.mubr.f32.mxu0 0.0
        %1236 = vmatmul.mubr.f32.gmra.mrb[0].mxu0 %v1098
        %v1237 = vpop.f32.mrb[0].mxu0
        %v1238 = vadd.f32 %v1093, %v1237
        %v1239 = vpop.f32.mrb[0].mxu0
        %v1240 = vadd.f32 %v1093, %v1239
        %1241 = vdwg.mxu0
        %1242 = vrot.lane.b32.xlu0 %v177, 112
        %v1243 = vpop.permute.xlu0 %1242
        %v1276 = vlaneseq
        %v1277 = vand.u32 %v1276, 127
        %v1278 = vlaneseq
        %v1279 = vshrl.u32 %v1278, 7
        %v1280 = vsub.s32 %v1277, %v1279
        %v1281 = vrot.slane %v997, %v1280
        %v1282 = vadd.s32 %v1277, 4294967288
        %v1283 = vlaneseq
        %v1284 = vshrl.u32 %v1283, 7
        %v1285 = vsub.s32 %v1282, %v1284
        %v1286 = vrot.slane %v1000, %v1285
        %vm1287 = vcmask 130112
        %v1288 = vsel %vm1287, %v1286, %v1281
        %v1289 = vadd.s32 %v1277, 4294967280
        %v1290 = vlaneseq
        %v1291 = vshrl.u32 %v1290, 7
        %v1292 = vsub.s32 %v1289, %v1291
        %v1293 = vrot.slane %v1003, %v1292
        %vm1294 = vcmask 195712
        %v1295 = vsel %vm1294, %v1293, %v1288
        %v1296 = vadd.s32 %v1277, 4294967272
        %v1297 = vlaneseq
        %v1298 = vshrl.u32 %v1297, 7
        %v1299 = vsub.s32 %v1296, %v1298
        %v1300 = vrot.slane %v1006, %v1299
        %vm1301 = vcmask 261312
        %v1302 = vsel %vm1301, %v1300, %v1295
        %v1303 = vlaneseq
        %v1304 = vshrl.u32 %v1303, 7
        %v1305 = vsub.s32 %v1277, %v1304
        %v1306 = vrot.slane %v1009, %v1305
        %v1307 = vlaneseq
        %v1308 = vshrl.u32 %v1307, 7
        %v1309 = vsub.s32 %v1282, %v1308
        %v1310 = vrot.slane %v1012, %v1309
        %v1311 = vsel %vm1287, %v1310, %v1306
        %v1312 = vlaneseq
        %v1313 = vshrl.u32 %v1312, 7
        %v1314 = vsub.s32 %v1289, %v1313
        %v1315 = vrot.slane %v1015, %v1314
        %v1316 = vsel %vm1294, %v1315, %v1311
        %v1317 = vlaneseq
        %v1318 = vshrl.u32 %v1317, 7
        %v1319 = vsub.s32 %v1296, %v1318
        %v1320 = vrot.slane %v1018, %v1319
        %v1321 = vsel %vm1301, %v1320, %v1316
        %v1322 = vlaneseq
        %v1323 = vshrl.u32 %v1322, 7
        %v1324 = vsub.s32 %v1277, %v1323
        %v1325 = vrot.slane %v1021, %v1324
        %v1326 = vlaneseq
        %v1327 = vshrl.u32 %v1326, 7
        %v1328 = vsub.s32 %v1282, %v1327
        %v1329 = vrot.slane %v1024, %v1328
        %v1330 = vsel %vm1287, %v1329, %v1325
        %v1331 = vlaneseq
        %v1332 = vshrl.u32 %v1331, 7
        %v1333 = vsub.s32 %v1289, %v1332
        %v1334 = vrot.slane %v1027, %v1333
        %v1335 = vsel %vm1294, %v1334, %v1330
        %v1336 = vlaneseq
        %v1337 = vshrl.u32 %v1336, 7
        %v1338 = vsub.s32 %v1296, %v1337
        %v1339 = vrot.slane %v1030, %v1338
        %v1340 = vsel %vm1301, %v1339, %v1335
        %v1341 = vlaneseq
        %v1342 = vshrl.u32 %v1341, 7
        %v1343 = vsub.s32 %v1277, %v1342
        %v1344 = vrot.slane %v1033, %v1343
        %v1345 = vlaneseq
        %v1346 = vshrl.u32 %v1345, 7
        %v1347 = vsub.s32 %v1282, %v1346
        %v1348 = vrot.slane %v1036, %v1347
        %v1349 = vsel %vm1287, %v1348, %v1344
        %v1350 = vlaneseq
        %v1351 = vshrl.u32 %v1350, 7
        %v1352 = vsub.s32 %v1289, %v1351
        %v1353 = vrot.slane %v1039, %v1352
        %v1354 = vsel %vm1294, %v1353, %v1349
        %v1355 = vlaneseq
        %v1356 = vshrl.u32 %v1355, 7
        %v1357 = vsub.s32 %v1296, %v1356
        %v1358 = vrot.slane %v1042, %v1357
        %v1359 = vsel %vm1301, %v1358, %v1354
        %v1360 = vlaneseq
        %v1361 = vshrl.u32 %v1360, 7
        %v1362 = vsub.s32 %v1277, %v1361
        %v1363 = vrot.slane %v1045, %v1362
        %v1364 = vlaneseq
        %v1365 = vshrl.u32 %v1364, 7
        %v1366 = vsub.s32 %v1282, %v1365
        %v1367 = vrot.slane %v1048, %v1366
        %v1368 = vsel %vm1287, %v1367, %v1363
        %v1369 = vlaneseq
        %v1370 = vshrl.u32 %v1369, 7
        %v1371 = vsub.s32 %v1289, %v1370
        %v1372 = vrot.slane %v1051, %v1371
        %v1373 = vsel %vm1294, %v1372, %v1368
        %v1374 = vlaneseq
        %v1375 = vshrl.u32 %v1374, 7
        %v1376 = vsub.s32 %v1296, %v1375
        %v1377 = vrot.slane %v1054, %v1376
        %v1378 = vsel %vm1301, %v1377, %v1373
        %v1379 = vlaneseq
        %v1380 = vshrl.u32 %v1379, 7
        %v1381 = vsub.s32 %v1277, %v1380
        %v1382 = vrot.slane %v1057, %v1381
        %v1383 = vlaneseq
        %v1384 = vshrl.u32 %v1383, 7
        %v1385 = vsub.s32 %v1282, %v1384
        %v1386 = vrot.slane %v1060, %v1385
        %v1387 = vsel %vm1287, %v1386, %v1382
        %v1388 = vlaneseq
        %v1389 = vshrl.u32 %v1388, 7
        %v1390 = vsub.s32 %v1289, %v1389
        %v1391 = vrot.slane %v1063, %v1390
        %v1392 = vsel %vm1294, %v1391, %v1387
        %v1393 = vlaneseq
        %v1394 = vshrl.u32 %v1393, 7
        %v1395 = vsub.s32 %v1296, %v1394
        %v1396 = vrot.slane %v1066, %v1395
        %v1397 = vsel %vm1301, %v1396, %v1392
        %v1398 = vlaneseq
        %v1399 = vshrl.u32 %v1398, 7
        %v1400 = vsub.s32 %v1277, %v1399
        %v1401 = vrot.slane %v1069, %v1400
        %v1402 = vlaneseq
        %v1403 = vshrl.u32 %v1402, 7
        %v1404 = vsub.s32 %v1282, %v1403
        %v1405 = vrot.slane %v1072, %v1404
        %v1406 = vsel %vm1287, %v1405, %v1401
        %v1407 = vlaneseq
        %v1408 = vshrl.u32 %v1407, 7
        %v1409 = vsub.s32 %v1289, %v1408
        %v1410 = vrot.slane %v1075, %v1409
        %v1411 = vsel %vm1294, %v1410, %v1406
        %v1412 = vlaneseq
        %v1413 = vshrl.u32 %v1412, 7
        %v1414 = vsub.s32 %v1296, %v1413
        %v1415 = vrot.slane %v1078, %v1414
        %v1416 = vsel %vm1301, %v1415, %v1411
        %v1417 = vlaneseq
        %v1418 = vshrl.u32 %v1417, 7
        %v1419 = vsub.s32 %v1277, %v1418
        %v1420 = vrot.slane %v1081, %v1419
        %v1421 = vlaneseq
        %v1422 = vshrl.u32 %v1421, 7
        %v1423 = vsub.s32 %v1282, %v1422
        %v1424 = vrot.slane %v1084, %v1423
        %v1425 = vsel %vm1287, %v1424, %v1420
        %v1426 = vlaneseq
        %v1427 = vshrl.u32 %v1426, 7
        %v1428 = vsub.s32 %v1289, %v1427
        %v1429 = vrot.slane %v1087, %v1428
        %v1430 = vsel %vm1294, %v1429, %v1425
        %v1431 = vlaneseq
        %v1432 = vshrl.u32 %v1431, 7
        %v1433 = vsub.s32 %v1296, %v1432
        %v1434 = vrot.slane %v1090, %v1433
        %v1435 = vsel %vm1301, %v1434, %v1430
        %vm1436 = vcmask 1041409
        %v1437 = vsel %vm1436, %v1321, %v1302
        %vm1438 = vcmask 1042434
        %v1439 = vsel %vm1438, %v1340, %v1437
        %vm1440 = vcmask 1043459
        %v1441 = vsel %vm1440, %v1359, %v1439
        %vm1442 = vcmask 1044484
        %v1443 = vsel %vm1442, %v1378, %v1441
        %vm1444 = vcmask 1045509
        %v1445 = vsel %vm1444, %v1397, %v1443
        %vm1446 = vcmask 1046534
        %v1447 = vsel %vm1446, %v1416, %v1445
        %vm1448 = vcmask 1047559
        %v1449 = vsel %vm1448, %v1435, %v1447
        %v1451 = vsel %vm1097, %v1243, 0
        %1453 = vmatprep.subr.mxu0 0.0
        %1454 = vmatpush1.msra.mxu0 %v1449
        %1455 = vmatprep.subr.mxu0 0.0
        %1456 = vmatpush1.msra.mxu0 0.0
        %1457 = vmatprep.subr.mxu0 0.0
        %1458 = vmatpush1.msra.mxu0 0.0
        %1459 = vmatprep.subr.mxu0 0.0
        %1460 = vmatpush1.msra.mxu0 0.0
        %1461 = vmatprep.subr.mxu0 0.0
        %1462 = vmatpush1.msra.mxu0 0.0
        %1463 = vmatprep.subr.mxu0 0.0
        %1464 = vmatpush1.msra.mxu0 0.0
        %1465 = vmatprep.subr.mxu0 0.0
        %1466 = vmatpush1.msra.mxu0 0.0
        %1467 = vmatprep.subr.mxu0 0.0
        %1468 = vmatpush1.msra.mxu0 0.0
        %1469 = vmatprep.subr.mxu0 0.0
        %1470 = vmatpush1.msra.mxu0 0.0
        %1471 = vmatprep.subr.mxu0 0.0
        %1472 = vmatpush1.msra.mxu0 0.0
        %1473 = vmatprep.subr.mxu0 0.0
        %1474 = vmatpush1.msra.mxu0 0.0
        %1475 = vmatprep.subr.mxu0 0.0
        %1476 = vmatpush1.msra.mxu0 0.0
        %1477 = vmatprep.subr.mxu0 0.0
        %1478 = vmatpush1.msra.mxu0 0.0
        %1479 = vmatprep.subr.mxu0 0.0
        %1480 = vmatpush1.msra.mxu0 0.0
        %1481 = vmatprep.subr.mxu0 0.0
        %1482 = vmatpush1.msra.mxu0 0.0
        %1483 = vmatprep.subr.mxu0 0.0
        %1484 = vmatpush1.msra.mxu0 0.0
        %1485 = vmatprep.subr.mxu0 0.0
        %1486 = vmatpush1.msra.mxu0 0.0
        %1487 = vmatprep.subr.mxu0 0.0
        %1488 = vmatpush1.msra.mxu0 0.0
        %1489 = vmatprep.subr.mxu0 0.0
        %1490 = vmatpush1.msra.mxu0 0.0
        %1491 = vmatprep.subr.mxu0 0.0
        %1492 = vmatpush1.msra.mxu0 0.0
        %1493 = vmatprep.subr.mxu0 0.0
        %1494 = vmatpush1.msra.mxu0 0.0
        %1495 = vmatprep.subr.mxu0 0.0
        %1496 = vmatpush1.msra.mxu0 0.0
        %1497 = vmatprep.subr.mxu0 0.0
        %1498 = vmatpush1.msra.mxu0 0.0
        %1499 = vmatprep.subr.mxu0 0.0
        %1500 = vmatpush1.msra.mxu0 0.0
        %1501 = vmatprep.subr.mxu0 0.0
        %1502 = vmatpush1.msra.mxu0 0.0
        %1503 = vmatprep.subr.mxu0 0.0
        %1504 = vmatpush1.msra.mxu0 0.0
        %1505 = vmatprep.subr.mxu0 0.0
        %1506 = vmatpush1.msra.mxu0 0.0
        %1507 = vmatprep.subr.mxu0 0.0
        %1508 = vmatpush1.msra.mxu0 0.0
        %1509 = vmatprep.subr.mxu0 0.0
        %1510 = vmatpush1.msra.mxu0 0.0
        %1511 = vmatprep.subr.mxu0 0.0
        %1512 = vmatpush1.msra.mxu0 0.0
        %1513 = vmatprep.subr.mxu0 0.0
        %1514 = vmatpush1.msra.mxu0 0.0
        %1515 = vmatprep.subr.mxu0 0.0
        %1516 = vmatpush1.msra.mxu0 0.0
        %1517 = vmatprep.mubr.f32.mxu0 0.0
        %1518 = vmatmul.mubr.f32.gmra.mrb[0].mxu0 %v1451
        %v1519 = vpop.f32.mrb[0].mxu0
        %v1520 = vadd.f32 0.0, %v1519
        %v1521 = vpop.f32.mrb[0].mxu0
        %1522 = vdwg.mxu0
        %1524 = vrot.lane.b32.xlu0 %v1167, 112
        %v1525 = vpop.permute.xlu0 %1524
        %1527 = vrot.lane.b32.xlu0 %v1167, 96
        %v1528 = vpop.permute.xlu0 %1527
        %1530 = vrot.lane.b32.xlu0 %v1167, 80
        %v1531 = vpop.permute.xlu0 %1530
        %1533 = vrot.lane.b32.xlu0 %v1167, 64
        %v1534 = vpop.permute.xlu0 %1533
        %1536 = vrot.lane.b32.xlu0 %v1167, 48
        %v1537 = vpop.permute.xlu0 %1536
        %1539 = vrot.lane.b32.xlu0 %v1167, 32
        %v1540 = vpop.permute.xlu0 %1539
        %1542 = vrot.lane.b32.xlu0 %v1167, 16
        %v1543 = vpop.permute.xlu0 %1542
        %1546 = vrot.lane.b32.xlu0 %v1169, 112
        %v1547 = vpop.permute.xlu0 %1546
        %1549 = vrot.lane.b32.xlu0 %v1169, 96
        %v1550 = vpop.permute.xlu0 %1549
        %1552 = vrot.lane.b32.xlu0 %v1169, 80
        %v1553 = vpop.permute.xlu0 %1552
        %1555 = vrot.lane.b32.xlu0 %v1169, 64
        %v1556 = vpop.permute.xlu0 %1555
        %1558 = vrot.lane.b32.xlu0 %v1169, 48
        %v1559 = vpop.permute.xlu0 %1558
        %1561 = vrot.lane.b32.xlu0 %v1169, 32
        %v1562 = vpop.permute.xlu0 %1561
        %1564 = vrot.lane.b32.xlu0 %v1169, 16
        %v1565 = vpop.permute.xlu0 %1564
        %1568 = vrot.lane.b32.xlu0 %v1238, 112
        %v1569 = vpop.permute.xlu0 %1568
        %1571 = vrot.lane.b32.xlu0 %v1238, 96
        %v1572 = vpop.permute.xlu0 %1571
        %1574 = vrot.lane.b32.xlu0 %v1238, 80
        %v1575 = vpop.permute.xlu0 %1574
        %1577 = vrot.lane.b32.xlu0 %v1238, 64
        %v1578 = vpop.permute.xlu0 %1577
        %1580 = vrot.lane.b32.xlu0 %v1238, 48
        %v1581 = vpop.permute.xlu0 %1580
        %1583 = vrot.lane.b32.xlu0 %v1238, 32
        %v1584 = vpop.permute.xlu0 %1583
        %1586 = vrot.lane.b32.xlu0 %v1238, 16
        %v1587 = vpop.permute.xlu0 %1586
        %1590 = vrot.lane.b32.xlu0 %v1240, 112
        %v1591 = vpop.permute.xlu0 %1590
        %1593 = vrot.lane.b32.xlu0 %v1240, 96
        %v1594 = vpop.permute.xlu0 %1593
        %1596 = vrot.lane.b32.xlu0 %v1240, 80
        %v1597 = vpop.permute.xlu0 %1596
        %1599 = vrot.lane.b32.xlu0 %v1240, 64
        %v1600 = vpop.permute.xlu0 %1599
        %1602 = vrot.lane.b32.xlu0 %v1240, 48
        %v1603 = vpop.permute.xlu0 %1602
        %1605 = vrot.lane.b32.xlu0 %v1240, 32
        %v1606 = vpop.permute.xlu0 %1605
        %1608 = vrot.lane.b32.xlu0 %v1240, 16
        %v1609 = vpop.permute.xlu0 %1608
        %v1611 = vcombine.low %v1167, %v1528
        %v1612 = vcombine.high %v1167, %v1528
        %v1614 = vunpack.c.l.s4 1983009808
        %v1615 = vunpack.c.0.s8 %v1614
        %v1616 = vlaneseq
        %v1617 = vshrl.u32 %v1616, 7
        %v1618 = vsub.s32 %v1615, %v1617
        %v1619 = vrot.slane %v1611, %v1618
        %v1621 = vunpack.c.l.s4 1983009808
        %v1622 = vunpack.c.0.s8 %v1621
        %v1623 = vlaneseq
        %v1624 = vshrl.u32 %v1623, 7
        %v1625 = vsub.s32 %v1622, %v1624
        %v1626 = vrot.slane %v1612, %v1625
        %v1627 = vcombine.low %v1525, %v1531
        %v1628 = vcombine.high %v1525, %v1531
        %v1630 = vunpack.c.l.s4 1983009808
        %v1631 = vunpack.c.0.s8 %v1630
        %v1632 = vlaneseq
        %v1633 = vshrl.u32 %v1632, 7
        %v1634 = vsub.s32 %v1631, %v1633
        %v1635 = vrot.slane %v1627, %v1634
        %v1637 = vunpack.c.l.s4 1983009808
        %v1638 = vunpack.c.0.s8 %v1637
        %v1639 = vlaneseq
        %v1640 = vshrl.u32 %v1639, 7
        %v1641 = vsub.s32 %v1638, %v1640
        %v1642 = vrot.slane %v1628, %v1641
        %v1643 = vcombine.low %v1534, %v1540
        %v1644 = vcombine.high %v1534, %v1540
        %v1646 = vunpack.c.l.s4 1983009808
        %v1647 = vunpack.c.0.s8 %v1646
        %v1648 = vlaneseq
        %v1649 = vshrl.u32 %v1648, 7
        %v1650 = vsub.s32 %v1647, %v1649
        %v1651 = vrot.slane %v1643, %v1650
        %v1653 = vunpack.c.l.s4 1983009808
        %v1654 = vunpack.c.0.s8 %v1653
        %v1655 = vlaneseq
        %v1656 = vshrl.u32 %v1655, 7
        %v1657 = vsub.s32 %v1654, %v1656
        %v1658 = vrot.slane %v1644, %v1657
        %v1659 = vcombine.low %v1537, %v1543
        %v1660 = vcombine.high %v1537, %v1543
        %v1662 = vunpack.c.l.s4 1983009808
        %v1663 = vunpack.c.0.s8 %v1662
        %v1664 = vlaneseq
        %v1665 = vshrl.u32 %v1664, 7
        %v1666 = vsub.s32 %v1663, %v1665
        %v1667 = vrot.slane %v1659, %v1666
        %v1669 = vunpack.c.l.s4 1983009808
        %v1670 = vunpack.c.0.s8 %v1669
        %v1671 = vlaneseq
        %v1672 = vshrl.u32 %v1671, 7
        %v1673 = vsub.s32 %v1670, %v1672
        %v1674 = vrot.slane %v1660, %v1673
        %v1675 = vcombine.low %v1619, %v1635
        %v1676 = vcombine.high %v1619, %v1635
        %v1678 = vunpack.c.l.s4 1934713408
        %v1679 = vunpack.c.0.s8 %v1678
        %v1680 = vlaneseq
        %v1681 = vshrl.u32 %v1680, 7
        %v1682 = vsub.s32 %v1679, %v1681
        %v1683 = vrot.slane %v1675, %v1682
        %v1685 = vunpack.c.l.s4 1934713408
        %v1686 = vunpack.c.0.s8 %v1685
        %v1687 = vlaneseq
        %v1688 = vshrl.u32 %v1687, 7
        %v1689 = vsub.s32 %v1686, %v1688
        %v1690 = vrot.slane %v1676, %v1689
        %v1691 = vcombine.low %v1626, %v1642
        %v1692 = vcombine.high %v1626, %v1642
        %v1694 = vunpack.c.l.s4 1934713408
        %v1695 = vunpack.c.0.s8 %v1694
        %v1696 = vlaneseq
        %v1697 = vshrl.u32 %v1696, 7
        %v1698 = vsub.s32 %v1695, %v1697
        %v1699 = vrot.slane %v1691, %v1698
        %v1701 = vunpack.c.l.s4 1934713408
        %v1702 = vunpack.c.0.s8 %v1701
        %v1703 = vlaneseq
        %v1704 = vshrl.u32 %v1703, 7
        %v1705 = vsub.s32 %v1702, %v1704
        %v1706 = vrot.slane %v1692, %v1705
        %v1707 = vcombine.low %v1651, %v1667
        %v1708 = vcombine.high %v1651, %v1667
        %v1710 = vunpack.c.l.s4 1934713408
        %v1711 = vunpack.c.0.s8 %v1710
        %v1712 = vlaneseq
        %v1713 = vshrl.u32 %v1712, 7
        %v1714 = vsub.s32 %v1711, %v1713
        %v1715 = vrot.slane %v1707, %v1714
        %v1717 = vunpack.c.l.s4 1934713408
        %v1718 = vunpack.c.0.s8 %v1717
        %v1719 = vlaneseq
        %v1720 = vshrl.u32 %v1719, 7
        %v1721 = vsub.s32 %v1718, %v1720
        %v1722 = vrot.slane %v1708, %v1721
        %v1723 = vcombine.low %v1658, %v1674
        %v1724 = vcombine.high %v1658, %v1674
        %v1726 = vunpack.c.l.s4 1934713408
        %v1727 = vunpack.c.0.s8 %v1726
        %v1728 = vlaneseq
        %v1729 = vshrl.u32 %v1728, 7
        %v1730 = vsub.s32 %v1727, %v1729
        %v1731 = vrot.slane %v1723, %v1730
        %v1733 = vunpack.c.l.s4 1934713408
        %v1734 = vunpack.c.0.s8 %v1733
        %v1735 = vlaneseq
        %v1736 = vshrl.u32 %v1735, 7
        %v1737 = vsub.s32 %v1734, %v1736
        %v1738 = vrot.slane %v1724, %v1737
        %v1739 = vcombine.low %v1683, %v1715
        %v1740 = vcombine.high %v1683, %v1715
        %v1741 = vcombine.low %v1690, %v1722
        %v1742 = vcombine.high %v1690, %v1722
        %v1743 = vcombine.low %v1699, %v1731
        %v1744 = vcombine.high %v1699, %v1731
        %v1745 = vcombine.low %v1706, %v1738
        %v1746 = vcombine.high %v1706, %v1738
        %v1747 = vcombine.low %v1169, %v1550
        %v1748 = vcombine.high %v1169, %v1550
        %v1750 = vunpack.c.l.s4 1983009808
        %v1751 = vunpack.c.0.s8 %v1750
        %v1752 = vlaneseq
        %v1753 = vshrl.u32 %v1752, 7
        %v1754 = vsub.s32 %v1751, %v1753
        %v1755 = vrot.slane %v1747, %v1754
        %v1757 = vunpack.c.l.s4 1983009808
        %v1758 = vunpack.c.0.s8 %v1757
        %v1759 = vlaneseq
        %v1760 = vshrl.u32 %v1759, 7
        %v1761 = vsub.s32 %v1758, %v1760
        %v1762 = vrot.slane %v1748, %v1761
        %v1763 = vcombine.low %v1547, %v1553
        %v1764 = vcombine.high %v1547, %v1553
        %v1766 = vunpack.c.l.s4 1983009808
        %v1767 = vunpack.c.0.s8 %v1766
        %v1768 = vlaneseq
        %v1769 = vshrl.u32 %v1768, 7
        %v1770 = vsub.s32 %v1767, %v1769
        %v1771 = vrot.slane %v1763, %v1770
        %v1773 = vunpack.c.l.s4 1983009808
        %v1774 = vunpack.c.0.s8 %v1773
        %v1775 = vlaneseq
        %v1776 = vshrl.u32 %v1775, 7
        %v1777 = vsub.s32 %v1774, %v1776
        %v1778 = vrot.slane %v1764, %v1777
        %v1779 = vcombine.low %v1556, %v1562
        %v1780 = vcombine.high %v1556, %v1562
        %v1782 = vunpack.c.l.s4 1983009808
        %v1783 = vunpack.c.0.s8 %v1782
        %v1784 = vlaneseq
        %v1785 = vshrl.u32 %v1784, 7
        %v1786 = vsub.s32 %v1783, %v1785
        %v1787 = vrot.slane %v1779, %v1786
        %v1789 = vunpack.c.l.s4 1983009808
        %v1790 = vunpack.c.0.s8 %v1789
        %v1791 = vlaneseq
        %v1792 = vshrl.u32 %v1791, 7
        %v1793 = vsub.s32 %v1790, %v1792
        %v1794 = vrot.slane %v1780, %v1793
        %v1795 = vcombine.low %v1559, %v1565
        %v1796 = vcombine.high %v1559, %v1565
        %v1798 = vunpack.c.l.s4 1983009808
        %v1799 = vunpack.c.0.s8 %v1798
        %v1800 = vlaneseq
        %v1801 = vshrl.u32 %v1800, 7
        %v1802 = vsub.s32 %v1799, %v1801
        %v1803 = vrot.slane %v1795, %v1802
        %v1805 = vunpack.c.l.s4 1983009808
        %v1806 = vunpack.c.0.s8 %v1805
        %v1807 = vlaneseq
        %v1808 = vshrl.u32 %v1807, 7
        %v1809 = vsub.s32 %v1806, %v1808
        %v1810 = vrot.slane %v1796, %v1809
        %v1811 = vcombine.low %v1755, %v1771
        %v1812 = vcombine.high %v1755, %v1771
        %v1814 = vunpack.c.l.s4 1934713408
        %v1815 = vunpack.c.0.s8 %v1814
        %v1816 = vlaneseq
        %v1817 = vshrl.u32 %v1816, 7
        %v1818 = vsub.s32 %v1815, %v1817
        %v1819 = vrot.slane %v1811, %v1818
        %v1821 = vunpack.c.l.s4 1934713408
        %v1822 = vunpack.c.0.s8 %v1821
        %v1823 = vlaneseq
        %v1824 = vshrl.u32 %v1823, 7
        %v1825 = vsub.s32 %v1822, %v1824
        %v1826 = vrot.slane %v1812, %v1825
        %v1827 = vcombine.low %v1762, %v1778
        %v1828 = vcombine.high %v1762, %v1778
        %v1830 = vunpack.c.l.s4 1934713408
        %v1831 = vunpack.c.0.s8 %v1830
        %v1832 = vlaneseq
        %v1833 = vshrl.u32 %v1832, 7
        %v1834 = vsub.s32 %v1831, %v1833
        %v1835 = vrot.slane %v1827, %v1834
        %v1837 = vunpack.c.l.s4 1934713408
        %v1838 = vunpack.c.0.s8 %v1837
        %v1839 = vlaneseq
        %v1840 = vshrl.u32 %v1839, 7
        %v1841 = vsub.s32 %v1838, %v1840
        %v1842 = vrot.slane %v1828, %v1841
        %v1843 = vcombine.low %v1787, %v1803
        %v1844 = vcombine.high %v1787, %v1803
        %v1846 = vunpack.c.l.s4 1934713408
        %v1847 = vunpack.c.0.s8 %v1846
        %v1848 = vlaneseq
        %v1849 = vshrl.u32 %v1848, 7
        %v1850 = vsub.s32 %v1847, %v1849
        %v1851 = vrot.slane %v1843, %v1850
        %v1853 = vunpack.c.l.s4 1934713408
        %v1854 = vunpack.c.0.s8 %v1853
        %v1855 = vlaneseq
        %v1856 = vshrl.u32 %v1855, 7
        %v1857 = vsub.s32 %v1854, %v1856
        %v1858 = vrot.slane %v1844, %v1857
        %v1859 = vcombine.low %v1794, %v1810
        %v1860 = vcombine.high %v1794, %v1810
        %v1862 = vunpack.c.l.s4 1934713408
        %v1863 = vunpack.c.0.s8 %v1862
        %v1864 = vlaneseq
        %v1865 = vshrl.u32 %v1864, 7
        %v1866 = vsub.s32 %v1863, %v1865
        %v1867 = vrot.slane %v1859, %v1866
        %v1869 = vunpack.c.l.s4 1934713408
        %v1870 = vunpack.c.0.s8 %v1869
        %v1871 = vlaneseq
        %v1872 = vshrl.u32 %v1871, 7
        %v1873 = vsub.s32 %v1870, %v1872
        %v1874 = vrot.slane %v1860, %v1873
        %v1875 = vcombine.low %v1819, %v1851
        %v1876 = vcombine.high %v1819, %v1851
        %v1877 = vcombine.low %v1826, %v1858
        %v1878 = vcombine.high %v1826, %v1858
        %v1879 = vcombine.low %v1835, %v1867
        %v1880 = vcombine.high %v1835, %v1867
        %v1881 = vcombine.low %v1842, %v1874
        %v1882 = vcombine.high %v1842, %v1874
        %v1883 = vcombine.low %v1238, %v1572
        %v1884 = vcombine.high %v1238, %v1572
        %v1886 = vunpack.c.l.s4 1983009808
        %v1887 = vunpack.c.0.s8 %v1886
        %v1888 = vlaneseq
        %v1889 = vshrl.u32 %v1888, 7
        %v1890 = vsub.s32 %v1887, %v1889
        %v1891 = vrot.slane %v1883, %v1890
        %v1893 = vunpack.c.l.s4 1983009808
        %v1894 = vunpack.c.0.s8 %v1893
        %v1895 = vlaneseq
        %v1896 = vshrl.u32 %v1895, 7
        %v1897 = vsub.s32 %v1894, %v1896
        %v1898 = vrot.slane %v1884, %v1897
        %v1899 = vcombine.low %v1569, %v1575
        %v1900 = vcombine.high %v1569, %v1575
        %v1902 = vunpack.c.l.s4 1983009808
        %v1903 = vunpack.c.0.s8 %v1902
        %v1904 = vlaneseq
        %v1905 = vshrl.u32 %v1904, 7
        %v1906 = vsub.s32 %v1903, %v1905
        %v1907 = vrot.slane %v1899, %v1906
        %v1909 = vunpack.c.l.s4 1983009808
        %v1910 = vunpack.c.0.s8 %v1909
        %v1911 = vlaneseq
        %v1912 = vshrl.u32 %v1911, 7
        %v1913 = vsub.s32 %v1910, %v1912
        %v1914 = vrot.slane %v1900, %v1913
        %v1915 = vcombine.low %v1578, %v1584
        %v1916 = vcombine.high %v1578, %v1584
        %v1918 = vunpack.c.l.s4 1983009808
        %v1919 = vunpack.c.0.s8 %v1918
        %v1920 = vlaneseq
        %v1921 = vshrl.u32 %v1920, 7
        %v1922 = vsub.s32 %v1919, %v1921
        %v1923 = vrot.slane %v1915, %v1922
        %v1925 = vunpack.c.l.s4 1983009808
        %v1926 = vunpack.c.0.s8 %v1925
        %v1927 = vlaneseq
        %v1928 = vshrl.u32 %v1927, 7
        %v1929 = vsub.s32 %v1926, %v1928
        %v1930 = vrot.slane %v1916, %v1929
        %v1931 = vcombine.low %v1581, %v1587
        %v1932 = vcombine.high %v1581, %v1587
        %v1934 = vunpack.c.l.s4 1983009808
        %v1935 = vunpack.c.0.s8 %v1934
        %v1936 = vlaneseq
        %v1937 = vshrl.u32 %v1936, 7
        %v1938 = vsub.s32 %v1935, %v1937
        %v1939 = vrot.slane %v1931, %v1938
        %v1941 = vunpack.c.l.s4 1983009808
        %v1942 = vunpack.c.0.s8 %v1941
        %v1943 = vlaneseq
        %v1944 = vshrl.u32 %v1943, 7
        %v1945 = vsub.s32 %v1942, %v1944
        %v1946 = vrot.slane %v1932, %v1945
        %v1947 = vcombine.low %v1891, %v1907
        %v1948 = vcombine.high %v1891, %v1907
        %v1950 = vunpack.c.l.s4 1934713408
        %v1951 = vunpack.c.0.s8 %v1950
        %v1952 = vlaneseq
        %v1953 = vshrl.u32 %v1952, 7
        %v1954 = vsub.s32 %v1951, %v1953
        %v1955 = vrot.slane %v1947, %v1954
        %v1957 = vunpack.c.l.s4 1934713408
        %v1958 = vunpack.c.0.s8 %v1957
        %v1959 = vlaneseq
        %v1960 = vshrl.u32 %v1959, 7
        %v1961 = vsub.s32 %v1958, %v1960
        %v1962 = vrot.slane %v1948, %v1961
        %v1963 = vcombine.low %v1898, %v1914
        %v1964 = vcombine.high %v1898, %v1914
        %v1966 = vunpack.c.l.s4 1934713408
        %v1967 = vunpack.c.0.s8 %v1966
        %v1968 = vlaneseq
        %v1969 = vshrl.u32 %v1968, 7
        %v1970 = vsub.s32 %v1967, %v1969
        %v1971 = vrot.slane %v1963, %v1970
        %v1973 = vunpack.c.l.s4 1934713408
        %v1974 = vunpack.c.0.s8 %v1973
        %v1975 = vlaneseq
        %v1976 = vshrl.u32 %v1975, 7
        %v1977 = vsub.s32 %v1974, %v1976
        %v1978 = vrot.slane %v1964, %v1977
        %v1979 = vcombine.low %v1923, %v1939
        %v1980 = vcombine.high %v1923, %v1939
        %v1982 = vunpack.c.l.s4 1934713408
        %v1983 = vunpack.c.0.s8 %v1982
        %v1984 = vlaneseq
        %v1985 = vshrl.u32 %v1984, 7
        %v1986 = vsub.s32 %v1983, %v1985
        %v1987 = vrot.slane %v1979, %v1986
        %v1989 = vunpack.c.l.s4 1934713408
        %v1990 = vunpack.c.0.s8 %v1989
        %v1991 = vlaneseq
        %v1992 = vshrl.u32 %v1991, 7
        %v1993 = vsub.s32 %v1990, %v1992
        %v1994 = vrot.slane %v1980, %v1993
        %v1995 = vcombine.low %v1930, %v1946
        %v1996 = vcombine.high %v1930, %v1946
        %v1998 = vunpack.c.l.s4 1934713408
        %v1999 = vunpack.c.0.s8 %v1998
        %v2000 = vlaneseq
        %v2001 = vshrl.u32 %v2000, 7
        %v2002 = vsub.s32 %v1999, %v2001
        %v2003 = vrot.slane %v1995, %v2002
        %v2005 = vunpack.c.l.s4 1934713408
        %v2006 = vunpack.c.0.s8 %v2005
        %v2007 = vlaneseq
        %v2008 = vshrl.u32 %v2007, 7
        %v2009 = vsub.s32 %v2006, %v2008
        %v2010 = vrot.slane %v1996, %v2009
        %v2011 = vcombine.low %v1955, %v1987
        %v2012 = vcombine.high %v1955, %v1987
        %v2013 = vcombine.low %v1962, %v1994
        %v2014 = vcombine.high %v1962, %v1994
        %v2015 = vcombine.low %v1971, %v2003
        %v2016 = vcombine.high %v1971, %v2003
        %v2017 = vcombine.low %v1978, %v2010
        %v2018 = vcombine.high %v1978, %v2010
        %v2019 = vcombine.low %v1240, %v1594
        %v2020 = vcombine.high %v1240, %v1594
        %v2022 = vunpack.c.l.s4 1983009808
        %v2023 = vunpack.c.0.s8 %v2022
        %v2024 = vlaneseq
        %v2025 = vshrl.u32 %v2024, 7
        %v2026 = vsub.s32 %v2023, %v2025
        %v2027 = vrot.slane %v2019, %v2026
        %v2029 = vunpack.c.l.s4 1983009808
        %v2030 = vunpack.c.0.s8 %v2029
        %v2031 = vlaneseq
        %v2032 = vshrl.u32 %v2031, 7
        %v2033 = vsub.s32 %v2030, %v2032
        %v2034 = vrot.slane %v2020, %v2033
        %v2035 = vcombine.low %v1591, %v1597
        %v2036 = vcombine.high %v1591, %v1597
        %v2038 = vunpack.c.l.s4 1983009808
        %v2039 = vunpack.c.0.s8 %v2038
        %v2040 = vlaneseq
        %v2041 = vshrl.u32 %v2040, 7
        %v2042 = vsub.s32 %v2039, %v2041
        %v2043 = vrot.slane %v2035, %v2042
        %v2045 = vunpack.c.l.s4 1983009808
        %v2046 = vunpack.c.0.s8 %v2045
        %v2047 = vlaneseq
        %v2048 = vshrl.u32 %v2047, 7
        %v2049 = vsub.s32 %v2046, %v2048
        %v2050 = vrot.slane %v2036, %v2049
        %v2051 = vcombine.low %v1600, %v1606
        %v2052 = vcombine.high %v1600, %v1606
        %v2054 = vunpack.c.l.s4 1983009808
        %v2055 = vunpack.c.0.s8 %v2054
        %v2056 = vlaneseq
        %v2057 = vshrl.u32 %v2056, 7
        %v2058 = vsub.s32 %v2055, %v2057
        %v2059 = vrot.slane %v2051, %v2058
        %v2061 = vunpack.c.l.s4 1983009808
        %v2062 = vunpack.c.0.s8 %v2061
        %v2063 = vlaneseq
        %v2064 = vshrl.u32 %v2063, 7
        %v2065 = vsub.s32 %v2062, %v2064
        %v2066 = vrot.slane %v2052, %v2065
        %v2067 = vcombine.low %v1603, %v1609
        %v2068 = vcombine.high %v1603, %v1609
        %v2070 = vunpack.c.l.s4 1983009808
        %v2071 = vunpack.c.0.s8 %v2070
        %v2072 = vlaneseq
        %v2073 = vshrl.u32 %v2072, 7
        %v2074 = vsub.s32 %v2071, %v2073
        %v2075 = vrot.slane %v2067, %v2074
        %v2077 = vunpack.c.l.s4 1983009808
        %v2078 = vunpack.c.0.s8 %v2077
        %v2079 = vlaneseq
        %v2080 = vshrl.u32 %v2079, 7
        %v2081 = vsub.s32 %v2078, %v2080
        %v2082 = vrot.slane %v2068, %v2081
        %v2083 = vcombine.low %v2027, %v2043
        %v2084 = vcombine.high %v2027, %v2043
        %v2086 = vunpack.c.l.s4 1934713408
        %v2087 = vunpack.c.0.s8 %v2086
        %v2088 = vlaneseq
        %v2089 = vshrl.u32 %v2088, 7
        %v2090 = vsub.s32 %v2087, %v2089
        %v2091 = vrot.slane %v2083, %v2090
        %v2093 = vunpack.c.l.s4 1934713408
        %v2094 = vunpack.c.0.s8 %v2093
        %v2095 = vlaneseq
        %v2096 = vshrl.u32 %v2095, 7
        %v2097 = vsub.s32 %v2094, %v2096
        %v2098 = vrot.slane %v2084, %v2097
        %v2099 = vcombine.low %v2034, %v2050
        %v2100 = vcombine.high %v2034, %v2050
        %v2102 = vunpack.c.l.s4 1934713408
        %v2103 = vunpack.c.0.s8 %v2102
        %v2104 = vlaneseq
        %v2105 = vshrl.u32 %v2104, 7
        %v2106 = vsub.s32 %v2103, %v2105
        %v2107 = vrot.slane %v2099, %v2106
        %v2109 = vunpack.c.l.s4 1934713408
        %v2110 = vunpack.c.0.s8 %v2109
        %v2111 = vlaneseq
        %v2112 = vshrl.u32 %v2111, 7
        %v2113 = vsub.s32 %v2110, %v2112
        %v2114 = vrot.slane %v2100, %v2113
        %v2115 = vcombine.low %v2059, %v2075
        %v2116 = vcombine.high %v2059, %v2075
        %v2118 = vunpack.c.l.s4 1934713408
        %v2119 = vunpack.c.0.s8 %v2118
        %v2120 = vlaneseq
        %v2121 = vshrl.u32 %v2120, 7
        %v2122 = vsub.s32 %v2119, %v2121
        %v2123 = vrot.slane %v2115, %v2122
        %v2125 = vunpack.c.l.s4 1934713408
        %v2126 = vunpack.c.0.s8 %v2125
        %v2127 = vlaneseq
        %v2128 = vshrl.u32 %v2127, 7
        %v2129 = vsub.s32 %v2126, %v2128
        %v2130 = vrot.slane %v2116, %v2129
        %v2131 = vcombine.low %v2066, %v2082
        %v2132 = vcombine.high %v2066, %v2082
        %v2134 = vunpack.c.l.s4 1934713408
        %v2135 = vunpack.c.0.s8 %v2134
        %v2136 = vlaneseq
        %v2137 = vshrl.u32 %v2136, 7
        %v2138 = vsub.s32 %v2135, %v2137
        %v2139 = vrot.slane %v2131, %v2138
        %v2141 = vunpack.c.l.s4 1934713408
        %v2142 = vunpack.c.0.s8 %v2141
        %v2143 = vlaneseq
        %v2144 = vshrl.u32 %v2143, 7
        %v2145 = vsub.s32 %v2142, %v2144
        %v2146 = vrot.slane %v2132, %v2145
        %v2147 = vcombine.low %v2091, %v2123
        %v2148 = vcombine.high %v2091, %v2123
        %v2149 = vcombine.low %v2098, %v2130
        %v2150 = vcombine.high %v2098, %v2130
        %v2151 = vcombine.low %v2107, %v2139
        %v2152 = vcombine.high %v2107, %v2139
        %v2153 = vcombine.low %v2114, %v2146
        %v2154 = vcombine.high %v2114, %v2146
        %v2155 = vlaneseq
        %v2156 = vshrl.u32 %v2155, 7
        %v2157 = vsub.s32 0, %v2156
        %v2158 = vrot.slane %v1520, %v2157
        %2160 = vbcast.lane.b32.xlu0 %v2158, 256
        %v2161 = vpop.permute.xlu0 %2160
        %s2163 = sor.u32 256, 8
        %2164 = vbcast.lane.b32.xlu0 %v2158, %s2163
        %v2165 = vpop.permute.xlu0 %2164
        %s2167 = sor.u32 256, 16
        %2168 = vbcast.lane.b32.xlu0 %v2158, %s2167
        %v2169 = vpop.permute.xlu0 %2168
        %s2171 = sor.u32 256, 24
        %2172 = vbcast.lane.b32.xlu0 %v2158, %s2171
        %v2173 = vpop.permute.xlu0 %2172
        %v2174 = vlaneseq
        %v2175 = vshrl.u32 %v2174, 7
        %v2176 = vsub.s32 1, %v2175
        %v2177 = vrot.slane %v1520, %v2176
        %2179 = vbcast.lane.b32.xlu0 %v2177, 256
        %v2180 = vpop.permute.xlu0 %2179
        %s2182 = sor.u32 256, 8
        %2183 = vbcast.lane.b32.xlu0 %v2177, %s2182
        %v2184 = vpop.permute.xlu0 %2183
        %s2186 = sor.u32 256, 16
        %2187 = vbcast.lane.b32.xlu0 %v2177, %s2186
        %v2188 = vpop.permute.xlu0 %2187
        %s2190 = sor.u32 256, 24
        %2191 = vbcast.lane.b32.xlu0 %v2177, %s2190
        %v2192 = vpop.permute.xlu0 %2191
        %v2193 = vlaneseq
        %v2194 = vshrl.u32 %v2193, 7
        %v2195 = vsub.s32 2, %v2194
        %v2196 = vrot.slane %v1520, %v2195
        %2198 = vbcast.lane.b32.xlu0 %v2196, 256
        %v2199 = vpop.permute.xlu0 %2198
        %s2201 = sor.u32 256, 8
        %2202 = vbcast.lane.b32.xlu0 %v2196, %s2201
        %v2203 = vpop.permute.xlu0 %2202
        %s2205 = sor.u32 256, 16
        %2206 = vbcast.lane.b32.xlu0 %v2196, %s2205
        %v2207 = vpop.permute.xlu0 %2206
        %s2209 = sor.u32 256, 24
        %2210 = vbcast.lane.b32.xlu0 %v2196, %s2209
        %v2211 = vpop.permute.xlu0 %2210
        %v2212 = vlaneseq
        %v2213 = vshrl.u32 %v2212, 7
        %v2214 = vsub.s32 3, %v2213
        %v2215 = vrot.slane %v1520, %v2214
        %2217 = vbcast.lane.b32.xlu0 %v2215, 256
        %v2218 = vpop.permute.xlu0 %2217
        %s2220 = sor.u32 256, 8
        %2221 = vbcast.lane.b32.xlu0 %v2215, %s2220
        %v2222 = vpop.permute.xlu0 %2221
        %s2224 = sor.u32 256, 16
        %2225 = vbcast.lane.b32.xlu0 %v2215, %s2224
        %v2226 = vpop.permute.xlu0 %2225
        %s2228 = sor.u32 256, 24
        %2229 = vbcast.lane.b32.xlu0 %v2215, %s2228
        %v2230 = vpop.permute.xlu0 %2229
        %v2231 = vlaneseq
        %v2232 = vshrl.u32 %v2231, 7
        %v2233 = vsub.s32 4, %v2232
        %v2234 = vrot.slane %v1520, %v2233
        %2236 = vbcast.lane.b32.xlu0 %v2234, 256
        %v2237 = vpop.permute.xlu0 %2236
        %s2239 = sor.u32 256, 8
        %2240 = vbcast.lane.b32.xlu0 %v2234, %s2239
        %v2241 = vpop.permute.xlu0 %2240
        %s2243 = sor.u32 256, 16
        %2244 = vbcast.lane.b32.xlu0 %v2234, %s2243
        %v2245 = vpop.permute.xlu0 %2244
        %s2247 = sor.u32 256, 24
        %2248 = vbcast.lane.b32.xlu0 %v2234, %s2247
        %v2249 = vpop.permute.xlu0 %2248
        %v2250 = vlaneseq
        %v2251 = vshrl.u32 %v2250, 7
        %v2252 = vsub.s32 5, %v2251
        %v2253 = vrot.slane %v1520, %v2252
        %2255 = vbcast.lane.b32.xlu0 %v2253, 256
        %v2256 = vpop.permute.xlu0 %2255
        %s2258 = sor.u32 256, 8
        %2259 = vbcast.lane.b32.xlu0 %v2253, %s2258
        %v2260 = vpop.permute.xlu0 %2259
        %s2262 = sor.u32 256, 16
        %2263 = vbcast.lane.b32.xlu0 %v2253, %s2262
        %v2264 = vpop.permute.xlu0 %2263
        %s2266 = sor.u32 256, 24
        %2267 = vbcast.lane.b32.xlu0 %v2253, %s2266
        %v2268 = vpop.permute.xlu0 %2267
        %v2269 = vlaneseq
        %v2270 = vshrl.u32 %v2269, 7
        %v2271 = vsub.s32 6, %v2270
        %v2272 = vrot.slane %v1520, %v2271
        %2274 = vbcast.lane.b32.xlu0 %v2272, 256
        %v2275 = vpop.permute.xlu0 %2274
        %s2277 = sor.u32 256, 8
        %2278 = vbcast.lane.b32.xlu0 %v2272, %s2277
        %v2279 = vpop.permute.xlu0 %2278
        %s2281 = sor.u32 256, 16
        %2282 = vbcast.lane.b32.xlu0 %v2272, %s2281
        %v2283 = vpop.permute.xlu0 %2282
        %s2285 = sor.u32 256, 24
        %2286 = vbcast.lane.b32.xlu0 %v2272, %s2285
        %v2287 = vpop.permute.xlu0 %2286
        %v2288 = vlaneseq
        %v2289 = vshrl.u32 %v2288, 7
        %v2290 = vsub.s32 7, %v2289
        %v2291 = vrot.slane %v1520, %v2290
        %2293 = vbcast.lane.b32.xlu0 %v2291, 256
        %v2294 = vpop.permute.xlu0 %2293
        %s2296 = sor.u32 256, 8
        %2297 = vbcast.lane.b32.xlu0 %v2291, %s2296
        %v2298 = vpop.permute.xlu0 %2297
        %s2300 = sor.u32 256, 16
        %2301 = vbcast.lane.b32.xlu0 %v2291, %s2300
        %v2302 = vpop.permute.xlu0 %2301
        %s2304 = sor.u32 256, 24
        %2305 = vbcast.lane.b32.xlu0 %v2291, %s2304
        %v2306 = vpop.permute.xlu0 %2305
        %v2307 = vadd.f32 %v1739, %v2161
        %v2308 = vadd.f32 %v1875, %v2165
        %v2309 = vadd.f32 %v2011, %v2169
        %v2310 = vadd.f32 %v2147, %v2173
        %v2311 = vadd.f32 %v1740, %v2180
        %v2312 = vadd.f32 %v1876, %v2184
        %v2313 = vadd.f32 %v2012, %v2188
        %v2314 = vadd.f32 %v2148, %v2192
        %v2315 = vadd.f32 %v1741, %v2199
        %v2316 = vadd.f32 %v1877, %v2203
        %v2317 = vadd.f32 %v2013, %v2207
        %v2318 = vadd.f32 %v2149, %v2211
        %v2319 = vadd.f32 %v1742, %v2218
        %v2320 = vadd.f32 %v1878, %v2222
        %v2321 = vadd.f32 %v2014, %v2226
        %v2322 = vadd.f32 %v2150, %v2230
        %v2323 = vadd.f32 %v1743, %v2237
        %v2324 = vadd.f32 %v1879, %v2241
        %v2325 = vadd.f32 %v2015, %v2245
        %v2326 = vadd.f32 %v2151, %v2249
        %v2327 = vadd.f32 %v1744, %v2256
        %v2328 = vadd.f32 %v1880, %v2260
        %v2329 = vadd.f32 %v2016, %v2264
        %v2330 = vadd.f32 %v2152, %v2268
        %v2331 = vadd.f32 %v1745, %v2275
        %v2332 = vadd.f32 %v1881, %v2279
        %v2333 = vadd.f32 %v2017, %v2283
        %v2334 = vadd.f32 %v2153, %v2287
        %v2335 = vadd.f32 %v1746, %v2294
        %v2336 = vadd.f32 %v1882, %v2298
        %v2337 = vadd.f32 %v2018, %v2302
        %v2338 = vadd.f32 %v2154, %v2306
        %v2339 = vcombine.low %v2307, %v2315
        %v2340 = vcombine.high %v2307, %v2315
        %v2342 = vunpack.c.l.s4 1983009808
        %v2343 = vunpack.c.0.s8 %v2342
        %v2344 = vlaneseq
        %v2345 = vshrl.u32 %v2344, 7
        %v2346 = vsub.s32 %v2343, %v2345
        %v2347 = vrot.slane %v2339, %v2346
        %v2349 = vunpack.c.l.s4 1983009808
        %v2350 = vunpack.c.0.s8 %v2349
        %v2351 = vlaneseq
        %v2352 = vshrl.u32 %v2351, 7
        %v2353 = vsub.s32 %v2350, %v2352
        %v2354 = vrot.slane %v2340, %v2353
        %v2355 = vcombine.low %v2311, %v2319
        %v2356 = vcombine.high %v2311, %v2319
        %v2358 = vunpack.c.l.s4 1983009808
        %v2359 = vunpack.c.0.s8 %v2358
        %v2360 = vlaneseq
        %v2361 = vshrl.u32 %v2360, 7
        %v2362 = vsub.s32 %v2359, %v2361
        %v2363 = vrot.slane %v2355, %v2362
        %v2365 = vunpack.c.l.s4 1983009808
        %v2366 = vunpack.c.0.s8 %v2365
        %v2367 = vlaneseq
        %v2368 = vshrl.u32 %v2367, 7
        %v2369 = vsub.s32 %v2366, %v2368
        %v2370 = vrot.slane %v2356, %v2369
        %v2371 = vcombine.low %v2323, %v2331
        %v2372 = vcombine.high %v2323, %v2331
        %v2374 = vunpack.c.l.s4 1983009808
        %v2375 = vunpack.c.0.s8 %v2374
        %v2376 = vlaneseq
        %v2377 = vshrl.u32 %v2376, 7
        %v2378 = vsub.s32 %v2375, %v2377
        %v2379 = vrot.slane %v2371, %v2378
        %v2381 = vunpack.c.l.s4 1983009808
        %v2382 = vunpack.c.0.s8 %v2381
        %v2383 = vlaneseq
        %v2384 = vshrl.u32 %v2383, 7
        %v2385 = vsub.s32 %v2382, %v2384
        %v2386 = vrot.slane %v2372, %v2385
        %v2387 = vcombine.low %v2327, %v2335
        %v2388 = vcombine.high %v2327, %v2335
        %v2390 = vunpack.c.l.s4 1983009808
        %v2391 = vunpack.c.0.s8 %v2390
        %v2392 = vlaneseq
        %v2393 = vshrl.u32 %v2392, 7
        %v2394 = vsub.s32 %v2391, %v2393
        %v2395 = vrot.slane %v2387, %v2394
        %v2397 = vunpack.c.l.s4 1983009808
        %v2398 = vunpack.c.0.s8 %v2397
        %v2399 = vlaneseq
        %v2400 = vshrl.u32 %v2399, 7
        %v2401 = vsub.s32 %v2398, %v2400
        %v2402 = vrot.slane %v2388, %v2401
        %v2403 = vcombine.low %v2347, %v2363
        %v2404 = vcombine.high %v2347, %v2363
        %v2406 = vunpack.c.l.s4 1934713408
        %v2407 = vunpack.c.0.s8 %v2406
        %v2408 = vlaneseq
        %v2409 = vshrl.u32 %v2408, 7
        %v2410 = vsub.s32 %v2407, %v2409
        %v2411 = vrot.slane %v2403, %v2410
        %v2413 = vunpack.c.l.s4 1934713408
        %v2414 = vunpack.c.0.s8 %v2413
        %v2415 = vlaneseq
        %v2416 = vshrl.u32 %v2415, 7
        %v2417 = vsub.s32 %v2414, %v2416
        %v2418 = vrot.slane %v2404, %v2417
        %v2419 = vcombine.low %v2354, %v2370
        %v2420 = vcombine.high %v2354, %v2370
        %v2422 = vunpack.c.l.s4 1934713408
        %v2423 = vunpack.c.0.s8 %v2422
        %v2424 = vlaneseq
        %v2425 = vshrl.u32 %v2424, 7
        %v2426 = vsub.s32 %v2423, %v2425
        %v2427 = vrot.slane %v2419, %v2426
        %v2429 = vunpack.c.l.s4 1934713408
        %v2430 = vunpack.c.0.s8 %v2429
        %v2431 = vlaneseq
        %v2432 = vshrl.u32 %v2431, 7
        %v2433 = vsub.s32 %v2430, %v2432
        %v2434 = vrot.slane %v2420, %v2433
        %v2435 = vcombine.low %v2379, %v2395
        %v2436 = vcombine.high %v2379, %v2395
        %v2438 = vunpack.c.l.s4 1934713408
        %v2439 = vunpack.c.0.s8 %v2438
        %v2440 = vlaneseq
        %v2441 = vshrl.u32 %v2440, 7
        %v2442 = vsub.s32 %v2439, %v2441
        %v2443 = vrot.slane %v2435, %v2442
        %v2445 = vunpack.c.l.s4 1934713408
        %v2446 = vunpack.c.0.s8 %v2445
        %v2447 = vlaneseq
        %v2448 = vshrl.u32 %v2447, 7
        %v2449 = vsub.s32 %v2446, %v2448
        %v2450 = vrot.slane %v2436, %v2449
        %v2451 = vcombine.low %v2386, %v2402
        %v2452 = vcombine.high %v2386, %v2402
        %v2454 = vunpack.c.l.s4 1934713408
        %v2455 = vunpack.c.0.s8 %v2454
        %v2456 = vlaneseq
        %v2457 = vshrl.u32 %v2456, 7
        %v2458 = vsub.s32 %v2455, %v2457
        %v2459 = vrot.slane %v2451, %v2458
        %v2461 = vunpack.c.l.s4 1934713408
        %v2462 = vunpack.c.0.s8 %v2461
        %v2463 = vlaneseq
        %v2464 = vshrl.u32 %v2463, 7
        %v2465 = vsub.s32 %v2462, %v2464
        %v2466 = vrot.slane %v2452, %v2465
        %v2467 = vcombine.low %v2411, %v2443
        %v2468 = vcombine.high %v2411, %v2443
        %v2469 = vcombine.low %v2418, %v2450
        %v2470 = vcombine.high %v2418, %v2450
        %v2471 = vcombine.low %v2427, %v2459
        %v2472 = vcombine.high %v2427, %v2459
        %v2473 = vcombine.low %v2434, %v2466
        %v2474 = vcombine.high %v2434, %v2466
        %v2475 = vcombine.low %v2308, %v2316
        %v2476 = vcombine.high %v2308, %v2316
        %v2478 = vunpack.c.l.s4 1983009808
        %v2479 = vunpack.c.0.s8 %v2478
        %v2480 = vlaneseq
        %v2481 = vshrl.u32 %v2480, 7
        %v2482 = vsub.s32 %v2479, %v2481
        %v2483 = vrot.slane %v2475, %v2482
        %v2485 = vunpack.c.l.s4 1983009808
        %v2486 = vunpack.c.0.s8 %v2485
        %v2487 = vlaneseq
        %v2488 = vshrl.u32 %v2487, 7
        %v2489 = vsub.s32 %v2486, %v2488
        %v2490 = vrot.slane %v2476, %v2489
        %v2491 = vcombine.low %v2312, %v2320
        %v2492 = vcombine.high %v2312, %v2320
        %v2494 = vunpack.c.l.s4 1983009808
        %v2495 = vunpack.c.0.s8 %v2494
        %v2496 = vlaneseq
        %v2497 = vshrl.u32 %v2496, 7
        %v2498 = vsub.s32 %v2495, %v2497
        %v2499 = vrot.slane %v2491, %v2498
        %v2501 = vunpack.c.l.s4 1983009808
        %v2502 = vunpack.c.0.s8 %v2501
        %v2503 = vlaneseq
        %v2504 = vshrl.u32 %v2503, 7
        %v2505 = vsub.s32 %v2502, %v2504
        %v2506 = vrot.slane %v2492, %v2505
        %v2507 = vcombine.low %v2324, %v2332
        %v2508 = vcombine.high %v2324, %v2332
        %v2510 = vunpack.c.l.s4 1983009808
        %v2511 = vunpack.c.0.s8 %v2510
        %v2512 = vlaneseq
        %v2513 = vshrl.u32 %v2512, 7
        %v2514 = vsub.s32 %v2511, %v2513
        %v2515 = vrot.slane %v2507, %v2514
        %v2517 = vunpack.c.l.s4 1983009808
        %v2518 = vunpack.c.0.s8 %v2517
        %v2519 = vlaneseq
        %v2520 = vshrl.u32 %v2519, 7
        %v2521 = vsub.s32 %v2518, %v2520
        %v2522 = vrot.slane %v2508, %v2521
        %v2523 = vcombine.low %v2328, %v2336
        %v2524 = vcombine.high %v2328, %v2336
        %v2526 = vunpack.c.l.s4 1983009808
        %v2527 = vunpack.c.0.s8 %v2526
        %v2528 = vlaneseq
        %v2529 = vshrl.u32 %v2528, 7
        %v2530 = vsub.s32 %v2527, %v2529
        %v2531 = vrot.slane %v2523, %v2530
        %v2533 = vunpack.c.l.s4 1983009808
        %v2534 = vunpack.c.0.s8 %v2533
        %v2535 = vlaneseq
        %v2536 = vshrl.u32 %v2535, 7
        %v2537 = vsub.s32 %v2534, %v2536
        %v2538 = vrot.slane %v2524, %v2537
        %v2539 = vcombine.low %v2483, %v2499
        %v2540 = vcombine.high %v2483, %v2499
        %v2542 = vunpack.c.l.s4 1934713408
        %v2543 = vunpack.c.0.s8 %v2542
        %v2544 = vlaneseq
        %v2545 = vshrl.u32 %v2544, 7
        %v2546 = vsub.s32 %v2543, %v2545
        %v2547 = vrot.slane %v2539, %v2546
        %v2549 = vunpack.c.l.s4 1934713408
        %v2550 = vunpack.c.0.s8 %v2549
        %v2551 = vlaneseq
        %v2552 = vshrl.u32 %v2551, 7
        %v2553 = vsub.s32 %v2550, %v2552
        %v2554 = vrot.slane %v2540, %v2553
        %v2555 = vcombine.low %v2490, %v2506
        %v2556 = vcombine.high %v2490, %v2506
        %v2558 = vunpack.c.l.s4 1934713408
        %v2559 = vunpack.c.0.s8 %v2558
        %v2560 = vlaneseq
        %v2561 = vshrl.u32 %v2560, 7
        %v2562 = vsub.s32 %v2559, %v2561
        %v2563 = vrot.slane %v2555, %v2562
        %v2565 = vunpack.c.l.s4 1934713408
        %v2566 = vunpack.c.0.s8 %v2565
        %v2567 = vlaneseq
        %v2568 = vshrl.u32 %v2567, 7
        %v2569 = vsub.s32 %v2566, %v2568
        %v2570 = vrot.slane %v2556, %v2569
        %v2571 = vcombine.low %v2515, %v2531
        %v2572 = vcombine.high %v2515, %v2531
        %v2574 = vunpack.c.l.s4 1934713408
        %v2575 = vunpack.c.0.s8 %v2574
        %v2576 = vlaneseq
        %v2577 = vshrl.u32 %v2576, 7
        %v2578 = vsub.s32 %v2575, %v2577
        %v2579 = vrot.slane %v2571, %v2578
        %v2581 = vunpack.c.l.s4 1934713408
        %v2582 = vunpack.c.0.s8 %v2581
        %v2583 = vlaneseq
        %v2584 = vshrl.u32 %v2583, 7
        %v2585 = vsub.s32 %v2582, %v2584
        %v2586 = vrot.slane %v2572, %v2585
        %v2587 = vcombine.low %v2522, %v2538
        %v2588 = vcombine.high %v2522, %v2538
        %v2590 = vunpack.c.l.s4 1934713408
        %v2591 = vunpack.c.0.s8 %v2590
        %v2592 = vlaneseq
        %v2593 = vshrl.u32 %v2592, 7
        %v2594 = vsub.s32 %v2591, %v2593
        %v2595 = vrot.slane %v2587, %v2594
        %v2597 = vunpack.c.l.s4 1934713408
        %v2598 = vunpack.c.0.s8 %v2597
        %v2599 = vlaneseq
        %v2600 = vshrl.u32 %v2599, 7
        %v2601 = vsub.s32 %v2598, %v2600
        %v2602 = vrot.slane %v2588, %v2601
        %v2603 = vcombine.low %v2547, %v2579
        %v2604 = vcombine.high %v2547, %v2579
        %v2605 = vcombine.low %v2554, %v2586
        %v2606 = vcombine.high %v2554, %v2586
        %v2607 = vcombine.low %v2563, %v2595
        %v2608 = vcombine.high %v2563, %v2595
        %v2609 = vcombine.low %v2570, %v2602
        %v2610 = vcombine.high %v2570, %v2602
        %v2611 = vcombine.low %v2309, %v2317
        %v2612 = vcombine.high %v2309, %v2317
        %v2614 = vunpack.c.l.s4 1983009808
        %v2615 = vunpack.c.0.s8 %v2614
        %v2616 = vlaneseq
        %v2617 = vshrl.u32 %v2616, 7
        %v2618 = vsub.s32 %v2615, %v2617
        %v2619 = vrot.slane %v2611, %v2618
        %v2621 = vunpack.c.l.s4 1983009808
        %v2622 = vunpack.c.0.s8 %v2621
        %v2623 = vlaneseq
        %v2624 = vshrl.u32 %v2623, 7
        %v2625 = vsub.s32 %v2622, %v2624
        %v2626 = vrot.slane %v2612, %v2625
        %v2627 = vcombine.low %v2313, %v2321
        %v2628 = vcombine.high %v2313, %v2321
        %v2630 = vunpack.c.l.s4 1983009808
        %v2631 = vunpack.c.0.s8 %v2630
        %v2632 = vlaneseq
        %v2633 = vshrl.u32 %v2632, 7
        %v2634 = vsub.s32 %v2631, %v2633
        %v2635 = vrot.slane %v2627, %v2634
        %v2637 = vunpack.c.l.s4 1983009808
        %v2638 = vunpack.c.0.s8 %v2637
        %v2639 = vlaneseq
        %v2640 = vshrl.u32 %v2639, 7
        %v2641 = vsub.s32 %v2638, %v2640
        %v2642 = vrot.slane %v2628, %v2641
        %v2643 = vcombine.low %v2325, %v2333
        %v2644 = vcombine.high %v2325, %v2333
        %v2646 = vunpack.c.l.s4 1983009808
        %v2647 = vunpack.c.0.s8 %v2646
        %v2648 = vlaneseq
        %v2649 = vshrl.u32 %v2648, 7
        %v2650 = vsub.s32 %v2647, %v2649
        %v2651 = vrot.slane %v2643, %v2650
        %v2653 = vunpack.c.l.s4 1983009808
        %v2654 = vunpack.c.0.s8 %v2653
        %v2655 = vlaneseq
        %v2656 = vshrl.u32 %v2655, 7
        %v2657 = vsub.s32 %v2654, %v2656
        %v2658 = vrot.slane %v2644, %v2657
        %v2659 = vcombine.low %v2329, %v2337
        %v2660 = vcombine.high %v2329, %v2337
        %v2662 = vunpack.c.l.s4 1983009808
        %v2663 = vunpack.c.0.s8 %v2662
        %v2664 = vlaneseq
        %v2665 = vshrl.u32 %v2664, 7
        %v2666 = vsub.s32 %v2663, %v2665
        %v2667 = vrot.slane %v2659, %v2666
        %v2669 = vunpack.c.l.s4 1983009808
        %v2670 = vunpack.c.0.s8 %v2669
        %v2671 = vlaneseq
        %v2672 = vshrl.u32 %v2671, 7
        %v2673 = vsub.s32 %v2670, %v2672
        %v2674 = vrot.slane %v2660, %v2673
        %v2675 = vcombine.low %v2619, %v2635
        %v2676 = vcombine.high %v2619, %v2635
        %v2678 = vunpack.c.l.s4 1934713408
        %v2679 = vunpack.c.0.s8 %v2678
        %v2680 = vlaneseq
        %v2681 = vshrl.u32 %v2680, 7
        %v2682 = vsub.s32 %v2679, %v2681
        %v2683 = vrot.slane %v2675, %v2682
        %v2685 = vunpack.c.l.s4 1934713408
        %v2686 = vunpack.c.0.s8 %v2685
        %v2687 = vlaneseq
        %v2688 = vshrl.u32 %v2687, 7
        %v2689 = vsub.s32 %v2686, %v2688
        %v2690 = vrot.slane %v2676, %v2689
        %v2691 = vcombine.low %v2626, %v2642
        %v2692 = vcombine.high %v2626, %v2642
        %v2694 = vunpack.c.l.s4 1934713408
        %v2695 = vunpack.c.0.s8 %v2694
        %v2696 = vlaneseq
        %v2697 = vshrl.u32 %v2696, 7
        %v2698 = vsub.s32 %v2695, %v2697
        %v2699 = vrot.slane %v2691, %v2698
        %v2701 = vunpack.c.l.s4 1934713408
        %v2702 = vunpack.c.0.s8 %v2701
        %v2703 = vlaneseq
        %v2704 = vshrl.u32 %v2703, 7
        %v2705 = vsub.s32 %v2702, %v2704
        %v2706 = vrot.slane %v2692, %v2705
        %v2707 = vcombine.low %v2651, %v2667
        %v2708 = vcombine.high %v2651, %v2667
        %v2710 = vunpack.c.l.s4 1934713408
        %v2711 = vunpack.c.0.s8 %v2710
        %v2712 = vlaneseq
        %v2713 = vshrl.u32 %v2712, 7
        %v2714 = vsub.s32 %v2711, %v2713
        %v2715 = vrot.slane %v2707, %v2714
        %v2717 = vunpack.c.l.s4 1934713408
        %v2718 = vunpack.c.0.s8 %v2717
        %v2719 = vlaneseq
        %v2720 = vshrl.u32 %v2719, 7
        %v2721 = vsub.s32 %v2718, %v2720
        %v2722 = vrot.slane %v2708, %v2721
        %v2723 = vcombine.low %v2658, %v2674
        %v2724 = vcombine.high %v2658, %v2674
        %v2726 = vunpack.c.l.s4 1934713408
        %v2727 = vunpack.c.0.s8 %v2726
        %v2728 = vlaneseq
        %v2729 = vshrl.u32 %v2728, 7
        %v2730 = vsub.s32 %v2727, %v2729
        %v2731 = vrot.slane %v2723, %v2730
        %v2733 = vunpack.c.l.s4 1934713408
        %v2734 = vunpack.c.0.s8 %v2733
        %v2735 = vlaneseq
        %v2736 = vshrl.u32 %v2735, 7
        %v2737 = vsub.s32 %v2734, %v2736
        %v2738 = vrot.slane %v2724, %v2737
        %v2739 = vcombine.low %v2683, %v2715
        %v2740 = vcombine.high %v2683, %v2715
        %v2741 = vcombine.low %v2690, %v2722
        %v2742 = vcombine.high %v2690, %v2722
        %v2743 = vcombine.low %v2699, %v2731
        %v2744 = vcombine.high %v2699, %v2731
        %v2745 = vcombine.low %v2706, %v2738
        %v2746 = vcombine.high %v2706, %v2738
        %v2747 = vcombine.low %v2310, %v2318
        %v2748 = vcombine.high %v2310, %v2318
        %v2750 = vunpack.c.l.s4 1983009808
        %v2751 = vunpack.c.0.s8 %v2750
        %v2752 = vlaneseq
        %v2753 = vshrl.u32 %v2752, 7
        %v2754 = vsub.s32 %v2751, %v2753
        %v2755 = vrot.slane %v2747, %v2754
        %v2757 = vunpack.c.l.s4 1983009808
        %v2758 = vunpack.c.0.s8 %v2757
        %v2759 = vlaneseq
        %v2760 = vshrl.u32 %v2759, 7
        %v2761 = vsub.s32 %v2758, %v2760
        %v2762 = vrot.slane %v2748, %v2761
        %v2763 = vcombine.low %v2314, %v2322
        %v2764 = vcombine.high %v2314, %v2322
        %v2766 = vunpack.c.l.s4 1983009808
        %v2767 = vunpack.c.0.s8 %v2766
        %v2768 = vlaneseq
        %v2769 = vshrl.u32 %v2768, 7
        %v2770 = vsub.s32 %v2767, %v2769
        %v2771 = vrot.slane %v2763, %v2770
        %v2773 = vunpack.c.l.s4 1983009808
        %v2774 = vunpack.c.0.s8 %v2773
        %v2775 = vlaneseq
        %v2776 = vshrl.u32 %v2775, 7
        %v2777 = vsub.s32 %v2774, %v2776
        %v2778 = vrot.slane %v2764, %v2777
        %v2779 = vcombine.low %v2326, %v2334
        %v2780 = vcombine.high %v2326, %v2334
        %v2782 = vunpack.c.l.s4 1983009808
        %v2783 = vunpack.c.0.s8 %v2782
        %v2784 = vlaneseq
        %v2785 = vshrl.u32 %v2784, 7
        %v2786 = vsub.s32 %v2783, %v2785
        %v2787 = vrot.slane %v2779, %v2786
        %v2789 = vunpack.c.l.s4 1983009808
        %v2790 = vunpack.c.0.s8 %v2789
        %v2791 = vlaneseq
        %v2792 = vshrl.u32 %v2791, 7
        %v2793 = vsub.s32 %v2790, %v2792
        %v2794 = vrot.slane %v2780, %v2793
        %v2795 = vcombine.low %v2330, %v2338
        %v2796 = vcombine.high %v2330, %v2338
        %v2798 = vunpack.c.l.s4 1983009808
        %v2799 = vunpack.c.0.s8 %v2798
        %v2800 = vlaneseq
        %v2801 = vshrl.u32 %v2800, 7
        %v2802 = vsub.s32 %v2799, %v2801
        %v2803 = vrot.slane %v2795, %v2802
        %v2805 = vunpack.c.l.s4 1983009808
        %v2806 = vunpack.c.0.s8 %v2805
        %v2807 = vlaneseq
        %v2808 = vshrl.u32 %v2807, 7
        %v2809 = vsub.s32 %v2806, %v2808
        %v2810 = vrot.slane %v2796, %v2809
        %v2811 = vcombine.low %v2755, %v2771
        %v2812 = vcombine.high %v2755, %v2771
        %v2814 = vunpack.c.l.s4 1934713408
        %v2815 = vunpack.c.0.s8 %v2814
        %v2816 = vlaneseq
        %v2817 = vshrl.u32 %v2816, 7
        %v2818 = vsub.s32 %v2815, %v2817
        %v2819 = vrot.slane %v2811, %v2818
        %v2821 = vunpack.c.l.s4 1934713408
        %v2822 = vunpack.c.0.s8 %v2821
        %v2823 = vlaneseq
        %v2824 = vshrl.u32 %v2823, 7
        %v2825 = vsub.s32 %v2822, %v2824
        %v2826 = vrot.slane %v2812, %v2825
        %v2827 = vcombine.low %v2762, %v2778
        %v2828 = vcombine.high %v2762, %v2778
        %v2830 = vunpack.c.l.s4 1934713408
        %v2831 = vunpack.c.0.s8 %v2830
        %v2832 = vlaneseq
        %v2833 = vshrl.u32 %v2832, 7
        %v2834 = vsub.s32 %v2831, %v2833
        %v2835 = vrot.slane %v2827, %v2834
        %v2837 = vunpack.c.l.s4 1934713408
        %v2838 = vunpack.c.0.s8 %v2837
        %v2839 = vlaneseq
        %v2840 = vshrl.u32 %v2839, 7
        %v2841 = vsub.s32 %v2838, %v2840
        %v2842 = vrot.slane %v2828, %v2841
        %v2843 = vcombine.low %v2787, %v2803
        %v2844 = vcombine.high %v2787, %v2803
        %v2846 = vunpack.c.l.s4 1934713408
        %v2847 = vunpack.c.0.s8 %v2846
        %v2848 = vlaneseq
        %v2849 = vshrl.u32 %v2848, 7
        %v2850 = vsub.s32 %v2847, %v2849
        %v2851 = vrot.slane %v2843, %v2850
        %v2853 = vunpack.c.l.s4 1934713408
        %v2854 = vunpack.c.0.s8 %v2853
        %v2855 = vlaneseq
        %v2856 = vshrl.u32 %v2855, 7
        %v2857 = vsub.s32 %v2854, %v2856
        %v2858 = vrot.slane %v2844, %v2857
        %v2859 = vcombine.low %v2794, %v2810
        %v2860 = vcombine.high %v2794, %v2810
        %v2862 = vunpack.c.l.s4 1934713408
        %v2863 = vunpack.c.0.s8 %v2862
        %v2864 = vlaneseq
        %v2865 = vshrl.u32 %v2864, 7
        %v2866 = vsub.s32 %v2863, %v2865
        %v2867 = vrot.slane %v2859, %v2866
        %v2869 = vunpack.c.l.s4 1934713408
        %v2870 = vunpack.c.0.s8 %v2869
        %v2871 = vlaneseq
        %v2872 = vshrl.u32 %v2871, 7
        %v2873 = vsub.s32 %v2870, %v2872
        %v2874 = vrot.slane %v2860, %v2873
        %v2875 = vcombine.low %v2819, %v2851
        %v2876 = vcombine.high %v2819, %v2851
        %v2877 = vcombine.low %v2826, %v2858
        %v2878 = vcombine.high %v2826, %v2858
        %v2879 = vcombine.low %v2835, %v2867
        %v2880 = vcombine.high %v2835, %v2867
        %v2881 = vcombine.low %v2842, %v2874
        %v2882 = vcombine.high %v2842, %v2874
        %2884 = vrot.lane.b32.xlu0 %v2468, 16
        %v2885 = vpop.permute.xlu0 %2884
        %2888 = vrot.lane.b32.xlu0 %v2469, 32
        %v2889 = vpop.permute.xlu0 %2888
        %2892 = vrot.lane.b32.xlu0 %v2470, 48
        %v2893 = vpop.permute.xlu0 %2892
        %2896 = vrot.lane.b32.xlu0 %v2471, 64
        %v2897 = vpop.permute.xlu0 %2896
        %2900 = vrot.lane.b32.xlu0 %v2472, 80
        %v2901 = vpop.permute.xlu0 %2900
        %2904 = vrot.lane.b32.xlu0 %v2473, 96
        %v2905 = vpop.permute.xlu0 %2904
        %2908 = vrot.lane.b32.xlu0 %v2474, 112
        %v2909 = vpop.permute.xlu0 %2908
        %2912 = vrot.lane.b32.xlu0 %v2604, 16
        %v2913 = vpop.permute.xlu0 %2912
        %2916 = vrot.lane.b32.xlu0 %v2605, 32
        %v2917 = vpop.permute.xlu0 %2916
        %2920 = vrot.lane.b32.xlu0 %v2606, 48
        %v2921 = vpop.permute.xlu0 %2920
        %2924 = vrot.lane.b32.xlu0 %v2607, 64
        %v2925 = vpop.permute.xlu0 %2924
        %2928 = vrot.lane.b32.xlu0 %v2608, 80
        %v2929 = vpop.permute.xlu0 %2928
        %2932 = vrot.lane.b32.xlu0 %v2609, 96
        %v2933 = vpop.permute.xlu0 %2932
        %2936 = vrot.lane.b32.xlu0 %v2610, 112
        %v2937 = vpop.permute.xlu0 %2936
        %2940 = vrot.lane.b32.xlu0 %v2740, 16
        %v2941 = vpop.permute.xlu0 %2940
        %2944 = vrot.lane.b32.xlu0 %v2741, 32
        %v2945 = vpop.permute.xlu0 %2944
        %2948 = vrot.lane.b32.xlu0 %v2742, 48
        %v2949 = vpop.permute.xlu0 %2948
        %2952 = vrot.lane.b32.xlu0 %v2743, 64
        %v2953 = vpop.permute.xlu0 %2952
        %2956 = vrot.lane.b32.xlu0 %v2744, 80
        %v2957 = vpop.permute.xlu0 %2956
        %2960 = vrot.lane.b32.xlu0 %v2745, 96
        %v2961 = vpop.permute.xlu0 %2960
        %2964 = vrot.lane.b32.xlu0 %v2746, 112
        %v2965 = vpop.permute.xlu0 %2964
        %2968 = vrot.lane.b32.xlu0 %v2876, 16
        %v2969 = vpop.permute.xlu0 %2968
        %2972 = vrot.lane.b32.xlu0 %v2877, 32
        %v2973 = vpop.permute.xlu0 %2972
        %2976 = vrot.lane.b32.xlu0 %v2878, 48
        %v2977 = vpop.permute.xlu0 %2976
        %2980 = vrot.lane.b32.xlu0 %v2879, 64
        %v2981 = vpop.permute.xlu0 %2980
        %2984 = vrot.lane.b32.xlu0 %v2880, 80
        %v2985 = vpop.permute.xlu0 %2984
        %2988 = vrot.lane.b32.xlu0 %v2881, 96
        %v2989 = vpop.permute.xlu0 %2988
        %2992 = vrot.lane.b32.xlu0 %v2882, 112
        %v2993 = vpop.permute.xlu0 %2992
        %v2995 = vsel %vm994, %v2467, %v2885
        %vm2996 = vcmask 261120
        %v2997 = vsel %vm2996, %v2995, %v2889
        %vm2998 = vcmask 392192
        %v2999 = vsel %vm2998, %v2997, %v2893
        %vm3000 = vcmask 523264
        %v3001 = vsel %vm3000, %v2999, %v2897
        %vm3002 = vcmask 654336
        %v3003 = vsel %vm3002, %v3001, %v2901
        %vm3004 = vcmask 785408
        %v3005 = vsel %vm3004, %v3003, %v2905
        %vm3006 = vcmask 916480
        %v3007 = vsel %vm3006, %v3005, %v2909
        %v3008 = vsel %vm994, %v2603, %v2913
        %v3009 = vsel %vm2996, %v3008, %v2917
        %v3010 = vsel %vm2998, %v3009, %v2921
        %v3011 = vsel %vm3000, %v3010, %v2925
        %v3012 = vsel %vm3002, %v3011, %v2929
        %v3013 = vsel %vm3004, %v3012, %v2933
        %v3014 = vsel %vm3006, %v3013, %v2937
        %v3015 = vsel %vm994, %v2739, %v2941
        %v3016 = vsel %vm2996, %v3015, %v2945
        %v3017 = vsel %vm2998, %v3016, %v2949
        %v3018 = vsel %vm3000, %v3017, %v2953
        %v3019 = vsel %vm3002, %v3018, %v2957
        %v3020 = vsel %vm3004, %v3019, %v2961
        %v3021 = vsel %vm3006, %v3020, %v2965
        %v3022 = vsel %vm994, %v2875, %v2969
        %v3023 = vsel %vm2996, %v3022, %v2973
        %v3024 = vsel %vm2998, %v3023, %v2977
        %v3025 = vsel %vm3000, %v3024, %v2981
        %v3026 = vsel %vm3002, %v3025, %v2985
        %v3027 = vsel %vm3004, %v3026, %v2989
        %v3028 = vsel %vm3006, %v3027, %v2993
        %v3029 = vmax.f32 %v3007, 0.0
        %v3030 = vmax.f32 %v3014, 0.0
        %v3031 = vmax.f32 %v3021, 0.0
        %v3032 = vmax.f32 %v3028, 0.0
        %3034 = vrot.lane.b32.xlu0 %v3029, 112
        %v3035 = vpop.permute.xlu0 %3034
        %3037 = vrot.lane.b32.xlu0 %v3029, 96
        %v3038 = vpop.permute.xlu0 %3037
        %3040 = vrot.lane.b32.xlu0 %v3029, 80
        %v3041 = vpop.permute.xlu0 %3040
        %3043 = vrot.lane.b32.xlu0 %v3029, 64
        %v3044 = vpop.permute.xlu0 %3043
        %3046 = vrot.lane.b32.xlu0 %v3029, 48
        %v3047 = vpop.permute.xlu0 %3046
        %3049 = vrot.lane.b32.xlu0 %v3029, 32
        %v3050 = vpop.permute.xlu0 %3049
        %3052 = vrot.lane.b32.xlu0 %v3029, 16
        %v3053 = vpop.permute.xlu0 %3052
        %3056 = vrot.lane.b32.xlu0 %v3030, 112
        %v3057 = vpop.permute.xlu0 %3056
        %3059 = vrot.lane.b32.xlu0 %v3030, 96
        %v3060 = vpop.permute.xlu0 %3059
        %3062 = vrot.lane.b32.xlu0 %v3030, 80
        %v3063 = vpop.permute.xlu0 %3062
        %3065 = vrot.lane.b32.xlu0 %v3030, 64
        %v3066 = vpop.permute.xlu0 %3065
        %3068 = vrot.lane.b32.xlu0 %v3030, 48
        %v3069 = vpop.permute.xlu0 %3068
        %3071 = vrot.lane.b32.xlu0 %v3030, 32
        %v3072 = vpop.permute.xlu0 %3071
        %3074 = vrot.lane.b32.xlu0 %v3030, 16
        %v3075 = vpop.permute.xlu0 %3074
        %3078 = vrot.lane.b32.xlu0 %v3031, 112
        %v3079 = vpop.permute.xlu0 %3078
        %3081 = vrot.lane.b32.xlu0 %v3031, 96
        %v3082 = vpop.permute.xlu0 %3081
        %3084 = vrot.lane.b32.xlu0 %v3031, 80
        %v3085 = vpop.permute.xlu0 %3084
        %3087 = vrot.lane.b32.xlu0 %v3031, 64
        %v3088 = vpop.permute.xlu0 %3087
        %3090 = vrot.lane.b32.xlu0 %v3031, 48
        %v3091 = vpop.permute.xlu0 %3090
        %3093 = vrot.lane.b32.xlu0 %v3031, 32
        %v3094 = vpop.permute.xlu0 %3093
        %3096 = vrot.lane.b32.xlu0 %v3031, 16
        %v3097 = vpop.permute.xlu0 %3096
        %3100 = vrot.lane.b32.xlu0 %v3032, 112
        %v3101 = vpop.permute.xlu0 %3100
        %3103 = vrot.lane.b32.xlu0 %v3032, 96
        %v3104 = vpop.permute.xlu0 %3103
        %3106 = vrot.lane.b32.xlu0 %v3032, 80
        %v3107 = vpop.permute.xlu0 %3106
        %3109 = vrot.lane.b32.xlu0 %v3032, 64
        %v3110 = vpop.permute.xlu0 %3109
        %3112 = vrot.lane.b32.xlu0 %v3032, 48
        %v3113 = vpop.permute.xlu0 %3112
        %3115 = vrot.lane.b32.xlu0 %v3032, 32
        %v3116 = vpop.permute.xlu0 %3115
        %3118 = vrot.lane.b32.xlu0 %v3032, 16
        %v3119 = vpop.permute.xlu0 %3118
        %v3121 = vcombine.low %v3029, %v3038
        %v3122 = vcombine.high %v3029, %v3038
        %v3124 = vunpack.c.l.s4 1983009808
        %v3125 = vunpack.c.0.s8 %v3124
        %v3126 = vlaneseq
        %v3127 = vshrl.u32 %v3126, 7
        %v3128 = vsub.s32 %v3125, %v3127
        %v3129 = vrot.slane %v3121, %v3128
        %v3131 = vunpack.c.l.s4 1983009808
        %v3132 = vunpack.c.0.s8 %v3131
        %v3133 = vlaneseq
        %v3134 = vshrl.u32 %v3133, 7
        %v3135 = vsub.s32 %v3132, %v3134
        %v3136 = vrot.slane %v3122, %v3135
        %v3137 = vcombine.low %v3035, %v3041
        %v3138 = vcombine.high %v3035, %v3041
        %v3140 = vunpack.c.l.s4 1983009808
        %v3141 = vunpack.c.0.s8 %v3140
        %v3142 = vlaneseq
        %v3143 = vshrl.u32 %v3142, 7
        %v3144 = vsub.s32 %v3141, %v3143
        %v3145 = vrot.slane %v3137, %v3144
        %v3147 = vunpack.c.l.s4 1983009808
        %v3148 = vunpack.c.0.s8 %v3147
        %v3149 = vlaneseq
        %v3150 = vshrl.u32 %v3149, 7
        %v3151 = vsub.s32 %v3148, %v3150
        %v3152 = vrot.slane %v3138, %v3151
        %v3153 = vcombine.low %v3044, %v3050
        %v3154 = vcombine.high %v3044, %v3050
        %v3156 = vunpack.c.l.s4 1983009808
        %v3157 = vunpack.c.0.s8 %v3156
        %v3158 = vlaneseq
        %v3159 = vshrl.u32 %v3158, 7
        %v3160 = vsub.s32 %v3157, %v3159
        %v3161 = vrot.slane %v3153, %v3160
        %v3163 = vunpack.c.l.s4 1983009808
        %v3164 = vunpack.c.0.s8 %v3163
        %v3165 = vlaneseq
        %v3166 = vshrl.u32 %v3165, 7
        %v3167 = vsub.s32 %v3164, %v3166
        %v3168 = vrot.slane %v3154, %v3167
        %v3169 = vcombine.low %v3047, %v3053
        %v3170 = vcombine.high %v3047, %v3053
        %v3172 = vunpack.c.l.s4 1983009808
        %v3173 = vunpack.c.0.s8 %v3172
        %v3174 = vlaneseq
        %v3175 = vshrl.u32 %v3174, 7
        %v3176 = vsub.s32 %v3173, %v3175
        %v3177 = vrot.slane %v3169, %v3176
        %v3179 = vunpack.c.l.s4 1983009808
        %v3180 = vunpack.c.0.s8 %v3179
        %v3181 = vlaneseq
        %v3182 = vshrl.u32 %v3181, 7
        %v3183 = vsub.s32 %v3180, %v3182
        %v3184 = vrot.slane %v3170, %v3183
        %v3185 = vcombine.low %v3129, %v3145
        %v3186 = vcombine.high %v3129, %v3145
        %v3188 = vunpack.c.l.s4 1934713408
        %v3189 = vunpack.c.0.s8 %v3188
        %v3190 = vlaneseq
        %v3191 = vshrl.u32 %v3190, 7
        %v3192 = vsub.s32 %v3189, %v3191
        %v3193 = vrot.slane %v3185, %v3192
        %v3195 = vunpack.c.l.s4 1934713408
        %v3196 = vunpack.c.0.s8 %v3195
        %v3197 = vlaneseq
        %v3198 = vshrl.u32 %v3197, 7
        %v3199 = vsub.s32 %v3196, %v3198
        %v3200 = vrot.slane %v3186, %v3199
        %v3201 = vcombine.low %v3136, %v3152
        %v3202 = vcombine.high %v3136, %v3152
        %v3204 = vunpack.c.l.s4 1934713408
        %v3205 = vunpack.c.0.s8 %v3204
        %v3206 = vlaneseq
        %v3207 = vshrl.u32 %v3206, 7
        %v3208 = vsub.s32 %v3205, %v3207
        %v3209 = vrot.slane %v3201, %v3208
        %v3211 = vunpack.c.l.s4 1934713408
        %v3212 = vunpack.c.0.s8 %v3211
        %v3213 = vlaneseq
        %v3214 = vshrl.u32 %v3213, 7
        %v3215 = vsub.s32 %v3212, %v3214
        %v3216 = vrot.slane %v3202, %v3215
        %v3217 = vcombine.low %v3161, %v3177
        %v3218 = vcombine.high %v3161, %v3177
        %v3220 = vunpack.c.l.s4 1934713408
        %v3221 = vunpack.c.0.s8 %v3220
        %v3222 = vlaneseq
        %v3223 = vshrl.u32 %v3222, 7
        %v3224 = vsub.s32 %v3221, %v3223
        %v3225 = vrot.slane %v3217, %v3224
        %v3227 = vunpack.c.l.s4 1934713408
        %v3228 = vunpack.c.0.s8 %v3227
        %v3229 = vlaneseq
        %v3230 = vshrl.u32 %v3229, 7
        %v3231 = vsub.s32 %v3228, %v3230
        %v3232 = vrot.slane %v3218, %v3231
        %v3233 = vcombine.low %v3168, %v3184
        %v3234 = vcombine.high %v3168, %v3184
        %v3236 = vunpack.c.l.s4 1934713408
        %v3237 = vunpack.c.0.s8 %v3236
        %v3238 = vlaneseq
        %v3239 = vshrl.u32 %v3238, 7
        %v3240 = vsub.s32 %v3237, %v3239
        %v3241 = vrot.slane %v3233, %v3240
        %v3243 = vunpack.c.l.s4 1934713408
        %v3244 = vunpack.c.0.s8 %v3243
        %v3245 = vlaneseq
        %v3246 = vshrl.u32 %v3245, 7
        %v3247 = vsub.s32 %v3244, %v3246
        %v3248 = vrot.slane %v3234, %v3247
        %v3249 = vcombine.low %v3193, %v3225
        %v3250 = vcombine.high %v3193, %v3225
        %v3251 = vcombine.low %v3200, %v3232
        %v3252 = vcombine.high %v3200, %v3232
        %v3253 = vcombine.low %v3209, %v3241
        %v3254 = vcombine.high %v3209, %v3241
        %v3255 = vcombine.low %v3216, %v3248
        %v3256 = vcombine.high %v3216, %v3248
        %v3257 = vcombine.low %v3030, %v3060
        %v3258 = vcombine.high %v3030, %v3060
        %v3260 = vunpack.c.l.s4 1983009808
        %v3261 = vunpack.c.0.s8 %v3260
        %v3262 = vlaneseq
        %v3263 = vshrl.u32 %v3262, 7
        %v3264 = vsub.s32 %v3261, %v3263
        %v3265 = vrot.slane %v3257, %v3264
        %v3267 = vunpack.c.l.s4 1983009808
        %v3268 = vunpack.c.0.s8 %v3267
        %v3269 = vlaneseq
        %v3270 = vshrl.u32 %v3269, 7
        %v3271 = vsub.s32 %v3268, %v3270
        %v3272 = vrot.slane %v3258, %v3271
        %v3273 = vcombine.low %v3057, %v3063
        %v3274 = vcombine.high %v3057, %v3063
        %v3276 = vunpack.c.l.s4 1983009808
        %v3277 = vunpack.c.0.s8 %v3276
        %v3278 = vlaneseq
        %v3279 = vshrl.u32 %v3278, 7
        %v3280 = vsub.s32 %v3277, %v3279
        %v3281 = vrot.slane %v3273, %v3280
        %v3283 = vunpack.c.l.s4 1983009808
        %v3284 = vunpack.c.0.s8 %v3283
        %v3285 = vlaneseq
        %v3286 = vshrl.u32 %v3285, 7
        %v3287 = vsub.s32 %v3284, %v3286
        %v3288 = vrot.slane %v3274, %v3287
        %v3289 = vcombine.low %v3066, %v3072
        %v3290 = vcombine.high %v3066, %v3072
        %v3292 = vunpack.c.l.s4 1983009808
        %v3293 = vunpack.c.0.s8 %v3292
        %v3294 = vlaneseq
        %v3295 = vshrl.u32 %v3294, 7
        %v3296 = vsub.s32 %v3293, %v3295
        %v3297 = vrot.slane %v3289, %v3296
        %v3299 = vunpack.c.l.s4 1983009808
        %v3300 = vunpack.c.0.s8 %v3299
        %v3301 = vlaneseq
        %v3302 = vshrl.u32 %v3301, 7
        %v3303 = vsub.s32 %v3300, %v3302
        %v3304 = vrot.slane %v3290, %v3303
        %v3305 = vcombine.low %v3069, %v3075
        %v3306 = vcombine.high %v3069, %v3075
        %v3308 = vunpack.c.l.s4 1983009808
        %v3309 = vunpack.c.0.s8 %v3308
        %v3310 = vlaneseq
        %v3311 = vshrl.u32 %v3310, 7
        %v3312 = vsub.s32 %v3309, %v3311
        %v3313 = vrot.slane %v3305, %v3312
        %v3315 = vunpack.c.l.s4 1983009808
        %v3316 = vunpack.c.0.s8 %v3315
        %v3317 = vlaneseq
        %v3318 = vshrl.u32 %v3317, 7
        %v3319 = vsub.s32 %v3316, %v3318
        %v3320 = vrot.slane %v3306, %v3319
        %v3321 = vcombine.low %v3265, %v3281
        %v3322 = vcombine.high %v3265, %v3281
        %v3324 = vunpack.c.l.s4 1934713408
        %v3325 = vunpack.c.0.s8 %v3324
        %v3326 = vlaneseq
        %v3327 = vshrl.u32 %v3326, 7
        %v3328 = vsub.s32 %v3325, %v3327
        %v3329 = vrot.slane %v3321, %v3328
        %v3331 = vunpack.c.l.s4 1934713408
        %v3332 = vunpack.c.0.s8 %v3331
        %v3333 = vlaneseq
        %v3334 = vshrl.u32 %v3333, 7
        %v3335 = vsub.s32 %v3332, %v3334
        %v3336 = vrot.slane %v3322, %v3335
        %v3337 = vcombine.low %v3272, %v3288
        %v3338 = vcombine.high %v3272, %v3288
        %v3340 = vunpack.c.l.s4 1934713408
        %v3341 = vunpack.c.0.s8 %v3340
        %v3342 = vlaneseq
        %v3343 = vshrl.u32 %v3342, 7
        %v3344 = vsub.s32 %v3341, %v3343
        %v3345 = vrot.slane %v3337, %v3344
        %v3347 = vunpack.c.l.s4 1934713408
        %v3348 = vunpack.c.0.s8 %v3347
        %v3349 = vlaneseq
        %v3350 = vshrl.u32 %v3349, 7
        %v3351 = vsub.s32 %v3348, %v3350
        %v3352 = vrot.slane %v3338, %v3351
        %v3353 = vcombine.low %v3297, %v3313
        %v3354 = vcombine.high %v3297, %v3313
        %v3356 = vunpack.c.l.s4 1934713408
        %v3357 = vunpack.c.0.s8 %v3356
        %v3358 = vlaneseq
        %v3359 = vshrl.u32 %v3358, 7
        %v3360 = vsub.s32 %v3357, %v3359
        %v3361 = vrot.slane %v3353, %v3360
        %v3363 = vunpack.c.l.s4 1934713408
        %v3364 = vunpack.c.0.s8 %v3363
        %v3365 = vlaneseq
        %v3366 = vshrl.u32 %v3365, 7
        %v3367 = vsub.s32 %v3364, %v3366
        %v3368 = vrot.slane %v3354, %v3367
        %v3369 = vcombine.low %v3304, %v3320
        %v3370 = vcombine.high %v3304, %v3320
        %v3372 = vunpack.c.l.s4 1934713408
        %v3373 = vunpack.c.0.s8 %v3372
        %v3374 = vlaneseq
        %v3375 = vshrl.u32 %v3374, 7
        %v3376 = vsub.s32 %v3373, %v3375
        %v3377 = vrot.slane %v3369, %v3376
        %v3379 = vunpack.c.l.s4 1934713408
        %v3380 = vunpack.c.0.s8 %v3379
        %v3381 = vlaneseq
        %v3382 = vshrl.u32 %v3381, 7
        %v3383 = vsub.s32 %v3380, %v3382
        %v3384 = vrot.slane %v3370, %v3383
        %v3385 = vcombine.low %v3329, %v3361
        %v3386 = vcombine.high %v3329, %v3361
        %v3387 = vcombine.low %v3336, %v3368
        %v3388 = vcombine.high %v3336, %v3368
        %v3389 = vcombine.low %v3345, %v3377
        %v3390 = vcombine.high %v3345, %v3377
        %v3391 = vcombine.low %v3352, %v3384
        %v3392 = vcombine.high %v3352, %v3384
        %v3393 = vcombine.low %v3031, %v3082
        %v3394 = vcombine.high %v3031, %v3082
        %v3396 = vunpack.c.l.s4 1983009808
        %v3397 = vunpack.c.0.s8 %v3396
        %v3398 = vlaneseq
        %v3399 = vshrl.u32 %v3398, 7
        %v3400 = vsub.s32 %v3397, %v3399
        %v3401 = vrot.slane %v3393, %v3400
        %v3403 = vunpack.c.l.s4 1983009808
        %v3404 = vunpack.c.0.s8 %v3403
        %v3405 = vlaneseq
        %v3406 = vshrl.u32 %v3405, 7
        %v3407 = vsub.s32 %v3404, %v3406
        %v3408 = vrot.slane %v3394, %v3407
        %v3409 = vcombine.low %v3079, %v3085
        %v3410 = vcombine.high %v3079, %v3085
        %v3412 = vunpack.c.l.s4 1983009808
        %v3413 = vunpack.c.0.s8 %v3412
        %v3414 = vlaneseq
        %v3415 = vshrl.u32 %v3414, 7
        %v3416 = vsub.s32 %v3413, %v3415
        %v3417 = vrot.slane %v3409, %v3416
        %v3419 = vunpack.c.l.s4 1983009808
        %v3420 = vunpack.c.0.s8 %v3419
        %v3421 = vlaneseq
        %v3422 = vshrl.u32 %v3421, 7
        %v3423 = vsub.s32 %v3420, %v3422
        %v3424 = vrot.slane %v3410, %v3423
        %v3425 = vcombine.low %v3088, %v3094
        %v3426 = vcombine.high %v3088, %v3094
        %v3428 = vunpack.c.l.s4 1983009808
        %v3429 = vunpack.c.0.s8 %v3428
        %v3430 = vlaneseq
        %v3431 = vshrl.u32 %v3430, 7
        %v3432 = vsub.s32 %v3429, %v3431
        %v3433 = vrot.slane %v3425, %v3432
        %v3435 = vunpack.c.l.s4 1983009808
        %v3436 = vunpack.c.0.s8 %v3435
        %v3437 = vlaneseq
        %v3438 = vshrl.u32 %v3437, 7
        %v3439 = vsub.s32 %v3436, %v3438
        %v3440 = vrot.slane %v3426, %v3439
        %v3441 = vcombine.low %v3091, %v3097
        %v3442 = vcombine.high %v3091, %v3097
        %v3444 = vunpack.c.l.s4 1983009808
        %v3445 = vunpack.c.0.s8 %v3444
        %v3446 = vlaneseq
        %v3447 = vshrl.u32 %v3446, 7
        %v3448 = vsub.s32 %v3445, %v3447
        %v3449 = vrot.slane %v3441, %v3448
        %v3451 = vunpack.c.l.s4 1983009808
        %v3452 = vunpack.c.0.s8 %v3451
        %v3453 = vlaneseq
        %v3454 = vshrl.u32 %v3453, 7
        %v3455 = vsub.s32 %v3452, %v3454
        %v3456 = vrot.slane %v3442, %v3455
        %v3457 = vcombine.low %v3401, %v3417
        %v3458 = vcombine.high %v3401, %v3417
        %v3460 = vunpack.c.l.s4 1934713408
        %v3461 = vunpack.c.0.s8 %v3460
        %v3462 = vlaneseq
        %v3463 = vshrl.u32 %v3462, 7
        %v3464 = vsub.s32 %v3461, %v3463
        %v3465 = vrot.slane %v3457, %v3464
        %v3467 = vunpack.c.l.s4 1934713408
        %v3468 = vunpack.c.0.s8 %v3467
        %v3469 = vlaneseq
        %v3470 = vshrl.u32 %v3469, 7
        %v3471 = vsub.s32 %v3468, %v3470
        %v3472 = vrot.slane %v3458, %v3471
        %v3473 = vcombine.low %v3408, %v3424
        %v3474 = vcombine.high %v3408, %v3424
        %v3476 = vunpack.c.l.s4 1934713408
        %v3477 = vunpack.c.0.s8 %v3476
        %v3478 = vlaneseq
        %v3479 = vshrl.u32 %v3478, 7
        %v3480 = vsub.s32 %v3477, %v3479
        %v3481 = vrot.slane %v3473, %v3480
        %v3483 = vunpack.c.l.s4 1934713408
        %v3484 = vunpack.c.0.s8 %v3483
        %v3485 = vlaneseq
        %v3486 = vshrl.u32 %v3485, 7
        %v3487 = vsub.s32 %v3484, %v3486
        %v3488 = vrot.slane %v3474, %v3487
        %v3489 = vcombine.low %v3433, %v3449
        %v3490 = vcombine.high %v3433, %v3449
        %v3492 = vunpack.c.l.s4 1934713408
        %v3493 = vunpack.c.0.s8 %v3492
        %v3494 = vlaneseq
        %v3495 = vshrl.u32 %v3494, 7
        %v3496 = vsub.s32 %v3493, %v3495
        %v3497 = vrot.slane %v3489, %v3496
        %v3499 = vunpack.c.l.s4 1934713408
        %v3500 = vunpack.c.0.s8 %v3499
        %v3501 = vlaneseq
        %v3502 = vshrl.u32 %v3501, 7
        %v3503 = vsub.s32 %v3500, %v3502
        %v3504 = vrot.slane %v3490, %v3503
        %v3505 = vcombine.low %v3440, %v3456
        %v3506 = vcombine.high %v3440, %v3456
        %v3508 = vunpack.c.l.s4 1934713408
        %v3509 = vunpack.c.0.s8 %v3508
        %v3510 = vlaneseq
        %v3511 = vshrl.u32 %v3510, 7
        %v3512 = vsub.s32 %v3509, %v3511
        %v3513 = vrot.slane %v3505, %v3512
        %v3515 = vunpack.c.l.s4 1934713408
        %v3516 = vunpack.c.0.s8 %v3515
        %v3517 = vlaneseq
        %v3518 = vshrl.u32 %v3517, 7
        %v3519 = vsub.s32 %v3516, %v3518
        %v3520 = vrot.slane %v3506, %v3519
        %v3521 = vcombine.low %v3465, %v3497
        %v3522 = vcombine.high %v3465, %v3497
        %v3523 = vcombine.low %v3472, %v3504
        %v3524 = vcombine.high %v3472, %v3504
        %v3525 = vcombine.low %v3481, %v3513
        %v3526 = vcombine.high %v3481, %v3513
        %v3527 = vcombine.low %v3488, %v3520
        %v3528 = vcombine.high %v3488, %v3520
        %v3529 = vcombine.low %v3032, %v3104
        %v3530 = vcombine.high %v3032, %v3104
        %v3532 = vunpack.c.l.s4 1983009808
        %v3533 = vunpack.c.0.s8 %v3532
        %v3534 = vlaneseq
        %v3535 = vshrl.u32 %v3534, 7
        %v3536 = vsub.s32 %v3533, %v3535
        %v3537 = vrot.slane %v3529, %v3536
        %v3539 = vunpack.c.l.s4 1983009808
        %v3540 = vunpack.c.0.s8 %v3539
        %v3541 = vlaneseq
        %v3542 = vshrl.u32 %v3541, 7
        %v3543 = vsub.s32 %v3540, %v3542
        %v3544 = vrot.slane %v3530, %v3543
        %v3545 = vcombine.low %v3101, %v3107
        %v3546 = vcombine.high %v3101, %v3107
        %v3548 = vunpack.c.l.s4 1983009808
        %v3549 = vunpack.c.0.s8 %v3548
        %v3550 = vlaneseq
        %v3551 = vshrl.u32 %v3550, 7
        %v3552 = vsub.s32 %v3549, %v3551
        %v3553 = vrot.slane %v3545, %v3552
        %v3555 = vunpack.c.l.s4 1983009808
        %v3556 = vunpack.c.0.s8 %v3555
        %v3557 = vlaneseq
        %v3558 = vshrl.u32 %v3557, 7
        %v3559 = vsub.s32 %v3556, %v3558
        %v3560 = vrot.slane %v3546, %v3559
        %v3561 = vcombine.low %v3110, %v3116
        %v3562 = vcombine.high %v3110, %v3116
        %v3564 = vunpack.c.l.s4 1983009808
        %v3565 = vunpack.c.0.s8 %v3564
        %v3566 = vlaneseq
        %v3567 = vshrl.u32 %v3566, 7
        %v3568 = vsub.s32 %v3565, %v3567
        %v3569 = vrot.slane %v3561, %v3568
        %v3571 = vunpack.c.l.s4 1983009808
        %v3572 = vunpack.c.0.s8 %v3571
        %v3573 = vlaneseq
        %v3574 = vshrl.u32 %v3573, 7
        %v3575 = vsub.s32 %v3572, %v3574
        %v3576 = vrot.slane %v3562, %v3575
        %v3577 = vcombine.low %v3113, %v3119
        %v3578 = vcombine.high %v3113, %v3119
        %v3580 = vunpack.c.l.s4 1983009808
        %v3581 = vunpack.c.0.s8 %v3580
        %v3582 = vlaneseq
        %v3583 = vshrl.u32 %v3582, 7
        %v3584 = vsub.s32 %v3581, %v3583
        %v3585 = vrot.slane %v3577, %v3584
        %v3587 = vunpack.c.l.s4 1983009808
        %v3588 = vunpack.c.0.s8 %v3587
        %v3589 = vlaneseq
        %v3590 = vshrl.u32 %v3589, 7
        %v3591 = vsub.s32 %v3588, %v3590
        %v3592 = vrot.slane %v3578, %v3591
        %v3593 = vcombine.low %v3537, %v3553
        %v3594 = vcombine.high %v3537, %v3553
        %v3596 = vunpack.c.l.s4 1934713408
        %v3597 = vunpack.c.0.s8 %v3596
        %v3598 = vlaneseq
        %v3599 = vshrl.u32 %v3598, 7
        %v3600 = vsub.s32 %v3597, %v3599
        %v3601 = vrot.slane %v3593, %v3600
        %v3603 = vunpack.c.l.s4 1934713408
        %v3604 = vunpack.c.0.s8 %v3603
        %v3605 = vlaneseq
        %v3606 = vshrl.u32 %v3605, 7
        %v3607 = vsub.s32 %v3604, %v3606
        %v3608 = vrot.slane %v3594, %v3607
        %v3609 = vcombine.low %v3544, %v3560
        %v3610 = vcombine.high %v3544, %v3560
        %v3612 = vunpack.c.l.s4 1934713408
        %v3613 = vunpack.c.0.s8 %v3612
        %v3614 = vlaneseq
        %v3615 = vshrl.u32 %v3614, 7
        %v3616 = vsub.s32 %v3613, %v3615
        %v3617 = vrot.slane %v3609, %v3616
        %v3619 = vunpack.c.l.s4 1934713408
        %v3620 = vunpack.c.0.s8 %v3619
        %v3621 = vlaneseq
        %v3622 = vshrl.u32 %v3621, 7
        %v3623 = vsub.s32 %v3620, %v3622
        %v3624 = vrot.slane %v3610, %v3623
        %v3625 = vcombine.low %v3569, %v3585
        %v3626 = vcombine.high %v3569, %v3585
        %v3628 = vunpack.c.l.s4 1934713408
        %v3629 = vunpack.c.0.s8 %v3628
        %v3630 = vlaneseq
        %v3631 = vshrl.u32 %v3630, 7
        %v3632 = vsub.s32 %v3629, %v3631
        %v3633 = vrot.slane %v3625, %v3632
        %v3635 = vunpack.c.l.s4 1934713408
        %v3636 = vunpack.c.0.s8 %v3635
        %v3637 = vlaneseq
        %v3638 = vshrl.u32 %v3637, 7
        %v3639 = vsub.s32 %v3636, %v3638
        %v3640 = vrot.slane %v3626, %v3639
        %v3641 = vcombine.low %v3576, %v3592
        %v3642 = vcombine.high %v3576, %v3592
        %v3644 = vunpack.c.l.s4 1934713408
        %v3645 = vunpack.c.0.s8 %v3644
        %v3646 = vlaneseq
        %v3647 = vshrl.u32 %v3646, 7
        %v3648 = vsub.s32 %v3645, %v3647
        %v3649 = vrot.slane %v3641, %v3648
        %v3651 = vunpack.c.l.s4 1934713408
        %v3652 = vunpack.c.0.s8 %v3651
        %v3653 = vlaneseq
        %v3654 = vshrl.u32 %v3653, 7
        %v3655 = vsub.s32 %v3652, %v3654
        %v3656 = vrot.slane %v3642, %v3655
        %v3657 = vcombine.low %v3601, %v3633
        %v3658 = vcombine.high %v3601, %v3633
        %v3659 = vcombine.low %v3608, %v3640
        %v3660 = vcombine.high %v3608, %v3640
        %v3661 = vcombine.low %v3617, %v3649
        %v3662 = vcombine.high %v3617, %v3649
        %v3663 = vcombine.low %v3624, %v3656
        %v3664 = vcombine.high %v3624, %v3656
        %v3665 = vsel %vm994, %v3249, -inf
        %3666 = vmax.xlane.f32.xlu0 %v3665
        %v3667 = vpop.xlane.xlu0 %3666
        %v3668 = vsel %vm994, %v3385, -inf
        %3669 = vmax.xlane.f32.xlu0 %v3668
        %v3670 = vpop.xlane.xlu0 %3669
        %v3671 = vsel %vm994, %v3521, -inf
        %3672 = vmax.xlane.f32.xlu0 %v3671
        %v3673 = vpop.xlane.xlu0 %3672
        %v3674 = vsel %vm994, %v3657, -inf
        %3675 = vmax.xlane.f32.xlu0 %v3674
        %v3676 = vpop.xlane.xlu0 %3675
        %v3677 = vsel %vm994, %v3250, -inf
        %3678 = vmax.xlane.f32.xlu0 %v3677
        %v3679 = vpop.xlane.xlu0 %3678
        %v3680 = vsel %vm994, %v3386, -inf
        %3681 = vmax.xlane.f32.xlu0 %v3680
        %v3682 = vpop.xlane.xlu0 %3681
        %v3683 = vsel %vm994, %v3522, -inf
        %3684 = vmax.xlane.f32.xlu0 %v3683
        %v3685 = vpop.xlane.xlu0 %3684
        %v3686 = vsel %vm994, %v3658, -inf
        %3687 = vmax.xlane.f32.xlu0 %v3686
        %v3688 = vpop.xlane.xlu0 %3687
        %v3689 = vsel %vm994, %v3251, -inf
        %3690 = vmax.xlane.f32.xlu0 %v3689
        %v3691 = vpop.xlane.xlu0 %3690
        %v3692 = vsel %vm994, %v3387, -inf
        %3693 = vmax.xlane.f32.xlu0 %v3692
        %v3694 = vpop.xlane.xlu0 %3693
        %v3695 = vsel %vm994, %v3523, -inf
        %3696 = vmax.xlane.f32.xlu0 %v3695
        %v3697 = vpop.xlane.xlu0 %3696
        %v3698 = vsel %vm994, %v3659, -inf
        %3699 = vmax.xlane.f32.xlu0 %v3698
        %v3700 = vpop.xlane.xlu0 %3699
        %v3701 = vsel %vm994, %v3252, -inf
        %3702 = vmax.xlane.f32.xlu0 %v3701
        %v3703 = vpop.xlane.xlu0 %3702
        %v3704 = vsel %vm994, %v3388, -inf
        %3705 = vmax.xlane.f32.xlu0 %v3704
        %v3706 = vpop.xlane.xlu0 %3705
        %v3707 = vsel %vm994, %v3524, -inf
        %3708 = vmax.xlane.f32.xlu0 %v3707
        %v3709 = vpop.xlane.xlu0 %3708
        %v3710 = vsel %vm994, %v3660, -inf
        %3711 = vmax.xlane.f32.xlu0 %v3710
        %v3712 = vpop.xlane.xlu0 %3711
        %v3713 = vsel %vm994, %v3253, -inf
        %3714 = vmax.xlane.f32.xlu0 %v3713
        %v3715 = vpop.xlane.xlu0 %3714
        %v3716 = vsel %vm994, %v3389, -inf
        %3717 = vmax.xlane.f32.xlu0 %v3716
        %v3718 = vpop.xlane.xlu0 %3717
        %v3719 = vsel %vm994, %v3525, -inf
        %3720 = vmax.xlane.f32.xlu0 %v3719
        %v3721 = vpop.xlane.xlu0 %3720
        %v3722 = vsel %vm994, %v3661, -inf
        %3723 = vmax.xlane.f32.xlu0 %v3722
        %v3724 = vpop.xlane.xlu0 %3723
        %v3725 = vsel %vm994, %v3254, -inf
        %3726 = vmax.xlane.f32.xlu0 %v3725
        %v3727 = vpop.xlane.xlu0 %3726
        %v3728 = vsel %vm994, %v3390, -inf
        %3729 = vmax.xlane.f32.xlu0 %v3728
        %v3730 = vpop.xlane.xlu0 %3729
        %v3731 = vsel %vm994, %v3526, -inf
        %3732 = vmax.xlane.f32.xlu0 %v3731
        %v3733 = vpop.xlane.xlu0 %3732
        %v3734 = vsel %vm994, %v3662, -inf
        %3735 = vmax.xlane.f32.xlu0 %v3734
        %v3736 = vpop.xlane.xlu0 %3735
        %v3737 = vsel %vm994, %v3255, -inf
        %3738 = vmax.xlane.f32.xlu0 %v3737
        %v3739 = vpop.xlane.xlu0 %3738
        %v3740 = vsel %vm994, %v3391, -inf
        %3741 = vmax.xlane.f32.xlu0 %v3740
        %v3742 = vpop.xlane.xlu0 %3741
        %v3743 = vsel %vm994, %v3527, -inf
        %3744 = vmax.xlane.f32.xlu0 %v3743
        %v3745 = vpop.xlane.xlu0 %3744
        %v3746 = vsel %vm994, %v3663, -inf
        %3747 = vmax.xlane.f32.xlu0 %v3746
        %v3748 = vpop.xlane.xlu0 %3747
        %v3749 = vsel %vm994, %v3256, -inf
        %3750 = vmax.xlane.f32.xlu0 %v3749
        %v3751 = vpop.xlane.xlu0 %3750
        %v3752 = vsel %vm994, %v3392, -inf
        %3753 = vmax.xlane.f32.xlu0 %v3752
        %v3754 = vpop.xlane.xlu0 %3753
        %v3755 = vsel %vm994, %v3528, -inf
        %3756 = vmax.xlane.f32.xlu0 %v3755
        %v3757 = vpop.xlane.xlu0 %3756
        %v3758 = vsel %vm994, %v3664, -inf
        %3759 = vmax.xlane.f32.xlu0 %v3758
        %v3760 = vpop.xlane.xlu0 %3759
        %3761 = vset.pattern.permute.xlu0 58
        %3762 = vperm.xlu0 %3761, %v177
        %v3763 = vpop.permute.xlu0 %3762
        %3765 = vrot.lane.b32.xlu0 %v177, 104
        %v3766 = vpop.permute.xlu0 %3765
        %v3767 = vsel %vm1097, %v3766, 0
        %3769 = vmatprep.subr.mxu0 %v3030
        %3770 = vmatpush1.msra.mxu0 %v3029
        %3771 = vmatprep.subr.mxu0 0.0
        %3772 = vmatpush1.msra.mxu0 0.0
        %3773 = vmatprep.subr.mxu0 0.0
        %3774 = vmatpush1.msra.mxu0 0.0
        %3775 = vmatprep.subr.mxu0 0.0
        %3776 = vmatpush1.msra.mxu0 0.0
        %3777 = vmatprep.subr.mxu0 0.0
        %3778 = vmatpush1.msra.mxu0 0.0
        %3779 = vmatprep.subr.mxu0 0.0
        %3780 = vmatpush1.msra.mxu0 0.0
        %3781 = vmatprep.subr.mxu0 0.0
        %3782 = vmatpush1.msra.mxu0 0.0
        %3783 = vmatprep.subr.mxu0 0.0
        %3784 = vmatpush1.msra.mxu0 0.0
        %3785 = vmatprep.subr.mxu0 0.0
        %3786 = vmatpush1.msra.mxu0 0.0
        %3787 = vmatprep.subr.mxu0 0.0
        %3788 = vmatpush1.msra.mxu0 0.0
        %3789 = vmatprep.subr.mxu0 0.0
        %3790 = vmatpush1.msra.mxu0 0.0
        %3791 = vmatprep.subr.mxu0 0.0
        %3792 = vmatpush1.msra.mxu0 0.0
        %3793 = vmatprep.subr.mxu0 0.0
        %3794 = vmatpush1.msra.mxu0 0.0
        %3795 = vmatprep.subr.mxu0 0.0
        %3796 = vmatpush1.msra.mxu0 0.0
        %3797 = vmatprep.subr.mxu0 0.0
        %3798 = vmatpush1.msra.mxu0 0.0
        %3799 = vmatprep.subr.mxu0 0.0
        %3800 = vmatpush1.msra.mxu0 0.0
        %3801 = vmatprep.subr.mxu0 0.0
        %3802 = vmatpush1.msra.mxu0 0.0
        %3803 = vmatprep.subr.mxu0 0.0
        %3804 = vmatpush1.msra.mxu0 0.0
        %3805 = vmatprep.subr.mxu0 0.0
        %3806 = vmatpush1.msra.mxu0 0.0
        %3807 = vmatprep.subr.mxu0 0.0
        %3808 = vmatpush1.msra.mxu0 0.0
        %3809 = vmatprep.subr.mxu0 0.0
        %3810 = vmatpush1.msra.mxu0 0.0
        %3811 = vmatprep.subr.mxu0 0.0
        %3812 = vmatpush1.msra.mxu0 0.0
        %3813 = vmatprep.subr.mxu0 0.0
        %3814 = vmatpush1.msra.mxu0 0.0
        %3815 = vmatprep.subr.mxu0 0.0
        %3816 = vmatpush1.msra.mxu0 0.0
        %3817 = vmatprep.subr.mxu0 0.0
        %3818 = vmatpush1.msra.mxu0 0.0
        %3819 = vmatprep.subr.mxu0 0.0
        %3820 = vmatpush1.msra.mxu0 0.0
        %3821 = vmatprep.subr.mxu0 0.0
        %3822 = vmatpush1.msra.mxu0 0.0
        %3823 = vmatprep.subr.mxu0 0.0
        %3824 = vmatpush1.msra.mxu0 0.0
        %3825 = vmatprep.subr.mxu0 0.0
        %3826 = vmatpush1.msra.mxu0 0.0
        %3827 = vmatprep.subr.mxu0 0.0
        %3828 = vmatpush1.msra.mxu0 0.0
        %3829 = vmatprep.subr.mxu0 0.0
        %3830 = vmatpush1.msra.mxu0 0.0
        %3831 = vmatprep.subr.mxu0 0.0
        %3832 = vmatpush1.msra.mxu0 0.0
        %3833 = vmatprep.mubr.f32.mxu0 0.0
        %3834 = vmatmul.mubr.f32.gmra.mrb[0].mxu0 %v3767
        %v3835 = vpop.f32.mrb[0].mxu0
        %v3836 = vadd.f32 %v3763, %v3835
        %v3837 = vpop.f32.mrb[0].mxu0
        %v3838 = vadd.f32 %v3763, %v3837
        %3839 = vdwg.mxu0
        %3840 = vmatprep.subr.mxu0 %v3032
        %3841 = vmatpush1.msra.mxu0 %v3031
        %3842 = vmatprep.subr.mxu0 0.0
        %3843 = vmatpush1.msra.mxu0 0.0
        %3844 = vmatprep.subr.mxu0 0.0
        %3845 = vmatpush1.msra.mxu0 0.0
        %3846 = vmatprep.subr.mxu0 0.0
        %3847 = vmatpush1.msra.mxu0 0.0
        %3848 = vmatprep.subr.mxu0 0.0
        %3849 = vmatpush1.msra.mxu0 0.0
        %3850 = vmatprep.subr.mxu0 0.0
        %3851 = vmatpush1.msra.mxu0 0.0
        %3852 = vmatprep.subr.mxu0 0.0
        %3853 = vmatpush1.msra.mxu0 0.0
        %3854 = vmatprep.subr.mxu0 0.0
        %3855 = vmatpush1.msra.mxu0 0.0
        %3856 = vmatprep.subr.mxu0 0.0
        %3857 = vmatpush1.msra.mxu0 0.0
        %3858 = vmatprep.subr.mxu0 0.0
        %3859 = vmatpush1.msra.mxu0 0.0
        %3860 = vmatprep.subr.mxu0 0.0
        %3861 = vmatpush1.msra.mxu0 0.0
        %3862 = vmatprep.subr.mxu0 0.0
        %3863 = vmatpush1.msra.mxu0 0.0
        %3864 = vmatprep.subr.mxu0 0.0
        %3865 = vmatpush1.msra.mxu0 0.0
        %3866 = vmatprep.subr.mxu0 0.0
        %3867 = vmatpush1.msra.mxu0 0.0
        %3868 = vmatprep.subr.mxu0 0.0
        %3869 = vmatpush1.msra.mxu0 0.0
        %3870 = vmatprep.subr.mxu0 0.0
        %3871 = vmatpush1.msra.mxu0 0.0
        %3872 = vmatprep.subr.mxu0 0.0
        %3873 = vmatpush1.msra.mxu0 0.0
        %3874 = vmatprep.subr.mxu0 0.0
        %3875 = vmatpush1.msra.mxu0 0.0
        %3876 = vmatprep.subr.mxu0 0.0
        %3877 = vmatpush1.msra.mxu0 0.0
        %3878 = vmatprep.subr.mxu0 0.0
        %3879 = vmatpush1.msra.mxu0 0.0
        %3880 = vmatprep.subr.mxu0 0.0
        %3881 = vmatpush1.msra.mxu0 0.0
        %3882 = vmatprep.subr.mxu0 0.0
        %3883 = vmatpush1.msra.mxu0 0.0
        %3884 = vmatprep.subr.mxu0 0.0
        %3885 = vmatpush1.msra.mxu0 0.0
        %3886 = vmatprep.subr.mxu0 0.0
        %3887 = vmatpush1.msra.mxu0 0.0
        %3888 = vmatprep.subr.mxu0 0.0
        %3889 = vmatpush1.msra.mxu0 0.0
        %3890 = vmatprep.subr.mxu0 0.0
        %3891 = vmatpush1.msra.mxu0 0.0
        %3892 = vmatprep.subr.mxu0 0.0
        %3893 = vmatpush1.msra.mxu0 0.0
        %3894 = vmatprep.subr.mxu0 0.0
        %3895 = vmatpush1.msra.mxu0 0.0
        %3896 = vmatprep.subr.mxu0 0.0
        %3897 = vmatpush1.msra.mxu0 0.0
        %3898 = vmatprep.subr.mxu0 0.0
        %3899 = vmatpush1.msra.mxu0 0.0
        %3900 = vmatprep.subr.mxu0 0.0
        %3901 = vmatpush1.msra.mxu0 0.0
        %3902 = vmatprep.subr.mxu0 0.0
        %3903 = vmatpush1.msra.mxu0 0.0
        %3904 = vmatprep.mubr.f32.mxu0 0.0
        %3905 = vmatmul.mubr.f32.gmra.mrb[0].mxu0 %v3767
        %v3906 = vpop.f32.mrb[0].mxu0
        %v3907 = vadd.f32 %v3763, %v3906
        %v3908 = vpop.f32.mrb[0].mxu0
        %v3909 = vadd.f32 %v3763, %v3908
        %3910 = vdwg.mxu0
        %3911 = vrot.lane.b32.xlu0 %v177, 96
        %v3912 = vpop.permute.xlu0 %3911
        %v3945 = vlaneseq
        %v3946 = vshrl.u32 %v3945, 7
        %v3947 = vsub.s32 %v1277, %v3946
        %v3948 = vrot.slane %v3667, %v3947
        %v3949 = vlaneseq
        %v3950 = vshrl.u32 %v3949, 7
        %v3951 = vsub.s32 %v1282, %v3950
        %v3952 = vrot.slane %v3670, %v3951
        %v3953 = vsel %vm1287, %v3952, %v3948
        %v3954 = vlaneseq
        %v3955 = vshrl.u32 %v3954, 7
        %v3956 = vsub.s32 %v1289, %v3955
        %v3957 = vrot.slane %v3673, %v3956
        %v3958 = vsel %vm1294, %v3957, %v3953
        %v3959 = vlaneseq
        %v3960 = vshrl.u32 %v3959, 7
        %v3961 = vsub.s32 %v1296, %v3960
        %v3962 = vrot.slane %v3676, %v3961
        %v3963 = vsel %vm1301, %v3962, %v3958
        %v3964 = vlaneseq
        %v3965 = vshrl.u32 %v3964, 7
        %v3966 = vsub.s32 %v1277, %v3965
        %v3967 = vrot.slane %v3679, %v3966
        %v3968 = vlaneseq
        %v3969 = vshrl.u32 %v3968, 7
        %v3970 = vsub.s32 %v1282, %v3969
        %v3971 = vrot.slane %v3682, %v3970
        %v3972 = vsel %vm1287, %v3971, %v3967
        %v3973 = vlaneseq
        %v3974 = vshrl.u32 %v3973, 7
        %v3975 = vsub.s32 %v1289, %v3974
        %v3976 = vrot.slane %v3685, %v3975
        %v3977 = vsel %vm1294, %v3976, %v3972
        %v3978 = vlaneseq
        %v3979 = vshrl.u32 %v3978, 7
        %v3980 = vsub.s32 %v1296, %v3979
        %v3981 = vrot.slane %v3688, %v3980
        %v3982 = vsel %vm1301, %v3981, %v3977
        %v3983 = vlaneseq
        %v3984 = vshrl.u32 %v3983, 7
        %v3985 = vsub.s32 %v1277, %v3984
        %v3986 = vrot.slane %v3691, %v3985
        %v3987 = vlaneseq
        %v3988 = vshrl.u32 %v3987, 7
        %v3989 = vsub.s32 %v1282, %v3988
        %v3990 = vrot.slane %v3694, %v3989
        %v3991 = vsel %vm1287, %v3990, %v3986
        %v3992 = vlaneseq
        %v3993 = vshrl.u32 %v3992, 7
        %v3994 = vsub.s32 %v1289, %v3993
        %v3995 = vrot.slane %v3697, %v3994
        %v3996 = vsel %vm1294, %v3995, %v3991
        %v3997 = vlaneseq
        %v3998 = vshrl.u32 %v3997, 7
        %v3999 = vsub.s32 %v1296, %v3998
        %v4000 = vrot.slane %v3700, %v3999
        %v4001 = vsel %vm1301, %v4000, %v3996
        %v4002 = vlaneseq
        %v4003 = vshrl.u32 %v4002, 7
        %v4004 = vsub.s32 %v1277, %v4003
        %v4005 = vrot.slane %v3703, %v4004
        %v4006 = vlaneseq
        %v4007 = vshrl.u32 %v4006, 7
        %v4008 = vsub.s32 %v1282, %v4007
        %v4009 = vrot.slane %v3706, %v4008
        %v4010 = vsel %vm1287, %v4009, %v4005
        %v4011 = vlaneseq
        %v4012 = vshrl.u32 %v4011, 7
        %v4013 = vsub.s32 %v1289, %v4012
        %v4014 = vrot.slane %v3709, %v4013
        %v4015 = vsel %vm1294, %v4014, %v4010
        %v4016 = vlaneseq
        %v4017 = vshrl.u32 %v4016, 7
        %v4018 = vsub.s32 %v1296, %v4017
        %v4019 = vrot.slane %v3712, %v4018
        %v4020 = vsel %vm1301, %v4019, %v4015
        %v4021 = vlaneseq
        %v4022 = vshrl.u32 %v4021, 7
        %v4023 = vsub.s32 %v1277, %v4022
        %v4024 = vrot.slane %v3715, %v4023
        %v4025 = vlaneseq
        %v4026 = vshrl.u32 %v4025, 7
        %v4027 = vsub.s32 %v1282, %v4026
        %v4028 = vrot.slane %v3718, %v4027
        %v4029 = vsel %vm1287, %v4028, %v4024
        %v4030 = vlaneseq
        %v4031 = vshrl.u32 %v4030, 7
        %v4032 = vsub.s32 %v1289, %v4031
        %v4033 = vrot.slane %v3721, %v4032
        %v4034 = vsel %vm1294, %v4033, %v4029
        %v4035 = vlaneseq
        %v4036 = vshrl.u32 %v4035, 7
        %v4037 = vsub.s32 %v1296, %v4036
        %v4038 = vrot.slane %v3724, %v4037
        %v4039 = vsel %vm1301, %v4038, %v4034
        %v4040 = vlaneseq
        %v4041 = vshrl.u32 %v4040, 7
        %v4042 = vsub.s32 %v1277, %v4041
        %v4043 = vrot.slane %v3727, %v4042
        %v4044 = vlaneseq
        %v4045 = vshrl.u32 %v4044, 7
        %v4046 = vsub.s32 %v1282, %v4045
        %v4047 = vrot.slane %v3730, %v4046
        %v4048 = vsel %vm1287, %v4047, %v4043
        %v4049 = vlaneseq
        %v4050 = vshrl.u32 %v4049, 7
        %v4051 = vsub.s32 %v1289, %v4050
        %v4052 = vrot.slane %v3733, %v4051
        %v4053 = vsel %vm1294, %v4052, %v4048
        %v4054 = vlaneseq
        %v4055 = vshrl.u32 %v4054, 7
        %v4056 = vsub.s32 %v1296, %v4055
        %v4057 = vrot.slane %v3736, %v4056
        %v4058 = vsel %vm1301, %v4057, %v4053
        %v4059 = vlaneseq
        %v4060 = vshrl.u32 %v4059, 7
        %v4061 = vsub.s32 %v1277, %v4060
        %v4062 = vrot.slane %v3739, %v4061
        %v4063 = vlaneseq
        %v4064 = vshrl.u32 %v4063, 7
        %v4065 = vsub.s32 %v1282, %v4064
        %v4066 = vrot.slane %v3742, %v4065
        %v4067 = vsel %vm1287, %v4066, %v4062
        %v4068 = vlaneseq
        %v4069 = vshrl.u32 %v4068, 7
        %v4070 = vsub.s32 %v1289, %v4069
        %v4071 = vrot.slane %v3745, %v4070
        %v4072 = vsel %vm1294, %v4071, %v4067
        %v4073 = vlaneseq
        %v4074 = vshrl.u32 %v4073, 7
        %v4075 = vsub.s32 %v1296, %v4074
        %v4076 = vrot.slane %v3748, %v4075
        %v4077 = vsel %vm1301, %v4076, %v4072
        %v4078 = vlaneseq
        %v4079 = vshrl.u32 %v4078, 7
        %v4080 = vsub.s32 %v1277, %v4079
        %v4081 = vrot.slane %v3751, %v4080
        %v4082 = vlaneseq
        %v4083 = vshrl.u32 %v4082, 7
        %v4084 = vsub.s32 %v1282, %v4083
        %v4085 = vrot.slane %v3754, %v4084
        %v4086 = vsel %vm1287, %v4085, %v4081
        %v4087 = vlaneseq
        %v4088 = vshrl.u32 %v4087, 7
        %v4089 = vsub.s32 %v1289, %v4088
        %v4090 = vrot.slane %v3757, %v4089
        %v4091 = vsel %vm1294, %v4090, %v4086
        %v4092 = vlaneseq
        %v4093 = vshrl.u32 %v4092, 7
        %v4094 = vsub.s32 %v1296, %v4093
        %v4095 = vrot.slane %v3760, %v4094
        %v4096 = vsel %vm1301, %v4095, %v4091
        %v4097 = vsel %vm1436, %v3982, %v3963
        %v4098 = vsel %vm1438, %v4001, %v4097
        %v4099 = vsel %vm1440, %v4020, %v4098
        %v4100 = vsel %vm1442, %v4039, %v4099
        %v4101 = vsel %vm1444, %v4058, %v4100
        %v4102 = vsel %vm1446, %v4077, %v4101
        %v4103 = vsel %vm1448, %v4096, %v4102
        %v4105 = vsel %vm1097, %v3912, 0
        %4107 = vmatprep.subr.mxu0 0.0
        %4108 = vmatpush1.msra.mxu0 %v4103
        %4109 = vmatprep.subr.mxu0 0.0
        %4110 = vmatpush1.msra.mxu0 0.0
        %4111 = vmatprep.subr.mxu0 0.0
        %4112 = vmatpush1.msra.mxu0 0.0
        %4113 = vmatprep.subr.mxu0 0.0
        %4114 = vmatpush1.msra.mxu0 0.0
        %4115 = vmatprep.subr.mxu0 0.0
        %4116 = vmatpush1.msra.mxu0 0.0
        %4117 = vmatprep.subr.mxu0 0.0
        %4118 = vmatpush1.msra.mxu0 0.0
        %4119 = vmatprep.subr.mxu0 0.0
        %4120 = vmatpush1.msra.mxu0 0.0
        %4121 = vmatprep.subr.mxu0 0.0
        %4122 = vmatpush1.msra.mxu0 0.0
        %4123 = vmatprep.subr.mxu0 0.0
        %4124 = vmatpush1.msra.mxu0 0.0
        %4125 = vmatprep.subr.mxu0 0.0
        %4126 = vmatpush1.msra.mxu0 0.0
        %4127 = vmatprep.subr.mxu0 0.0
        %4128 = vmatpush1.msra.mxu0 0.0
        %4129 = vmatprep.subr.mxu0 0.0
        %4130 = vmatpush1.msra.mxu0 0.0
        %4131 = vmatprep.subr.mxu0 0.0
        %4132 = vmatpush1.msra.mxu0 0.0
        %4133 = vmatprep.subr.mxu0 0.0
        %4134 = vmatpush1.msra.mxu0 0.0
        %4135 = vmatprep.subr.mxu0 0.0
        %4136 = vmatpush1.msra.mxu0 0.0
        %4137 = vmatprep.subr.mxu0 0.0
        %4138 = vmatpush1.msra.mxu0 0.0
        %4139 = vmatprep.subr.mxu0 0.0
        %4140 = vmatpush1.msra.mxu0 0.0
        %4141 = vmatprep.subr.mxu0 0.0
        %4142 = vmatpush1.msra.mxu0 0.0
        %4143 = vmatprep.subr.mxu0 0.0
        %4144 = vmatpush1.msra.mxu0 0.0
        %4145 = vmatprep.subr.mxu0 0.0
        %4146 = vmatpush1.msra.mxu0 0.0
        %4147 = vmatprep.subr.mxu0 0.0
        %4148 = vmatpush1.msra.mxu0 0.0
        %4149 = vmatprep.subr.mxu0 0.0
        %4150 = vmatpush1.msra.mxu0 0.0
        %4151 = vmatprep.subr.mxu0 0.0
        %4152 = vmatpush1.msra.mxu0 0.0
        %4153 = vmatprep.subr.mxu0 0.0
        %4154 = vmatpush1.msra.mxu0 0.0
        %4155 = vmatprep.subr.mxu0 0.0
        %4156 = vmatpush1.msra.mxu0 0.0
        %4157 = vmatprep.subr.mxu0 0.0
        %4158 = vmatpush1.msra.mxu0 0.0
        %4159 = vmatprep.subr.mxu0 0.0
        %4160 = vmatpush1.msra.mxu0 0.0
        %4161 = vmatprep.subr.mxu0 0.0
        %4162 = vmatpush1.msra.mxu0 0.0
        %4163 = vmatprep.subr.mxu0 0.0
        %4164 = vmatpush1.msra.mxu0 0.0
        %4165 = vmatprep.subr.mxu0 0.0
        %4166 = vmatpush1.msra.mxu0 0.0
        %4167 = vmatprep.subr.mxu0 0.0
        %4168 = vmatpush1.msra.mxu0 0.0
        %4169 = vmatprep.subr.mxu0 0.0
        %4170 = vmatpush1.msra.mxu0 0.0
        %4171 = vmatprep.mubr.f32.mxu0 0.0
        %4172 = vmatmul.mubr.f32.gmra.mrb[0].mxu0 %v4105
        %v4173 = vpop.f32.mrb[0].mxu0
        %v4174 = vadd.f32 0.0, %v4173
        %v4175 = vpop.f32.mrb[0].mxu0
        %4176 = vdwg.mxu0
        %4178 = vrot.lane.b32.xlu0 %v3836, 112
        %v4179 = vpop.permute.xlu0 %4178
        %4181 = vrot.lane.b32.xlu0 %v3836, 96
        %v4182 = vpop.permute.xlu0 %4181
        %4184 = vrot.lane.b32.xlu0 %v3836, 80
        %v4185 = vpop.permute.xlu0 %4184
        %4187 = vrot.lane.b32.xlu0 %v3836, 64
        %v4188 = vpop.permute.xlu0 %4187
        %4190 = vrot.lane.b32.xlu0 %v3836, 48
        %v4191 = vpop.permute.xlu0 %4190
        %4193 = vrot.lane.b32.xlu0 %v3836, 32
        %v4194 = vpop.permute.xlu0 %4193
        %4196 = vrot.lane.b32.xlu0 %v3836, 16
        %v4197 = vpop.permute.xlu0 %4196
        %4200 = vrot.lane.b32.xlu0 %v3838, 112
        %v4201 = vpop.permute.xlu0 %4200
        %4203 = vrot.lane.b32.xlu0 %v3838, 96
        %v4204 = vpop.permute.xlu0 %4203
        %4206 = vrot.lane.b32.xlu0 %v3838, 80
        %v4207 = vpop.permute.xlu0 %4206
        %4209 = vrot.lane.b32.xlu0 %v3838, 64
        %v4210 = vpop.permute.xlu0 %4209
        %4212 = vrot.lane.b32.xlu0 %v3838, 48
        %v4213 = vpop.permute.xlu0 %4212
        %4215 = vrot.lane.b32.xlu0 %v3838, 32
        %v4216 = vpop.permute.xlu0 %4215
        %4218 = vrot.lane.b32.xlu0 %v3838, 16
        %v4219 = vpop.permute.xlu0 %4218
        %4222 = vrot.lane.b32.xlu0 %v3907, 112
        %v4223 = vpop.permute.xlu0 %4222
        %4225 = vrot.lane.b32.xlu0 %v3907, 96
        %v4226 = vpop.permute.xlu0 %4225
        %4228 = vrot.lane.b32.xlu0 %v3907, 80
        %v4229 = vpop.permute.xlu0 %4228
        %4231 = vrot.lane.b32.xlu0 %v3907, 64
        %v4232 = vpop.permute.xlu0 %4231
        %4234 = vrot.lane.b32.xlu0 %v3907, 48
        %v4235 = vpop.permute.xlu0 %4234
        %4237 = vrot.lane.b32.xlu0 %v3907, 32
        %v4238 = vpop.permute.xlu0 %4237
        %4240 = vrot.lane.b32.xlu0 %v3907, 16
        %v4241 = vpop.permute.xlu0 %4240
        %4244 = vrot.lane.b32.xlu0 %v3909, 112
        %v4245 = vpop.permute.xlu0 %4244
        %4247 = vrot.lane.b32.xlu0 %v3909, 96
        %v4248 = vpop.permute.xlu0 %4247
        %4250 = vrot.lane.b32.xlu0 %v3909, 80
        %v4251 = vpop.permute.xlu0 %4250
        %4253 = vrot.lane.b32.xlu0 %v3909, 64
        %v4254 = vpop.permute.xlu0 %4253
        %4256 = vrot.lane.b32.xlu0 %v3909, 48
        %v4257 = vpop.permute.xlu0 %4256
        %4259 = vrot.lane.b32.xlu0 %v3909, 32
        %v4260 = vpop.permute.xlu0 %4259
        %4262 = vrot.lane.b32.xlu0 %v3909, 16
        %v4263 = vpop.permute.xlu0 %4262
        %v4265 = vcombine.low %v3836, %v4182
        %v4266 = vcombine.high %v3836, %v4182
        %v4268 = vunpack.c.l.s4 1983009808
        %v4269 = vunpack.c.0.s8 %v4268
        %v4270 = vlaneseq
        %v4271 = vshrl.u32 %v4270, 7
        %v4272 = vsub.s32 %v4269, %v4271
        %v4273 = vrot.slane %v4265, %v4272
        %v4275 = vunpack.c.l.s4 1983009808
        %v4276 = vunpack.c.0.s8 %v4275
        %v4277 = vlaneseq
        %v4278 = vshrl.u32 %v4277, 7
        %v4279 = vsub.s32 %v4276, %v4278
        %v4280 = vrot.slane %v4266, %v4279
        %v4281 = vcombine.low %v4179, %v4185
        %v4282 = vcombine.high %v4179, %v4185
        %v4284 = vunpack.c.l.s4 1983009808
        %v4285 = vunpack.c.0.s8 %v4284
        %v4286 = vlaneseq
        %v4287 = vshrl.u32 %v4286, 7
        %v4288 = vsub.s32 %v4285, %v4287
        %v4289 = vrot.slane %v4281, %v4288
        %v4291 = vunpack.c.l.s4 1983009808
        %v4292 = vunpack.c.0.s8 %v4291
        %v4293 = vlaneseq
        %v4294 = vshrl.u32 %v4293, 7
        %v4295 = vsub.s32 %v4292, %v4294
        %v4296 = vrot.slane %v4282, %v4295
        %v4297 = vcombine.low %v4188, %v4194
        %v4298 = vcombine.high %v4188, %v4194
        %v4300 = vunpack.c.l.s4 1983009808
        %v4301 = vunpack.c.0.s8 %v4300
        %v4302 = vlaneseq
        %v4303 = vshrl.u32 %v4302, 7
        %v4304 = vsub.s32 %v4301, %v4303
        %v4305 = vrot.slane %v4297, %v4304
        %v4307 = vunpack.c.l.s4 1983009808
        %v4308 = vunpack.c.0.s8 %v4307
        %v4309 = vlaneseq
        %v4310 = vshrl.u32 %v4309, 7
        %v4311 = vsub.s32 %v4308, %v4310
        %v4312 = vrot.slane %v4298, %v4311
        %v4313 = vcombine.low %v4191, %v4197
        %v4314 = vcombine.high %v4191, %v4197
        %v4316 = vunpack.c.l.s4 1983009808
        %v4317 = vunpack.c.0.s8 %v4316
        %v4318 = vlaneseq
        %v4319 = vshrl.u32 %v4318, 7
        %v4320 = vsub.s32 %v4317, %v4319
        %v4321 = vrot.slane %v4313, %v4320
        %v4323 = vunpack.c.l.s4 1983009808
        %v4324 = vunpack.c.0.s8 %v4323
        %v4325 = vlaneseq
        %v4326 = vshrl.u32 %v4325, 7
        %v4327 = vsub.s32 %v4324, %v4326
        %v4328 = vrot.slane %v4314, %v4327
        %v4329 = vcombine.low %v4273, %v4289
        %v4330 = vcombine.high %v4273, %v4289
        %v4332 = vunpack.c.l.s4 1934713408
        %v4333 = vunpack.c.0.s8 %v4332
        %v4334 = vlaneseq
        %v4335 = vshrl.u32 %v4334, 7
        %v4336 = vsub.s32 %v4333, %v4335
        %v4337 = vrot.slane %v4329, %v4336
        %v4339 = vunpack.c.l.s4 1934713408
        %v4340 = vunpack.c.0.s8 %v4339
        %v4341 = vlaneseq
        %v4342 = vshrl.u32 %v4341, 7
        %v4343 = vsub.s32 %v4340, %v4342
        %v4344 = vrot.slane %v4330, %v4343
        %v4345 = vcombine.low %v4280, %v4296
        %v4346 = vcombine.high %v4280, %v4296
        %v4348 = vunpack.c.l.s4 1934713408
        %v4349 = vunpack.c.0.s8 %v4348
        %v4350 = vlaneseq
        %v4351 = vshrl.u32 %v4350, 7
        %v4352 = vsub.s32 %v4349, %v4351
        %v4353 = vrot.slane %v4345, %v4352
        %v4355 = vunpack.c.l.s4 1934713408
        %v4356 = vunpack.c.0.s8 %v4355
        %v4357 = vlaneseq
        %v4358 = vshrl.u32 %v4357, 7
        %v4359 = vsub.s32 %v4356, %v4358
        %v4360 = vrot.slane %v4346, %v4359
        %v4361 = vcombine.low %v4305, %v4321
        %v4362 = vcombine.high %v4305, %v4321
        %v4364 = vunpack.c.l.s4 1934713408
        %v4365 = vunpack.c.0.s8 %v4364
        %v4366 = vlaneseq
        %v4367 = vshrl.u32 %v4366, 7
        %v4368 = vsub.s32 %v4365, %v4367
        %v4369 = vrot.slane %v4361, %v4368
        %v4371 = vunpack.c.l.s4 1934713408
        %v4372 = vunpack.c.0.s8 %v4371
        %v4373 = vlaneseq
        %v4374 = vshrl.u32 %v4373, 7
        %v4375 = vsub.s32 %v4372, %v4374
        %v4376 = vrot.slane %v4362, %v4375
        %v4377 = vcombine.low %v4312, %v4328
        %v4378 = vcombine.high %v4312, %v4328
        %v4380 = vunpack.c.l.s4 1934713408
        %v4381 = vunpack.c.0.s8 %v4380
        %v4382 = vlaneseq
        %v4383 = vshrl.u32 %v4382, 7
        %v4384 = vsub.s32 %v4381, %v4383
        %v4385 = vrot.slane %v4377, %v4384
        %v4387 = vunpack.c.l.s4 1934713408
        %v4388 = vunpack.c.0.s8 %v4387
        %v4389 = vlaneseq
        %v4390 = vshrl.u32 %v4389, 7
        %v4391 = vsub.s32 %v4388, %v4390
        %v4392 = vrot.slane %v4378, %v4391
        %v4393 = vcombine.low %v4337, %v4369
        %v4394 = vcombine.high %v4337, %v4369
        %v4395 = vcombine.low %v4344, %v4376
        %v4396 = vcombine.high %v4344, %v4376
        %v4397 = vcombine.low %v4353, %v4385
        %v4398 = vcombine.high %v4353, %v4385
        %v4399 = vcombine.low %v4360, %v4392
        %v4400 = vcombine.high %v4360, %v4392
        %v4401 = vcombine.low %v3838, %v4204
        %v4402 = vcombine.high %v3838, %v4204
        %v4404 = vunpack.c.l.s4 1983009808
        %v4405 = vunpack.c.0.s8 %v4404
        %v4406 = vlaneseq
        %v4407 = vshrl.u32 %v4406, 7
        %v4408 = vsub.s32 %v4405, %v4407
        %v4409 = vrot.slane %v4401, %v4408
        %v4411 = vunpack.c.l.s4 1983009808
        %v4412 = vunpack.c.0.s8 %v4411
        %v4413 = vlaneseq
        %v4414 = vshrl.u32 %v4413, 7
        %v4415 = vsub.s32 %v4412, %v4414
        %v4416 = vrot.slane %v4402, %v4415
        %v4417 = vcombine.low %v4201, %v4207
        %v4418 = vcombine.high %v4201, %v4207
        %v4420 = vunpack.c.l.s4 1983009808
        %v4421 = vunpack.c.0.s8 %v4420
        %v4422 = vlaneseq
        %v4423 = vshrl.u32 %v4422, 7
        %v4424 = vsub.s32 %v4421, %v4423
        %v4425 = vrot.slane %v4417, %v4424
        %v4427 = vunpack.c.l.s4 1983009808
        %v4428 = vunpack.c.0.s8 %v4427
        %v4429 = vlaneseq
        %v4430 = vshrl.u32 %v4429, 7
        %v4431 = vsub.s32 %v4428, %v4430
        %v4432 = vrot.slane %v4418, %v4431
        %v4433 = vcombine.low %v4210, %v4216
        %v4434 = vcombine.high %v4210, %v4216
        %v4436 = vunpack.c.l.s4 1983009808
        %v4437 = vunpack.c.0.s8 %v4436
        %v4438 = vlaneseq
        %v4439 = vshrl.u32 %v4438, 7
        %v4440 = vsub.s32 %v4437, %v4439
        %v4441 = vrot.slane %v4433, %v4440
        %v4443 = vunpack.c.l.s4 1983009808
        %v4444 = vunpack.c.0.s8 %v4443
        %v4445 = vlaneseq
        %v4446 = vshrl.u32 %v4445, 7
        %v4447 = vsub.s32 %v4444, %v4446
        %v4448 = vrot.slane %v4434, %v4447
        %v4449 = vcombine.low %v4213, %v4219
        %v4450 = vcombine.high %v4213, %v4219
        %v4452 = vunpack.c.l.s4 1983009808
        %v4453 = vunpack.c.0.s8 %v4452
        %v4454 = vlaneseq
        %v4455 = vshrl.u32 %v4454, 7
        %v4456 = vsub.s32 %v4453, %v4455
        %v4457 = vrot.slane %v4449, %v4456
        %v4459 = vunpack.c.l.s4 1983009808
        %v4460 = vunpack.c.0.s8 %v4459
        %v4461 = vlaneseq
        %v4462 = vshrl.u32 %v4461, 7
        %v4463 = vsub.s32 %v4460, %v4462
        %v4464 = vrot.slane %v4450, %v4463
        %v4465 = vcombine.low %v4409, %v4425
        %v4466 = vcombine.high %v4409, %v4425
        %v4468 = vunpack.c.l.s4 1934713408
        %v4469 = vunpack.c.0.s8 %v4468
        %v4470 = vlaneseq
        %v4471 = vshrl.u32 %v4470, 7
        %v4472 = vsub.s32 %v4469, %v4471
        %v4473 = vrot.slane %v4465, %v4472
        %v4475 = vunpack.c.l.s4 1934713408
        %v4476 = vunpack.c.0.s8 %v4475
        %v4477 = vlaneseq
        %v4478 = vshrl.u32 %v4477, 7
        %v4479 = vsub.s32 %v4476, %v4478
        %v4480 = vrot.slane %v4466, %v4479
        %v4481 = vcombine.low %v4416, %v4432
        %v4482 = vcombine.high %v4416, %v4432
        %v4484 = vunpack.c.l.s4 1934713408
        %v4485 = vunpack.c.0.s8 %v4484
        %v4486 = vlaneseq
        %v4487 = vshrl.u32 %v4486, 7
        %v4488 = vsub.s32 %v4485, %v4487
        %v4489 = vrot.slane %v4481, %v4488
        %v4491 = vunpack.c.l.s4 1934713408
        %v4492 = vunpack.c.0.s8 %v4491
        %v4493 = vlaneseq
        %v4494 = vshrl.u32 %v4493, 7
        %v4495 = vsub.s32 %v4492, %v4494
        %v4496 = vrot.slane %v4482, %v4495
        %v4497 = vcombine.low %v4441, %v4457
        %v4498 = vcombine.high %v4441, %v4457
        %v4500 = vunpack.c.l.s4 1934713408
        %v4501 = vunpack.c.0.s8 %v4500
        %v4502 = vlaneseq
        %v4503 = vshrl.u32 %v4502, 7
        %v4504 = vsub.s32 %v4501, %v4503
        %v4505 = vrot.slane %v4497, %v4504
        %v4507 = vunpack.c.l.s4 1934713408
        %v4508 = vunpack.c.0.s8 %v4507
        %v4509 = vlaneseq
        %v4510 = vshrl.u32 %v4509, 7
        %v4511 = vsub.s32 %v4508, %v4510
        %v4512 = vrot.slane %v4498, %v4511
        %v4513 = vcombine.low %v4448, %v4464
        %v4514 = vcombine.high %v4448, %v4464
        %v4516 = vunpack.c.l.s4 1934713408
        %v4517 = vunpack.c.0.s8 %v4516
        %v4518 = vlaneseq
        %v4519 = vshrl.u32 %v4518, 7
        %v4520 = vsub.s32 %v4517, %v4519
        %v4521 = vrot.slane %v4513, %v4520
        %v4523 = vunpack.c.l.s4 1934713408
        %v4524 = vunpack.c.0.s8 %v4523
        %v4525 = vlaneseq
        %v4526 = vshrl.u32 %v4525, 7
        %v4527 = vsub.s32 %v4524, %v4526
        %v4528 = vrot.slane %v4514, %v4527
        %v4529 = vcombine.low %v4473, %v4505
        %v4530 = vcombine.high %v4473, %v4505
        %v4531 = vcombine.low %v4480, %v4512
        %v4532 = vcombine.high %v4480, %v4512
        %v4533 = vcombine.low %v4489, %v4521
        %v4534 = vcombine.high %v4489, %v4521
        %v4535 = vcombine.low %v4496, %v4528
        %v4536 = vcombine.high %v4496, %v4528
        %v4537 = vcombine.low %v3907, %v4226
        %v4538 = vcombine.high %v3907, %v4226
        %v4540 = vunpack.c.l.s4 1983009808
        %v4541 = vunpack.c.0.s8 %v4540
        %v4542 = vlaneseq
        %v4543 = vshrl.u32 %v4542, 7
        %v4544 = vsub.s32 %v4541, %v4543
        %v4545 = vrot.slane %v4537, %v4544
        %v4547 = vunpack.c.l.s4 1983009808
        %v4548 = vunpack.c.0.s8 %v4547
        %v4549 = vlaneseq
        %v4550 = vshrl.u32 %v4549, 7
        %v4551 = vsub.s32 %v4548, %v4550
        %v4552 = vrot.slane %v4538, %v4551
        %v4553 = vcombine.low %v4223, %v4229
        %v4554 = vcombine.high %v4223, %v4229
        %v4556 = vunpack.c.l.s4 1983009808
        %v4557 = vunpack.c.0.s8 %v4556
        %v4558 = vlaneseq
        %v4559 = vshrl.u32 %v4558, 7
        %v4560 = vsub.s32 %v4557, %v4559
        %v4561 = vrot.slane %v4553, %v4560
        %v4563 = vunpack.c.l.s4 1983009808
        %v4564 = vunpack.c.0.s8 %v4563
        %v4565 = vlaneseq
        %v4566 = vshrl.u32 %v4565, 7
        %v4567 = vsub.s32 %v4564, %v4566
        %v4568 = vrot.slane %v4554, %v4567
        %v4569 = vcombine.low %v4232, %v4238
        %v4570 = vcombine.high %v4232, %v4238
        %v4572 = vunpack.c.l.s4 1983009808
        %v4573 = vunpack.c.0.s8 %v4572
        %v4574 = vlaneseq
        %v4575 = vshrl.u32 %v4574, 7
        %v4576 = vsub.s32 %v4573, %v4575
        %v4577 = vrot.slane %v4569, %v4576
        %v4579 = vunpack.c.l.s4 1983009808
        %v4580 = vunpack.c.0.s8 %v4579
        %v4581 = vlaneseq
        %v4582 = vshrl.u32 %v4581, 7
        %v4583 = vsub.s32 %v4580, %v4582
        %v4584 = vrot.slane %v4570, %v4583
        %v4585 = vcombine.low %v4235, %v4241
        %v4586 = vcombine.high %v4235, %v4241
        %v4588 = vunpack.c.l.s4 1983009808
        %v4589 = vunpack.c.0.s8 %v4588
        %v4590 = vlaneseq
        %v4591 = vshrl.u32 %v4590, 7
        %v4592 = vsub.s32 %v4589, %v4591
        %v4593 = vrot.slane %v4585, %v4592
        %v4595 = vunpack.c.l.s4 1983009808
        %v4596 = vunpack.c.0.s8 %v4595
        %v4597 = vlaneseq
        %v4598 = vshrl.u32 %v4597, 7
        %v4599 = vsub.s32 %v4596, %v4598
        %v4600 = vrot.slane %v4586, %v4599
        %v4601 = vcombine.low %v4545, %v4561
        %v4602 = vcombine.high %v4545, %v4561
        %v4604 = vunpack.c.l.s4 1934713408
        %v4605 = vunpack.c.0.s8 %v4604
        %v4606 = vlaneseq
        %v4607 = vshrl.u32 %v4606, 7
        %v4608 = vsub.s32 %v4605, %v4607
        %v4609 = vrot.slane %v4601, %v4608
        %v4611 = vunpack.c.l.s4 1934713408
        %v4612 = vunpack.c.0.s8 %v4611
        %v4613 = vlaneseq
        %v4614 = vshrl.u32 %v4613, 7
        %v4615 = vsub.s32 %v4612, %v4614
        %v4616 = vrot.slane %v4602, %v4615
        %v4617 = vcombine.low %v4552, %v4568
        %v4618 = vcombine.high %v4552, %v4568
        %v4620 = vunpack.c.l.s4 1934713408
        %v4621 = vunpack.c.0.s8 %v4620
        %v4622 = vlaneseq
        %v4623 = vshrl.u32 %v4622, 7
        %v4624 = vsub.s32 %v4621, %v4623
        %v4625 = vrot.slane %v4617, %v4624
        %v4627 = vunpack.c.l.s4 1934713408
        %v4628 = vunpack.c.0.s8 %v4627
        %v4629 = vlaneseq
        %v4630 = vshrl.u32 %v4629, 7
        %v4631 = vsub.s32 %v4628, %v4630
        %v4632 = vrot.slane %v4618, %v4631
        %v4633 = vcombine.low %v4577, %v4593
        %v4634 = vcombine.high %v4577, %v4593
        %v4636 = vunpack.c.l.s4 1934713408
        %v4637 = vunpack.c.0.s8 %v4636
        %v4638 = vlaneseq
        %v4639 = vshrl.u32 %v4638, 7
        %v4640 = vsub.s32 %v4637, %v4639
        %v4641 = vrot.slane %v4633, %v4640
        %v4643 = vunpack.c.l.s4 1934713408
        %v4644 = vunpack.c.0.s8 %v4643
        %v4645 = vlaneseq
        %v4646 = vshrl.u32 %v4645, 7
        %v4647 = vsub.s32 %v4644, %v4646
        %v4648 = vrot.slane %v4634, %v4647
        %v4649 = vcombine.low %v4584, %v4600
        %v4650 = vcombine.high %v4584, %v4600
        %v4652 = vunpack.c.l.s4 1934713408
        %v4653 = vunpack.c.0.s8 %v4652
        %v4654 = vlaneseq
        %v4655 = vshrl.u32 %v4654, 7
        %v4656 = vsub.s32 %v4653, %v4655
        %v4657 = vrot.slane %v4649, %v4656
        %v4659 = vunpack.c.l.s4 1934713408
        %v4660 = vunpack.c.0.s8 %v4659
        %v4661 = vlaneseq
        %v4662 = vshrl.u32 %v4661, 7
        %v4663 = vsub.s32 %v4660, %v4662
        %v4664 = vrot.slane %v4650, %v4663
        %v4665 = vcombine.low %v4609, %v4641
        %v4666 = vcombine.high %v4609, %v4641
        %v4667 = vcombine.low %v4616, %v4648
        %v4668 = vcombine.high %v4616, %v4648
        %v4669 = vcombine.low %v4625, %v4657
        %v4670 = vcombine.high %v4625, %v4657
        %v4671 = vcombine.low %v4632, %v4664
        %v4672 = vcombine.high %v4632, %v4664
        %v4673 = vcombine.low %v3909, %v4248
        %v4674 = vcombine.high %v3909, %v4248
        %v4676 = vunpack.c.l.s4 1983009808
        %v4677 = vunpack.c.0.s8 %v4676
        %v4678 = vlaneseq
        %v4679 = vshrl.u32 %v4678, 7
        %v4680 = vsub.s32 %v4677, %v4679
        %v4681 = vrot.slane %v4673, %v4680
        %v4683 = vunpack.c.l.s4 1983009808
        %v4684 = vunpack.c.0.s8 %v4683
        %v4685 = vlaneseq
        %v4686 = vshrl.u32 %v4685, 7
        %v4687 = vsub.s32 %v4684, %v4686
        %v4688 = vrot.slane %v4674, %v4687
        %v4689 = vcombine.low %v4245, %v4251
        %v4690 = vcombine.high %v4245, %v4251
        %v4692 = vunpack.c.l.s4 1983009808
        %v4693 = vunpack.c.0.s8 %v4692
        %v4694 = vlaneseq
        %v4695 = vshrl.u32 %v4694, 7
        %v4696 = vsub.s32 %v4693, %v4695
        %v4697 = vrot.slane %v4689, %v4696
        %v4699 = vunpack.c.l.s4 1983009808
        %v4700 = vunpack.c.0.s8 %v4699
        %v4701 = vlaneseq
        %v4702 = vshrl.u32 %v4701, 7
        %v4703 = vsub.s32 %v4700, %v4702
        %v4704 = vrot.slane %v4690, %v4703
        %v4705 = vcombine.low %v4254, %v4260
        %v4706 = vcombine.high %v4254, %v4260
        %v4708 = vunpack.c.l.s4 1983009808
        %v4709 = vunpack.c.0.s8 %v4708
        %v4710 = vlaneseq
        %v4711 = vshrl.u32 %v4710, 7
        %v4712 = vsub.s32 %v4709, %v4711
        %v4713 = vrot.slane %v4705, %v4712
        %v4715 = vunpack.c.l.s4 1983009808
        %v4716 = vunpack.c.0.s8 %v4715
        %v4717 = vlaneseq
        %v4718 = vshrl.u32 %v4717, 7
        %v4719 = vsub.s32 %v4716, %v4718
        %v4720 = vrot.slane %v4706, %v4719
        %v4721 = vcombine.low %v4257, %v4263
        %v4722 = vcombine.high %v4257, %v4263
        %v4724 = vunpack.c.l.s4 1983009808
        %v4725 = vunpack.c.0.s8 %v4724
        %v4726 = vlaneseq
        %v4727 = vshrl.u32 %v4726, 7
        %v4728 = vsub.s32 %v4725, %v4727
        %v4729 = vrot.slane %v4721, %v4728
        %v4731 = vunpack.c.l.s4 1983009808
        %v4732 = vunpack.c.0.s8 %v4731
        %v4733 = vlaneseq
        %v4734 = vshrl.u32 %v4733, 7
        %v4735 = vsub.s32 %v4732, %v4734
        %v4736 = vrot.slane %v4722, %v4735
        %v4737 = vcombine.low %v4681, %v4697
        %v4738 = vcombine.high %v4681, %v4697
        %v4740 = vunpack.c.l.s4 1934713408
        %v4741 = vunpack.c.0.s8 %v4740
        %v4742 = vlaneseq
        %v4743 = vshrl.u32 %v4742, 7
        %v4744 = vsub.s32 %v4741, %v4743
        %v4745 = vrot.slane %v4737, %v4744
        %v4747 = vunpack.c.l.s4 1934713408
        %v4748 = vunpack.c.0.s8 %v4747
        %v4749 = vlaneseq
        %v4750 = vshrl.u32 %v4749, 7
        %v4751 = vsub.s32 %v4748, %v4750
        %v4752 = vrot.slane %v4738, %v4751
        %v4753 = vcombine.low %v4688, %v4704
        %v4754 = vcombine.high %v4688, %v4704
        %v4756 = vunpack.c.l.s4 1934713408
        %v4757 = vunpack.c.0.s8 %v4756
        %v4758 = vlaneseq
        %v4759 = vshrl.u32 %v4758, 7
        %v4760 = vsub.s32 %v4757, %v4759
        %v4761 = vrot.slane %v4753, %v4760
        %v4763 = vunpack.c.l.s4 1934713408
        %v4764 = vunpack.c.0.s8 %v4763
        %v4765 = vlaneseq
        %v4766 = vshrl.u32 %v4765, 7
        %v4767 = vsub.s32 %v4764, %v4766
        %v4768 = vrot.slane %v4754, %v4767
        %v4769 = vcombine.low %v4713, %v4729
        %v4770 = vcombine.high %v4713, %v4729
        %v4772 = vunpack.c.l.s4 1934713408
        %v4773 = vunpack.c.0.s8 %v4772
        %v4774 = vlaneseq
        %v4775 = vshrl.u32 %v4774, 7
        %v4776 = vsub.s32 %v4773, %v4775
        %v4777 = vrot.slane %v4769, %v4776
        %v4779 = vunpack.c.l.s4 1934713408
        %v4780 = vunpack.c.0.s8 %v4779
        %v4781 = vlaneseq
        %v4782 = vshrl.u32 %v4781, 7
        %v4783 = vsub.s32 %v4780, %v4782
        %v4784 = vrot.slane %v4770, %v4783
        %v4785 = vcombine.low %v4720, %v4736
        %v4786 = vcombine.high %v4720, %v4736
        %v4788 = vunpack.c.l.s4 1934713408
        %v4789 = vunpack.c.0.s8 %v4788
        %v4790 = vlaneseq
        %v4791 = vshrl.u32 %v4790, 7
        %v4792 = vsub.s32 %v4789, %v4791
        %v4793 = vrot.slane %v4785, %v4792
        %v4795 = vunpack.c.l.s4 1934713408
        %v4796 = vunpack.c.0.s8 %v4795
        %v4797 = vlaneseq
        %v4798 = vshrl.u32 %v4797, 7
        %v4799 = vsub.s32 %v4796, %v4798
        %v4800 = vrot.slane %v4786, %v4799
        %v4801 = vcombine.low %v4745, %v4777
        %v4802 = vcombine.high %v4745, %v4777
        %v4803 = vcombine.low %v4752, %v4784
        %v4804 = vcombine.high %v4752, %v4784
        %v4805 = vcombine.low %v4761, %v4793
        %v4806 = vcombine.high %v4761, %v4793
        %v4807 = vcombine.low %v4768, %v4800
        %v4808 = vcombine.high %v4768, %v4800
        %v4809 = vlaneseq
        %v4810 = vshrl.u32 %v4809, 7
        %v4811 = vsub.s32 0, %v4810
        %v4812 = vrot.slane %v4174, %v4811
        %4814 = vbcast.lane.b32.xlu0 %v4812, 256
        %v4815 = vpop.permute.xlu0 %4814
        %s4817 = sor.u32 256, 8
        %4818 = vbcast.lane.b32.xlu0 %v4812, %s4817
        %v4819 = vpop.permute.xlu0 %4818
        %s4821 = sor.u32 256, 16
        %4822 = vbcast.lane.b32.xlu0 %v4812, %s4821
        %v4823 = vpop.permute.xlu0 %4822
        %s4825 = sor.u32 256, 24
        %4826 = vbcast.lane.b32.xlu0 %v4812, %s4825
        %v4827 = vpop.permute.xlu0 %4826
        %v4828 = vlaneseq
        %v4829 = vshrl.u32 %v4828, 7
        %v4830 = vsub.s32 1, %v4829
        %v4831 = vrot.slane %v4174, %v4830
        %4833 = vbcast.lane.b32.xlu0 %v4831, 256
        %v4834 = vpop.permute.xlu0 %4833
        %s4836 = sor.u32 256, 8
        %4837 = vbcast.lane.b32.xlu0 %v4831, %s4836
        %v4838 = vpop.permute.xlu0 %4837
        %s4840 = sor.u32 256, 16
        %4841 = vbcast.lane.b32.xlu0 %v4831, %s4840
        %v4842 = vpop.permute.xlu0 %4841
        %s4844 = sor.u32 256, 24
        %4845 = vbcast.lane.b32.xlu0 %v4831, %s4844
        %v4846 = vpop.permute.xlu0 %4845
        %v4847 = vlaneseq
        %v4848 = vshrl.u32 %v4847, 7
        %v4849 = vsub.s32 2, %v4848
        %v4850 = vrot.slane %v4174, %v4849
        %4852 = vbcast.lane.b32.xlu0 %v4850, 256
        %v4853 = vpop.permute.xlu0 %4852
        %s4855 = sor.u32 256, 8
        %4856 = vbcast.lane.b32.xlu0 %v4850, %s4855
        %v4857 = vpop.permute.xlu0 %4856
        %s4859 = sor.u32 256, 16
        %4860 = vbcast.lane.b32.xlu0 %v4850, %s4859
        %v4861 = vpop.permute.xlu0 %4860
        %s4863 = sor.u32 256, 24
        %4864 = vbcast.lane.b32.xlu0 %v4850, %s4863
        %v4865 = vpop.permute.xlu0 %4864
        %v4866 = vlaneseq
        %v4867 = vshrl.u32 %v4866, 7
        %v4868 = vsub.s32 3, %v4867
        %v4869 = vrot.slane %v4174, %v4868
        %4871 = vbcast.lane.b32.xlu0 %v4869, 256
        %v4872 = vpop.permute.xlu0 %4871
        %s4874 = sor.u32 256, 8
        %4875 = vbcast.lane.b32.xlu0 %v4869, %s4874
        %v4876 = vpop.permute.xlu0 %4875
        %s4878 = sor.u32 256, 16
        %4879 = vbcast.lane.b32.xlu0 %v4869, %s4878
        %v4880 = vpop.permute.xlu0 %4879
        %s4882 = sor.u32 256, 24
        %4883 = vbcast.lane.b32.xlu0 %v4869, %s4882
        %v4884 = vpop.permute.xlu0 %4883
        %v4885 = vlaneseq
        %v4886 = vshrl.u32 %v4885, 7
        %v4887 = vsub.s32 4, %v4886
        %v4888 = vrot.slane %v4174, %v4887
        %4890 = vbcast.lane.b32.xlu0 %v4888, 256
        %v4891 = vpop.permute.xlu0 %4890
        %s4893 = sor.u32 256, 8
        %4894 = vbcast.lane.b32.xlu0 %v4888, %s4893
        %v4895 = vpop.permute.xlu0 %4894
        %s4897 = sor.u32 256, 16
        %4898 = vbcast.lane.b32.xlu0 %v4888, %s4897
        %v4899 = vpop.permute.xlu0 %4898
        %s4901 = sor.u32 256, 24
        %4902 = vbcast.lane.b32.xlu0 %v4888, %s4901
        %v4903 = vpop.permute.xlu0 %4902
        %v4904 = vlaneseq
        %v4905 = vshrl.u32 %v4904, 7
        %v4906 = vsub.s32 5, %v4905
        %v4907 = vrot.slane %v4174, %v4906
        %4909 = vbcast.lane.b32.xlu0 %v4907, 256
        %v4910 = vpop.permute.xlu0 %4909
        %s4912 = sor.u32 256, 8
        %4913 = vbcast.lane.b32.xlu0 %v4907, %s4912
        %v4914 = vpop.permute.xlu0 %4913
        %s4916 = sor.u32 256, 16
        %4917 = vbcast.lane.b32.xlu0 %v4907, %s4916
        %v4918 = vpop.permute.xlu0 %4917
        %s4920 = sor.u32 256, 24
        %4921 = vbcast.lane.b32.xlu0 %v4907, %s4920
        %v4922 = vpop.permute.xlu0 %4921
        %v4923 = vlaneseq
        %v4924 = vshrl.u32 %v4923, 7
        %v4925 = vsub.s32 6, %v4924
        %v4926 = vrot.slane %v4174, %v4925
        %4928 = vbcast.lane.b32.xlu0 %v4926, 256
        %v4929 = vpop.permute.xlu0 %4928
        %s4931 = sor.u32 256, 8
        %4932 = vbcast.lane.b32.xlu0 %v4926, %s4931
        %v4933 = vpop.permute.xlu0 %4932
        %s4935 = sor.u32 256, 16
        %4936 = vbcast.lane.b32.xlu0 %v4926, %s4935
        %v4937 = vpop.permute.xlu0 %4936
        %s4939 = sor.u32 256, 24
        %4940 = vbcast.lane.b32.xlu0 %v4926, %s4939
        %v4941 = vpop.permute.xlu0 %4940
        %v4942 = vlaneseq
        %v4943 = vshrl.u32 %v4942, 7
        %v4944 = vsub.s32 7, %v4943
        %v4945 = vrot.slane %v4174, %v4944
        %4947 = vbcast.lane.b32.xlu0 %v4945, 256
        %v4948 = vpop.permute.xlu0 %4947
        %s4950 = sor.u32 256, 8
        %4951 = vbcast.lane.b32.xlu0 %v4945, %s4950
        %v4952 = vpop.permute.xlu0 %4951
        %s4954 = sor.u32 256, 16
        %4955 = vbcast.lane.b32.xlu0 %v4945, %s4954
        %v4956 = vpop.permute.xlu0 %4955
        %s4958 = sor.u32 256, 24
        %4959 = vbcast.lane.b32.xlu0 %v4945, %s4958
        %v4960 = vpop.permute.xlu0 %4959
        %v4961 = vadd.f32 %v4393, %v4815
        %v4962 = vadd.f32 %v4529, %v4819
        %v4963 = vadd.f32 %v4665, %v4823
        %v4964 = vadd.f32 %v4801, %v4827
        %v4965 = vadd.f32 %v4394, %v4834
        %v4966 = vadd.f32 %v4530, %v4838
        %v4967 = vadd.f32 %v4666, %v4842
        %v4968 = vadd.f32 %v4802, %v4846
        %v4969 = vadd.f32 %v4395, %v4853
        %v4970 = vadd.f32 %v4531, %v4857
        %v4971 = vadd.f32 %v4667, %v4861
        %v4972 = vadd.f32 %v4803, %v4865
        %v4973 = vadd.f32 %v4396, %v4872
        %v4974 = vadd.f32 %v4532, %v4876
        %v4975 = vadd.f32 %v4668, %v4880
        %v4976 = vadd.f32 %v4804, %v4884
        %v4977 = vadd.f32 %v4397, %v4891
        %v4978 = vadd.f32 %v4533, %v4895
        %v4979 = vadd.f32 %v4669, %v4899
        %v4980 = vadd.f32 %v4805, %v4903
        %v4981 = vadd.f32 %v4398, %v4910
        %v4982 = vadd.f32 %v4534, %v4914
        %v4983 = vadd.f32 %v4670, %v4918
        %v4984 = vadd.f32 %v4806, %v4922
        %v4985 = vadd.f32 %v4399, %v4929
        %v4986 = vadd.f32 %v4535, %v4933
        %v4987 = vadd.f32 %v4671, %v4937
        %v4988 = vadd.f32 %v4807, %v4941
        %v4989 = vadd.f32 %v4400, %v4948
        %v4990 = vadd.f32 %v4536, %v4952
        %v4991 = vadd.f32 %v4672, %v4956
        %v4992 = vadd.f32 %v4808, %v4960
        %v4993 = vcombine.low %v4961, %v4969
        %v4994 = vcombine.high %v4961, %v4969
        %v4996 = vunpack.c.l.s4 1983009808
        %v4997 = vunpack.c.0.s8 %v4996
        %v4998 = vlaneseq
        %v4999 = vshrl.u32 %v4998, 7
        %v5000 = vsub.s32 %v4997, %v4999
        %v5001 = vrot.slane %v4993, %v5000
        %v5003 = vunpack.c.l.s4 1983009808
        %v5004 = vunpack.c.0.s8 %v5003
        %v5005 = vlaneseq
        %v5006 = vshrl.u32 %v5005, 7
        %v5007 = vsub.s32 %v5004, %v5006
        %v5008 = vrot.slane %v4994, %v5007
        %v5009 = vcombine.low %v4965, %v4973
        %v5010 = vcombine.high %v4965, %v4973
        %v5012 = vunpack.c.l.s4 1983009808
        %v5013 = vunpack.c.0.s8 %v5012
        %v5014 = vlaneseq
        %v5015 = vshrl.u32 %v5014, 7
        %v5016 = vsub.s32 %v5013, %v5015
        %v5017 = vrot.slane %v5009, %v5016
        %v5019 = vunpack.c.l.s4 1983009808
        %v5020 = vunpack.c.0.s8 %v5019
        %v5021 = vlaneseq
        %v5022 = vshrl.u32 %v5021, 7
        %v5023 = vsub.s32 %v5020, %v5022
        %v5024 = vrot.slane %v5010, %v5023
        %v5025 = vcombine.low %v4977, %v4985
        %v5026 = vcombine.high %v4977, %v4985
        %v5028 = vunpack.c.l.s4 1983009808
        %v5029 = vunpack.c.0.s8 %v5028
        %v5030 = vlaneseq
        %v5031 = vshrl.u32 %v5030, 7
        %v5032 = vsub.s32 %v5029, %v5031
        %v5033 = vrot.slane %v5025, %v5032
        %v5035 = vunpack.c.l.s4 1983009808
        %v5036 = vunpack.c.0.s8 %v5035
        %v5037 = vlaneseq
        %v5038 = vshrl.u32 %v5037, 7
        %v5039 = vsub.s32 %v5036, %v5038
        %v5040 = vrot.slane %v5026, %v5039
        %v5041 = vcombine.low %v4981, %v4989
        %v5042 = vcombine.high %v4981, %v4989
        %v5044 = vunpack.c.l.s4 1983009808
        %v5045 = vunpack.c.0.s8 %v5044
        %v5046 = vlaneseq
        %v5047 = vshrl.u32 %v5046, 7
        %v5048 = vsub.s32 %v5045, %v5047
        %v5049 = vrot.slane %v5041, %v5048
        %v5051 = vunpack.c.l.s4 1983009808
        %v5052 = vunpack.c.0.s8 %v5051
        %v5053 = vlaneseq
        %v5054 = vshrl.u32 %v5053, 7
        %v5055 = vsub.s32 %v5052, %v5054
        %v5056 = vrot.slane %v5042, %v5055
        %v5057 = vcombine.low %v5001, %v5017
        %v5058 = vcombine.high %v5001, %v5017
        %v5060 = vunpack.c.l.s4 1934713408
        %v5061 = vunpack.c.0.s8 %v5060
        %v5062 = vlaneseq
        %v5063 = vshrl.u32 %v5062, 7
        %v5064 = vsub.s32 %v5061, %v5063
        %v5065 = vrot.slane %v5057, %v5064
        %v5067 = vunpack.c.l.s4 1934713408
        %v5068 = vunpack.c.0.s8 %v5067
        %v5069 = vlaneseq
        %v5070 = vshrl.u32 %v5069, 7
        %v5071 = vsub.s32 %v5068, %v5070
        %v5072 = vrot.slane %v5058, %v5071
        %v5073 = vcombine.low %v5008, %v5024
        %v5074 = vcombine.high %v5008, %v5024
        %v5076 = vunpack.c.l.s4 1934713408
        %v5077 = vunpack.c.0.s8 %v5076
        %v5078 = vlaneseq
        %v5079 = vshrl.u32 %v5078, 7
        %v5080 = vsub.s32 %v5077, %v5079
        %v5081 = vrot.slane %v5073, %v5080
        %v5083 = vunpack.c.l.s4 1934713408
        %v5084 = vunpack.c.0.s8 %v5083
        %v5085 = vlaneseq
        %v5086 = vshrl.u32 %v5085, 7
        %v5087 = vsub.s32 %v5084, %v5086
        %v5088 = vrot.slane %v5074, %v5087
        %v5089 = vcombine.low %v5033, %v5049
        %v5090 = vcombine.high %v5033, %v5049
        %v5092 = vunpack.c.l.s4 1934713408
        %v5093 = vunpack.c.0.s8 %v5092
        %v5094 = vlaneseq
        %v5095 = vshrl.u32 %v5094, 7
        %v5096 = vsub.s32 %v5093, %v5095
        %v5097 = vrot.slane %v5089, %v5096
        %v5099 = vunpack.c.l.s4 1934713408
        %v5100 = vunpack.c.0.s8 %v5099
        %v5101 = vlaneseq
        %v5102 = vshrl.u32 %v5101, 7
        %v5103 = vsub.s32 %v5100, %v5102
        %v5104 = vrot.slane %v5090, %v5103
        %v5105 = vcombine.low %v5040, %v5056
        %v5106 = vcombine.high %v5040, %v5056
        %v5108 = vunpack.c.l.s4 1934713408
        %v5109 = vunpack.c.0.s8 %v5108
        %v5110 = vlaneseq
        %v5111 = vshrl.u32 %v5110, 7
        %v5112 = vsub.s32 %v5109, %v5111
        %v5113 = vrot.slane %v5105, %v5112
        %v5115 = vunpack.c.l.s4 1934713408
        %v5116 = vunpack.c.0.s8 %v5115
        %v5117 = vlaneseq
        %v5118 = vshrl.u32 %v5117, 7
        %v5119 = vsub.s32 %v5116, %v5118
        %v5120 = vrot.slane %v5106, %v5119
        %v5121 = vcombine.low %v5065, %v5097
        %v5122 = vcombine.high %v5065, %v5097
        %v5123 = vcombine.low %v5072, %v5104
        %v5124 = vcombine.high %v5072, %v5104
        %v5125 = vcombine.low %v5081, %v5113
        %v5126 = vcombine.high %v5081, %v5113
        %v5127 = vcombine.low %v5088, %v5120
        %v5128 = vcombine.high %v5088, %v5120
        %v5129 = vcombine.low %v4962, %v4970
        %v5130 = vcombine.high %v4962, %v4970
        %v5132 = vunpack.c.l.s4 1983009808
        %v5133 = vunpack.c.0.s8 %v5132
        %v5134 = vlaneseq
        %v5135 = vshrl.u32 %v5134, 7
        %v5136 = vsub.s32 %v5133, %v5135
        %v5137 = vrot.slane %v5129, %v5136
        %v5139 = vunpack.c.l.s4 1983009808
        %v5140 = vunpack.c.0.s8 %v5139
        %v5141 = vlaneseq
        %v5142 = vshrl.u32 %v5141, 7
        %v5143 = vsub.s32 %v5140, %v5142
        %v5144 = vrot.slane %v5130, %v5143
        %v5145 = vcombine.low %v4966, %v4974
        %v5146 = vcombine.high %v4966, %v4974
        %v5148 = vunpack.c.l.s4 1983009808
        %v5149 = vunpack.c.0.s8 %v5148
        %v5150 = vlaneseq
        %v5151 = vshrl.u32 %v5150, 7
        %v5152 = vsub.s32 %v5149, %v5151
        %v5153 = vrot.slane %v5145, %v5152
        %v5155 = vunpack.c.l.s4 1983009808
        %v5156 = vunpack.c.0.s8 %v5155
        %v5157 = vlaneseq
        %v5158 = vshrl.u32 %v5157, 7
        %v5159 = vsub.s32 %v5156, %v5158
        %v5160 = vrot.slane %v5146, %v5159
        %v5161 = vcombine.low %v4978, %v4986
        %v5162 = vcombine.high %v4978, %v4986
        %v5164 = vunpack.c.l.s4 1983009808
        %v5165 = vunpack.c.0.s8 %v5164
        %v5166 = vlaneseq
        %v5167 = vshrl.u32 %v5166, 7
        %v5168 = vsub.s32 %v5165, %v5167
        %v5169 = vrot.slane %v5161, %v5168
        %v5171 = vunpack.c.l.s4 1983009808
        %v5172 = vunpack.c.0.s8 %v5171
        %v5173 = vlaneseq
        %v5174 = vshrl.u32 %v5173, 7
        %v5175 = vsub.s32 %v5172, %v5174
        %v5176 = vrot.slane %v5162, %v5175
        %v5177 = vcombine.low %v4982, %v4990
        %v5178 = vcombine.high %v4982, %v4990
        %v5180 = vunpack.c.l.s4 1983009808
        %v5181 = vunpack.c.0.s8 %v5180
        %v5182 = vlaneseq
        %v5183 = vshrl.u32 %v5182, 7
        %v5184 = vsub.s32 %v5181, %v5183
        %v5185 = vrot.slane %v5177, %v5184
        %v5187 = vunpack.c.l.s4 1983009808
        %v5188 = vunpack.c.0.s8 %v5187
        %v5189 = vlaneseq
        %v5190 = vshrl.u32 %v5189, 7
        %v5191 = vsub.s32 %v5188, %v5190
        %v5192 = vrot.slane %v5178, %v5191
        %v5193 = vcombine.low %v5137, %v5153
        %v5194 = vcombine.high %v5137, %v5153
        %v5196 = vunpack.c.l.s4 1934713408
        %v5197 = vunpack.c.0.s8 %v5196
        %v5198 = vlaneseq
        %v5199 = vshrl.u32 %v5198, 7
        %v5200 = vsub.s32 %v5197, %v5199
        %v5201 = vrot.slane %v5193, %v5200
        %v5203 = vunpack.c.l.s4 1934713408
        %v5204 = vunpack.c.0.s8 %v5203
        %v5205 = vlaneseq
        %v5206 = vshrl.u32 %v5205, 7
        %v5207 = vsub.s32 %v5204, %v5206
        %v5208 = vrot.slane %v5194, %v5207
        %v5209 = vcombine.low %v5144, %v5160
        %v5210 = vcombine.high %v5144, %v5160
        %v5212 = vunpack.c.l.s4 1934713408
        %v5213 = vunpack.c.0.s8 %v5212
        %v5214 = vlaneseq
        %v5215 = vshrl.u32 %v5214, 7
        %v5216 = vsub.s32 %v5213, %v5215
        %v5217 = vrot.slane %v5209, %v5216
        %v5219 = vunpack.c.l.s4 1934713408
        %v5220 = vunpack.c.0.s8 %v5219
        %v5221 = vlaneseq
        %v5222 = vshrl.u32 %v5221, 7
        %v5223 = vsub.s32 %v5220, %v5222
        %v5224 = vrot.slane %v5210, %v5223
        %v5225 = vcombine.low %v5169, %v5185
        %v5226 = vcombine.high %v5169, %v5185
        %v5228 = vunpack.c.l.s4 1934713408
        %v5229 = vunpack.c.0.s8 %v5228
        %v5230 = vlaneseq
        %v5231 = vshrl.u32 %v5230, 7
        %v5232 = vsub.s32 %v5229, %v5231
        %v5233 = vrot.slane %v5225, %v5232
        %v5235 = vunpack.c.l.s4 1934713408
        %v5236 = vunpack.c.0.s8 %v5235
        %v5237 = vlaneseq
        %v5238 = vshrl.u32 %v5237, 7
        %v5239 = vsub.s32 %v5236, %v5238
        %v5240 = vrot.slane %v5226, %v5239
        %v5241 = vcombine.low %v5176, %v5192
        %v5242 = vcombine.high %v5176, %v5192
        %v5244 = vunpack.c.l.s4 1934713408
        %v5245 = vunpack.c.0.s8 %v5244
        %v5246 = vlaneseq
        %v5247 = vshrl.u32 %v5246, 7
        %v5248 = vsub.s32 %v5245, %v5247
        %v5249 = vrot.slane %v5241, %v5248
        %v5251 = vunpack.c.l.s4 1934713408
        %v5252 = vunpack.c.0.s8 %v5251
        %v5253 = vlaneseq
        %v5254 = vshrl.u32 %v5253, 7
        %v5255 = vsub.s32 %v5252, %v5254
        %v5256 = vrot.slane %v5242, %v5255
        %v5257 = vcombine.low %v5201, %v5233
        %v5258 = vcombine.high %v5201, %v5233
        %v5259 = vcombine.low %v5208, %v5240
        %v5260 = vcombine.high %v5208, %v5240
        %v5261 = vcombine.low %v5217, %v5249
        %v5262 = vcombine.high %v5217, %v5249
        %v5263 = vcombine.low %v5224, %v5256
        %v5264 = vcombine.high %v5224, %v5256
        %v5265 = vcombine.low %v4963, %v4971
        %v5266 = vcombine.high %v4963, %v4971
        %v5268 = vunpack.c.l.s4 1983009808
        %v5269 = vunpack.c.0.s8 %v5268
        %v5270 = vlaneseq
        %v5271 = vshrl.u32 %v5270, 7
        %v5272 = vsub.s32 %v5269, %v5271
        %v5273 = vrot.slane %v5265, %v5272
        %v5275 = vunpack.c.l.s4 1983009808
        %v5276 = vunpack.c.0.s8 %v5275
        %v5277 = vlaneseq
        %v5278 = vshrl.u32 %v5277, 7
        %v5279 = vsub.s32 %v5276, %v5278
        %v5280 = vrot.slane %v5266, %v5279
        %v5281 = vcombine.low %v4967, %v4975
        %v5282 = vcombine.high %v4967, %v4975
        %v5284 = vunpack.c.l.s4 1983009808
        %v5285 = vunpack.c.0.s8 %v5284
        %v5286 = vlaneseq
        %v5287 = vshrl.u32 %v5286, 7
        %v5288 = vsub.s32 %v5285, %v5287
        %v5289 = vrot.slane %v5281, %v5288
        %v5291 = vunpack.c.l.s4 1983009808
        %v5292 = vunpack.c.0.s8 %v5291
        %v5293 = vlaneseq
        %v5294 = vshrl.u32 %v5293, 7
        %v5295 = vsub.s32 %v5292, %v5294
        %v5296 = vrot.slane %v5282, %v5295
        %v5297 = vcombine.low %v4979, %v4987
        %v5298 = vcombine.high %v4979, %v4987
        %v5300 = vunpack.c.l.s4 1983009808
        %v5301 = vunpack.c.0.s8 %v5300
        %v5302 = vlaneseq
        %v5303 = vshrl.u32 %v5302, 7
        %v5304 = vsub.s32 %v5301, %v5303
        %v5305 = vrot.slane %v5297, %v5304
        %v5307 = vunpack.c.l.s4 1983009808
        %v5308 = vunpack.c.0.s8 %v5307
        %v5309 = vlaneseq
        %v5310 = vshrl.u32 %v5309, 7
        %v5311 = vsub.s32 %v5308, %v5310
        %v5312 = vrot.slane %v5298, %v5311
        %v5313 = vcombine.low %v4983, %v4991
        %v5314 = vcombine.high %v4983, %v4991
        %v5316 = vunpack.c.l.s4 1983009808
        %v5317 = vunpack.c.0.s8 %v5316
        %v5318 = vlaneseq
        %v5319 = vshrl.u32 %v5318, 7
        %v5320 = vsub.s32 %v5317, %v5319
        %v5321 = vrot.slane %v5313, %v5320
        %v5323 = vunpack.c.l.s4 1983009808
        %v5324 = vunpack.c.0.s8 %v5323
        %v5325 = vlaneseq
        %v5326 = vshrl.u32 %v5325, 7
        %v5327 = vsub.s32 %v5324, %v5326
        %v5328 = vrot.slane %v5314, %v5327
        %v5329 = vcombine.low %v5273, %v5289
        %v5330 = vcombine.high %v5273, %v5289
        %v5332 = vunpack.c.l.s4 1934713408
        %v5333 = vunpack.c.0.s8 %v5332
        %v5334 = vlaneseq
        %v5335 = vshrl.u32 %v5334, 7
        %v5336 = vsub.s32 %v5333, %v5335
        %v5337 = vrot.slane %v5329, %v5336
        %v5339 = vunpack.c.l.s4 1934713408
        %v5340 = vunpack.c.0.s8 %v5339
        %v5341 = vlaneseq
        %v5342 = vshrl.u32 %v5341, 7
        %v5343 = vsub.s32 %v5340, %v5342
        %v5344 = vrot.slane %v5330, %v5343
        %v5345 = vcombine.low %v5280, %v5296
        %v5346 = vcombine.high %v5280, %v5296
        %v5348 = vunpack.c.l.s4 1934713408
        %v5349 = vunpack.c.0.s8 %v5348
        %v5350 = vlaneseq
        %v5351 = vshrl.u32 %v5350, 7
        %v5352 = vsub.s32 %v5349, %v5351
        %v5353 = vrot.slane %v5345, %v5352
        %v5355 = vunpack.c.l.s4 1934713408
        %v5356 = vunpack.c.0.s8 %v5355
        %v5357 = vlaneseq
        %v5358 = vshrl.u32 %v5357, 7
        %v5359 = vsub.s32 %v5356, %v5358
        %v5360 = vrot.slane %v5346, %v5359
        %v5361 = vcombine.low %v5305, %v5321
        %v5362 = vcombine.high %v5305, %v5321
        %v5364 = vunpack.c.l.s4 1934713408
        %v5365 = vunpack.c.0.s8 %v5364
        %v5366 = vlaneseq
        %v5367 = vshrl.u32 %v5366, 7
        %v5368 = vsub.s32 %v5365, %v5367
        %v5369 = vrot.slane %v5361, %v5368
        %v5371 = vunpack.c.l.s4 1934713408
        %v5372 = vunpack.c.0.s8 %v5371
        %v5373 = vlaneseq
        %v5374 = vshrl.u32 %v5373, 7
        %v5375 = vsub.s32 %v5372, %v5374
        %v5376 = vrot.slane %v5362, %v5375
        %v5377 = vcombine.low %v5312, %v5328
        %v5378 = vcombine.high %v5312, %v5328
        %v5380 = vunpack.c.l.s4 1934713408
        %v5381 = vunpack.c.0.s8 %v5380
        %v5382 = vlaneseq
        %v5383 = vshrl.u32 %v5382, 7
        %v5384 = vsub.s32 %v5381, %v5383
        %v5385 = vrot.slane %v5377, %v5384
        %v5387 = vunpack.c.l.s4 1934713408
        %v5388 = vunpack.c.0.s8 %v5387
        %v5389 = vlaneseq
        %v5390 = vshrl.u32 %v5389, 7
        %v5391 = vsub.s32 %v5388, %v5390
        %v5392 = vrot.slane %v5378, %v5391
        %v5393 = vcombine.low %v5337, %v5369
        %v5394 = vcombine.high %v5337, %v5369
        %v5395 = vcombine.low %v5344, %v5376
        %v5396 = vcombine.high %v5344, %v5376
        %v5397 = vcombine.low %v5353, %v5385
        %v5398 = vcombine.high %v5353, %v5385
        %v5399 = vcombine.low %v5360, %v5392
        %v5400 = vcombine.high %v5360, %v5392
        %v5401 = vcombine.low %v4964, %v4972
        %v5402 = vcombine.high %v4964, %v4972
        %v5404 = vunpack.c.l.s4 1983009808
        %v5405 = vunpack.c.0.s8 %v5404
        %v5406 = vlaneseq
        %v5407 = vshrl.u32 %v5406, 7
        %v5408 = vsub.s32 %v5405, %v5407
        %v5409 = vrot.slane %v5401, %v5408
        %v5411 = vunpack.c.l.s4 1983009808
        %v5412 = vunpack.c.0.s8 %v5411
        %v5413 = vlaneseq
        %v5414 = vshrl.u32 %v5413, 7
        %v5415 = vsub.s32 %v5412, %v5414
        %v5416 = vrot.slane %v5402, %v5415
        %v5417 = vcombine.low %v4968, %v4976
        %v5418 = vcombine.high %v4968, %v4976
        %v5420 = vunpack.c.l.s4 1983009808
        %v5421 = vunpack.c.0.s8 %v5420
        %v5422 = vlaneseq
        %v5423 = vshrl.u32 %v5422, 7
        %v5424 = vsub.s32 %v5421, %v5423
        %v5425 = vrot.slane %v5417, %v5424
        %v5427 = vunpack.c.l.s4 1983009808
        %v5428 = vunpack.c.0.s8 %v5427
        %v5429 = vlaneseq
        %v5430 = vshrl.u32 %v5429, 7
        %v5431 = vsub.s32 %v5428, %v5430
        %v5432 = vrot.slane %v5418, %v5431
        %v5433 = vcombine.low %v4980, %v4988
        %v5434 = vcombine.high %v4980, %v4988
        %v5436 = vunpack.c.l.s4 1983009808
        %v5437 = vunpack.c.0.s8 %v5436
        %v5438 = vlaneseq
        %v5439 = vshrl.u32 %v5438, 7
        %v5440 = vsub.s32 %v5437, %v5439
        %v5441 = vrot.slane %v5433, %v5440
        %v5443 = vunpack.c.l.s4 1983009808
        %v5444 = vunpack.c.0.s8 %v5443
        %v5445 = vlaneseq
        %v5446 = vshrl.u32 %v5445, 7
        %v5447 = vsub.s32 %v5444, %v5446
        %v5448 = vrot.slane %v5434, %v5447
        %v5449 = vcombine.low %v4984, %v4992
        %v5450 = vcombine.high %v4984, %v4992
        %v5452 = vunpack.c.l.s4 1983009808
        %v5453 = vunpack.c.0.s8 %v5452
        %v5454 = vlaneseq
        %v5455 = vshrl.u32 %v5454, 7
        %v5456 = vsub.s32 %v5453, %v5455
        %v5457 = vrot.slane %v5449, %v5456
        %v5459 = vunpack.c.l.s4 1983009808
        %v5460 = vunpack.c.0.s8 %v5459
        %v5461 = vlaneseq
        %v5462 = vshrl.u32 %v5461, 7
        %v5463 = vsub.s32 %v5460, %v5462
        %v5464 = vrot.slane %v5450, %v5463
        %v5465 = vcombine.low %v5409, %v5425
        %v5466 = vcombine.high %v5409, %v5425
        %v5468 = vunpack.c.l.s4 1934713408
        %v5469 = vunpack.c.0.s8 %v5468
        %v5470 = vlaneseq
        %v5471 = vshrl.u32 %v5470, 7
        %v5472 = vsub.s32 %v5469, %v5471
        %v5473 = vrot.slane %v5465, %v5472
        %v5475 = vunpack.c.l.s4 1934713408
        %v5476 = vunpack.c.0.s8 %v5475
        %v5477 = vlaneseq
        %v5478 = vshrl.u32 %v5477, 7
        %v5479 = vsub.s32 %v5476, %v5478
        %v5480 = vrot.slane %v5466, %v5479
        %v5481 = vcombine.low %v5416, %v5432
        %v5482 = vcombine.high %v5416, %v5432
        %v5484 = vunpack.c.l.s4 1934713408
        %v5485 = vunpack.c.0.s8 %v5484
        %v5486 = vlaneseq
        %v5487 = vshrl.u32 %v5486, 7
        %v5488 = vsub.s32 %v5485, %v5487
        %v5489 = vrot.slane %v5481, %v5488
        %v5491 = vunpack.c.l.s4 1934713408
        %v5492 = vunpack.c.0.s8 %v5491
        %v5493 = vlaneseq
        %v5494 = vshrl.u32 %v5493, 7
        %v5495 = vsub.s32 %v5492, %v5494
        %v5496 = vrot.slane %v5482, %v5495
        %v5497 = vcombine.low %v5441, %v5457
        %v5498 = vcombine.high %v5441, %v5457
        %v5500 = vunpack.c.l.s4 1934713408
        %v5501 = vunpack.c.0.s8 %v5500
        %v5502 = vlaneseq
        %v5503 = vshrl.u32 %v5502, 7
        %v5504 = vsub.s32 %v5501, %v5503
        %v5505 = vrot.slane %v5497, %v5504
        %v5507 = vunpack.c.l.s4 1934713408
        %v5508 = vunpack.c.0.s8 %v5507
        %v5509 = vlaneseq
        %v5510 = vshrl.u32 %v5509, 7
        %v5511 = vsub.s32 %v5508, %v5510
        %v5512 = vrot.slane %v5498, %v5511
        %v5513 = vcombine.low %v5448, %v5464
        %v5514 = vcombine.high %v5448, %v5464
        %v5516 = vunpack.c.l.s4 1934713408
        %v5517 = vunpack.c.0.s8 %v5516
        %v5518 = vlaneseq
        %v5519 = vshrl.u32 %v5518, 7
        %v5520 = vsub.s32 %v5517, %v5519
        %v5521 = vrot.slane %v5513, %v5520
        %v5523 = vunpack.c.l.s4 1934713408
        %v5524 = vunpack.c.0.s8 %v5523
        %v5525 = vlaneseq
        %v5526 = vshrl.u32 %v5525, 7
        %v5527 = vsub.s32 %v5524, %v5526
        %v5528 = vrot.slane %v5514, %v5527
        %v5529 = vcombine.low %v5473, %v5505
        %v5530 = vcombine.high %v5473, %v5505
        %v5531 = vcombine.low %v5480, %v5512
        %v5532 = vcombine.high %v5480, %v5512
        %v5533 = vcombine.low %v5489, %v5521
        %v5534 = vcombine.high %v5489, %v5521
        %v5535 = vcombine.low %v5496, %v5528
        %v5536 = vcombine.high %v5496, %v5528
        %5538 = vrot.lane.b32.xlu0 %v5122, 16
        %v5539 = vpop.permute.xlu0 %5538
        %5542 = vrot.lane.b32.xlu0 %v5123, 32
        %v5543 = vpop.permute.xlu0 %5542
        %5546 = vrot.lane.b32.xlu0 %v5124, 48
        %v5547 = vpop.permute.xlu0 %5546
        %5550 = vrot.lane.b32.xlu0 %v5125, 64
        %v5551 = vpop.permute.xlu0 %5550
        %5554 = vrot.lane.b32.xlu0 %v5126, 80
        %v5555 = vpop.permute.xlu0 %5554
        %5558 = vrot.lane.b32.xlu0 %v5127, 96
        %v5559 = vpop.permute.xlu0 %5558
        %5562 = vrot.lane.b32.xlu0 %v5128, 112
        %v5563 = vpop.permute.xlu0 %5562
        %5566 = vrot.lane.b32.xlu0 %v5258, 16
        %v5567 = vpop.permute.xlu0 %5566
        %5570 = vrot.lane.b32.xlu0 %v5259, 32
        %v5571 = vpop.permute.xlu0 %5570
        %5574 = vrot.lane.b32.xlu0 %v5260, 48
        %v5575 = vpop.permute.xlu0 %5574
        %5578 = vrot.lane.b32.xlu0 %v5261, 64
        %v5579 = vpop.permute.xlu0 %5578
        %5582 = vrot.lane.b32.xlu0 %v5262, 80
        %v5583 = vpop.permute.xlu0 %5582
        %5586 = vrot.lane.b32.xlu0 %v5263, 96
        %v5587 = vpop.permute.xlu0 %5586
        %5590 = vrot.lane.b32.xlu0 %v5264, 112
        %v5591 = vpop.permute.xlu0 %5590
        %5594 = vrot.lane.b32.xlu0 %v5394, 16
        %v5595 = vpop.permute.xlu0 %5594
        %5598 = vrot.lane.b32.xlu0 %v5395, 32
        %v5599 = vpop.permute.xlu0 %5598
        %5602 = vrot.lane.b32.xlu0 %v5396, 48
        %v5603 = vpop.permute.xlu0 %5602
        %5606 = vrot.lane.b32.xlu0 %v5397, 64
        %v5607 = vpop.permute.xlu0 %5606
        %5610 = vrot.lane.b32.xlu0 %v5398, 80
        %v5611 = vpop.permute.xlu0 %5610
        %5614 = vrot.lane.b32.xlu0 %v5399, 96
        %v5615 = vpop.permute.xlu0 %5614
        %5618 = vrot.lane.b32.xlu0 %v5400, 112
        %v5619 = vpop.permute.xlu0 %5618
        %5622 = vrot.lane.b32.xlu0 %v5530, 16
        %v5623 = vpop.permute.xlu0 %5622
        %5626 = vrot.lane.b32.xlu0 %v5531, 32
        %v5627 = vpop.permute.xlu0 %5626
        %5630 = vrot.lane.b32.xlu0 %v5532, 48
        %v5631 = vpop.permute.xlu0 %5630
        %5634 = vrot.lane.b32.xlu0 %v5533, 64
        %v5635 = vpop.permute.xlu0 %5634
        %5638 = vrot.lane.b32.xlu0 %v5534, 80
        %v5639 = vpop.permute.xlu0 %5638
        %5642 = vrot.lane.b32.xlu0 %v5535, 96
        %v5643 = vpop.permute.xlu0 %5642
        %5646 = vrot.lane.b32.xlu0 %v5536, 112
        %v5647 = vpop.permute.xlu0 %5646
        %v5649 = vsel %vm994, %v5121, %v5539
        %v5650 = vsel %vm2996, %v5649, %v5543
        %v5651 = vsel %vm2998, %v5650, %v5547
        %v5652 = vsel %vm3000, %v5651, %v5551
        %v5653 = vsel %vm3002, %v5652, %v5555
        %v5654 = vsel %vm3004, %v5653, %v5559
        %v5655 = vsel %vm3006, %v5654, %v5563
        %v5656 = vsel %vm994, %v5257, %v5567
        %v5657 = vsel %vm2996, %v5656, %v5571
        %v5658 = vsel %vm2998, %v5657, %v5575
        %v5659 = vsel %vm3000, %v5658, %v5579
        %v5660 = vsel %vm3002, %v5659, %v5583
        %v5661 = vsel %vm3004, %v5660, %v5587
        %v5662 = vsel %vm3006, %v5661, %v5591
        %v5663 = vsel %vm994, %v5393, %v5595
        %v5664 = vsel %vm2996, %v5663, %v5599
        %v5665 = vsel %vm2998, %v5664, %v5603
        %v5666 = vsel %vm3000, %v5665, %v5607
        %v5667 = vsel %vm3002, %v5666, %v5611
        %v5668 = vsel %vm3004, %v5667, %v5615
        %v5669 = vsel %vm3006, %v5668, %v5619
        %v5670 = vsel %vm994, %v5529, %v5623
        %v5671 = vsel %vm2996, %v5670, %v5627
        %v5672 = vsel %vm2998, %v5671, %v5631
        %v5673 = vsel %vm3000, %v5672, %v5635
        %v5674 = vsel %vm3002, %v5673, %v5639
        %v5675 = vsel %vm3004, %v5674, %v5643
        %v5676 = vsel %vm3006, %v5675, %v5647
        %v5677 = vmax.f32 %v5655, 0.0
        %v5678 = vmax.f32 %v5662, 0.0
        %v5679 = vmax.f32 %v5669, 0.0
        %v5680 = vmax.f32 %v5676, 0.0
        %5682 = vrot.lane.b32.xlu0 %v5677, 112
        %v5683 = vpop.permute.xlu0 %5682
        %5685 = vrot.lane.b32.xlu0 %v5677, 96
        %v5686 = vpop.permute.xlu0 %5685
        %5688 = vrot.lane.b32.xlu0 %v5677, 80
        %v5689 = vpop.permute.xlu0 %5688
        %5691 = vrot.lane.b32.xlu0 %v5677, 64
        %v5692 = vpop.permute.xlu0 %5691
        %5694 = vrot.lane.b32.xlu0 %v5677, 48
        %v5695 = vpop.permute.xlu0 %5694
        %5697 = vrot.lane.b32.xlu0 %v5677, 32
        %v5698 = vpop.permute.xlu0 %5697
        %5700 = vrot.lane.b32.xlu0 %v5677, 16
        %v5701 = vpop.permute.xlu0 %5700
        %5704 = vrot.lane.b32.xlu0 %v5678, 112
        %v5705 = vpop.permute.xlu0 %5704
        %5707 = vrot.lane.b32.xlu0 %v5678, 96
        %v5708 = vpop.permute.xlu0 %5707
        %5710 = vrot.lane.b32.xlu0 %v5678, 80
        %v5711 = vpop.permute.xlu0 %5710
        %5713 = vrot.lane.b32.xlu0 %v5678, 64
        %v5714 = vpop.permute.xlu0 %5713
        %5716 = vrot.lane.b32.xlu0 %v5678, 48
        %v5717 = vpop.permute.xlu0 %5716
        %5719 = vrot.lane.b32.xlu0 %v5678, 32
        %v5720 = vpop.permute.xlu0 %5719
        %5722 = vrot.lane.b32.xlu0 %v5678, 16
        %v5723 = vpop.permute.xlu0 %5722
        %5726 = vrot.lane.b32.xlu0 %v5679, 112
        %v5727 = vpop.permute.xlu0 %5726
        %5729 = vrot.lane.b32.xlu0 %v5679, 96
        %v5730 = vpop.permute.xlu0 %5729
        %5732 = vrot.lane.b32.xlu0 %v5679, 80
        %v5733 = vpop.permute.xlu0 %5732
        %5735 = vrot.lane.b32.xlu0 %v5679, 64
        %v5736 = vpop.permute.xlu0 %5735
        %5738 = vrot.lane.b32.xlu0 %v5679, 48
        %v5739 = vpop.permute.xlu0 %5738
        %5741 = vrot.lane.b32.xlu0 %v5679, 32
        %v5742 = vpop.permute.xlu0 %5741
        %5744 = vrot.lane.b32.xlu0 %v5679, 16
        %v5745 = vpop.permute.xlu0 %5744
        %5748 = vrot.lane.b32.xlu0 %v5680, 112
        %v5749 = vpop.permute.xlu0 %5748
        %5751 = vrot.lane.b32.xlu0 %v5680, 96
        %v5752 = vpop.permute.xlu0 %5751
        %5754 = vrot.lane.b32.xlu0 %v5680, 80
        %v5755 = vpop.permute.xlu0 %5754
        %5757 = vrot.lane.b32.xlu0 %v5680, 64
        %v5758 = vpop.permute.xlu0 %5757
        %5760 = vrot.lane.b32.xlu0 %v5680, 48
        %v5761 = vpop.permute.xlu0 %5760
        %5763 = vrot.lane.b32.xlu0 %v5680, 32
        %v5764 = vpop.permute.xlu0 %5763
        %5766 = vrot.lane.b32.xlu0 %v5680, 16
        %v5767 = vpop.permute.xlu0 %5766
        %v5769 = vcombine.low %v5677, %v5686
        %v5770 = vcombine.high %v5677, %v5686
        %v5772 = vunpack.c.l.s4 1983009808
        %v5773 = vunpack.c.0.s8 %v5772
        %v5774 = vlaneseq
        %v5775 = vshrl.u32 %v5774, 7
        %v5776 = vsub.s32 %v5773, %v5775
        %v5777 = vrot.slane %v5769, %v5776
        %v5779 = vunpack.c.l.s4 1983009808
        %v5780 = vunpack.c.0.s8 %v5779
        %v5781 = vlaneseq
        %v5782 = vshrl.u32 %v5781, 7
        %v5783 = vsub.s32 %v5780, %v5782
        %v5784 = vrot.slane %v5770, %v5783
        %v5785 = vcombine.low %v5683, %v5689
        %v5786 = vcombine.high %v5683, %v5689
        %v5788 = vunpack.c.l.s4 1983009808
        %v5789 = vunpack.c.0.s8 %v5788
        %v5790 = vlaneseq
        %v5791 = vshrl.u32 %v5790, 7
        %v5792 = vsub.s32 %v5789, %v5791
        %v5793 = vrot.slane %v5785, %v5792
        %v5795 = vunpack.c.l.s4 1983009808
        %v5796 = vunpack.c.0.s8 %v5795
        %v5797 = vlaneseq
        %v5798 = vshrl.u32 %v5797, 7
        %v5799 = vsub.s32 %v5796, %v5798
        %v5800 = vrot.slane %v5786, %v5799
        %v5801 = vcombine.low %v5692, %v5698
        %v5802 = vcombine.high %v5692, %v5698
        %v5804 = vunpack.c.l.s4 1983009808
        %v5805 = vunpack.c.0.s8 %v5804
        %v5806 = vlaneseq
        %v5807 = vshrl.u32 %v5806, 7
        %v5808 = vsub.s32 %v5805, %v5807
        %v5809 = vrot.slane %v5801, %v5808
        %v5811 = vunpack.c.l.s4 1983009808
        %v5812 = vunpack.c.0.s8 %v5811
        %v5813 = vlaneseq
        %v5814 = vshrl.u32 %v5813, 7
        %v5815 = vsub.s32 %v5812, %v5814
        %v5816 = vrot.slane %v5802, %v5815
        %v5817 = vcombine.low %v5695, %v5701
        %v5818 = vcombine.high %v5695, %v5701
        %v5820 = vunpack.c.l.s4 1983009808
        %v5821 = vunpack.c.0.s8 %v5820
        %v5822 = vlaneseq
        %v5823 = vshrl.u32 %v5822, 7
        %v5824 = vsub.s32 %v5821, %v5823
        %v5825 = vrot.slane %v5817, %v5824
        %v5827 = vunpack.c.l.s4 1983009808
        %v5828 = vunpack.c.0.s8 %v5827
        %v5829 = vlaneseq
        %v5830 = vshrl.u32 %v5829, 7
        %v5831 = vsub.s32 %v5828, %v5830
        %v5832 = vrot.slane %v5818, %v5831
        %v5833 = vcombine.low %v5777, %v5793
        %v5834 = vcombine.high %v5777, %v5793
        %v5836 = vunpack.c.l.s4 1934713408
        %v5837 = vunpack.c.0.s8 %v5836
        %v5838 = vlaneseq
        %v5839 = vshrl.u32 %v5838, 7
        %v5840 = vsub.s32 %v5837, %v5839
        %v5841 = vrot.slane %v5833, %v5840
        %v5843 = vunpack.c.l.s4 1934713408
        %v5844 = vunpack.c.0.s8 %v5843
        %v5845 = vlaneseq
        %v5846 = vshrl.u32 %v5845, 7
        %v5847 = vsub.s32 %v5844, %v5846
        %v5848 = vrot.slane %v5834, %v5847
        %v5849 = vcombine.low %v5784, %v5800
        %v5850 = vcombine.high %v5784, %v5800
        %v5852 = vunpack.c.l.s4 1934713408
        %v5853 = vunpack.c.0.s8 %v5852
        %v5854 = vlaneseq
        %v5855 = vshrl.u32 %v5854, 7
        %v5856 = vsub.s32 %v5853, %v5855
        %v5857 = vrot.slane %v5849, %v5856
        %v5859 = vunpack.c.l.s4 1934713408
        %v5860 = vunpack.c.0.s8 %v5859
        %v5861 = vlaneseq
        %v5862 = vshrl.u32 %v5861, 7
        %v5863 = vsub.s32 %v5860, %v5862
        %v5864 = vrot.slane %v5850, %v5863
        %v5865 = vcombine.low %v5809, %v5825
        %v5866 = vcombine.high %v5809, %v5825
        %v5868 = vunpack.c.l.s4 1934713408
        %v5869 = vunpack.c.0.s8 %v5868
        %v5870 = vlaneseq
        %v5871 = vshrl.u32 %v5870, 7
        %v5872 = vsub.s32 %v5869, %v5871
        %v5873 = vrot.slane %v5865, %v5872
        %v5875 = vunpack.c.l.s4 1934713408
        %v5876 = vunpack.c.0.s8 %v5875
        %v5877 = vlaneseq
        %v5878 = vshrl.u32 %v5877, 7
        %v5879 = vsub.s32 %v5876, %v5878
        %v5880 = vrot.slane %v5866, %v5879
        %v5881 = vcombine.low %v5816, %v5832
        %v5882 = vcombine.high %v5816, %v5832
        %v5884 = vunpack.c.l.s4 1934713408
        %v5885 = vunpack.c.0.s8 %v5884
        %v5886 = vlaneseq
        %v5887 = vshrl.u32 %v5886, 7
        %v5888 = vsub.s32 %v5885, %v5887
        %v5889 = vrot.slane %v5881, %v5888
        %v5891 = vunpack.c.l.s4 1934713408
        %v5892 = vunpack.c.0.s8 %v5891
        %v5893 = vlaneseq
        %v5894 = vshrl.u32 %v5893, 7
        %v5895 = vsub.s32 %v5892, %v5894
        %v5896 = vrot.slane %v5882, %v5895
        %v5897 = vcombine.low %v5841, %v5873
        %v5898 = vcombine.high %v5841, %v5873
        %v5899 = vcombine.low %v5848, %v5880
        %v5900 = vcombine.high %v5848, %v5880
        %v5901 = vcombine.low %v5857, %v5889
        %v5902 = vcombine.high %v5857, %v5889
        %v5903 = vcombine.low %v5864, %v5896
        %v5904 = vcombine.high %v5864, %v5896
        %v5905 = vcombine.low %v5678, %v5708
        %v5906 = vcombine.high %v5678, %v5708
        %v5908 = vunpack.c.l.s4 1983009808
        %v5909 = vunpack.c.0.s8 %v5908
        %v5910 = vlaneseq
        %v5911 = vshrl.u32 %v5910, 7
        %v5912 = vsub.s32 %v5909, %v5911
        %v5913 = vrot.slane %v5905, %v5912
        %v5915 = vunpack.c.l.s4 1983009808
        %v5916 = vunpack.c.0.s8 %v5915
        %v5917 = vlaneseq
        %v5918 = vshrl.u32 %v5917, 7
        %v5919 = vsub.s32 %v5916, %v5918
        %v5920 = vrot.slane %v5906, %v5919
        %v5921 = vcombine.low %v5705, %v5711
        %v5922 = vcombine.high %v5705, %v5711
        %v5924 = vunpack.c.l.s4 1983009808
        %v5925 = vunpack.c.0.s8 %v5924
        %v5926 = vlaneseq
        %v5927 = vshrl.u32 %v5926, 7
        %v5928 = vsub.s32 %v5925, %v5927
        %v5929 = vrot.slane %v5921, %v5928
        %v5931 = vunpack.c.l.s4 1983009808
        %v5932 = vunpack.c.0.s8 %v5931
        %v5933 = vlaneseq
        %v5934 = vshrl.u32 %v5933, 7
        %v5935 = vsub.s32 %v5932, %v5934
        %v5936 = vrot.slane %v5922, %v5935
        %v5937 = vcombine.low %v5714, %v5720
        %v5938 = vcombine.high %v5714, %v5720
        %v5940 = vunpack.c.l.s4 1983009808
        %v5941 = vunpack.c.0.s8 %v5940
        %v5942 = vlaneseq
        %v5943 = vshrl.u32 %v5942, 7
        %v5944 = vsub.s32 %v5941, %v5943
        %v5945 = vrot.slane %v5937, %v5944
        %v5947 = vunpack.c.l.s4 1983009808
        %v5948 = vunpack.c.0.s8 %v5947
        %v5949 = vlaneseq
        %v5950 = vshrl.u32 %v5949, 7
        %v5951 = vsub.s32 %v5948, %v5950
        %v5952 = vrot.slane %v5938, %v5951
        %v5953 = vcombine.low %v5717, %v5723
        %v5954 = vcombine.high %v5717, %v5723
        %v5956 = vunpack.c.l.s4 1983009808
        %v5957 = vunpack.c.0.s8 %v5956
        %v5958 = vlaneseq
        %v5959 = vshrl.u32 %v5958, 7
        %v5960 = vsub.s32 %v5957, %v5959
        %v5961 = vrot.slane %v5953, %v5960
        %v5963 = vunpack.c.l.s4 1983009808
        %v5964 = vunpack.c.0.s8 %v5963
        %v5965 = vlaneseq
        %v5966 = vshrl.u32 %v5965, 7
        %v5967 = vsub.s32 %v5964, %v5966
        %v5968 = vrot.slane %v5954, %v5967
        %v5969 = vcombine.low %v5913, %v5929
        %v5970 = vcombine.high %v5913, %v5929
        %v5972 = vunpack.c.l.s4 1934713408
        %v5973 = vunpack.c.0.s8 %v5972
        %v5974 = vlaneseq
        %v5975 = vshrl.u32 %v5974, 7
        %v5976 = vsub.s32 %v5973, %v5975
        %v5977 = vrot.slane %v5969, %v5976
        %v5979 = vunpack.c.l.s4 1934713408
        %v5980 = vunpack.c.0.s8 %v5979
        %v5981 = vlaneseq
        %v5982 = vshrl.u32 %v5981, 7
        %v5983 = vsub.s32 %v5980, %v5982
        %v5984 = vrot.slane %v5970, %v5983
        %v5985 = vcombine.low %v5920, %v5936
        %v5986 = vcombine.high %v5920, %v5936
        %v5988 = vunpack.c.l.s4 1934713408
        %v5989 = vunpack.c.0.s8 %v5988
        %v5990 = vlaneseq
        %v5991 = vshrl.u32 %v5990, 7
        %v5992 = vsub.s32 %v5989, %v5991
        %v5993 = vrot.slane %v5985, %v5992
        %v5995 = vunpack.c.l.s4 1934713408
        %v5996 = vunpack.c.0.s8 %v5995
        %v5997 = vlaneseq
        %v5998 = vshrl.u32 %v5997, 7
        %v5999 = vsub.s32 %v5996, %v5998
        %v6000 = vrot.slane %v5986, %v5999
        %v6001 = vcombine.low %v5945, %v5961
        %v6002 = vcombine.high %v5945, %v5961
        %v6004 = vunpack.c.l.s4 1934713408
        %v6005 = vunpack.c.0.s8 %v6004
        %v6006 = vlaneseq
        %v6007 = vshrl.u32 %v6006, 7
        %v6008 = vsub.s32 %v6005, %v6007
        %v6009 = vrot.slane %v6001, %v6008
        %v6011 = vunpack.c.l.s4 1934713408
        %v6012 = vunpack.c.0.s8 %v6011
        %v6013 = vlaneseq
        %v6014 = vshrl.u32 %v6013, 7
        %v6015 = vsub.s32 %v6012, %v6014
        %v6016 = vrot.slane %v6002, %v6015
        %v6017 = vcombine.low %v5952, %v5968
        %v6018 = vcombine.high %v5952, %v5968
        %v6020 = vunpack.c.l.s4 1934713408
        %v6021 = vunpack.c.0.s8 %v6020
        %v6022 = vlaneseq
        %v6023 = vshrl.u32 %v6022, 7
        %v6024 = vsub.s32 %v6021, %v6023
        %v6025 = vrot.slane %v6017, %v6024
        %v6027 = vunpack.c.l.s4 1934713408
        %v6028 = vunpack.c.0.s8 %v6027
        %v6029 = vlaneseq
        %v6030 = vshrl.u32 %v6029, 7
        %v6031 = vsub.s32 %v6028, %v6030
        %v6032 = vrot.slane %v6018, %v6031
        %v6033 = vcombine.low %v5977, %v6009
        %v6034 = vcombine.high %v5977, %v6009
        %v6035 = vcombine.low %v5984, %v6016
        %v6036 = vcombine.high %v5984, %v6016
        %v6037 = vcombine.low %v5993, %v6025
        %v6038 = vcombine.high %v5993, %v6025
        %v6039 = vcombine.low %v6000, %v6032
        %v6040 = vcombine.high %v6000, %v6032
        %v6041 = vcombine.low %v5679, %v5730
        %v6042 = vcombine.high %v5679, %v5730
        %v6044 = vunpack.c.l.s4 1983009808
        %v6045 = vunpack.c.0.s8 %v6044
        %v6046 = vlaneseq
        %v6047 = vshrl.u32 %v6046, 7
        %v6048 = vsub.s32 %v6045, %v6047
        %v6049 = vrot.slane %v6041, %v6048
        %v6051 = vunpack.c.l.s4 1983009808
        %v6052 = vunpack.c.0.s8 %v6051
        %v6053 = vlaneseq
        %v6054 = vshrl.u32 %v6053, 7
        %v6055 = vsub.s32 %v6052, %v6054
        %v6056 = vrot.slane %v6042, %v6055
        %v6057 = vcombine.low %v5727, %v5733
        %v6058 = vcombine.high %v5727, %v5733
        %v6060 = vunpack.c.l.s4 1983009808
        %v6061 = vunpack.c.0.s8 %v6060
        %v6062 = vlaneseq
        %v6063 = vshrl.u32 %v6062, 7
        %v6064 = vsub.s32 %v6061, %v6063
        %v6065 = vrot.slane %v6057, %v6064
        %v6067 = vunpack.c.l.s4 1983009808
        %v6068 = vunpack.c.0.s8 %v6067
        %v6069 = vlaneseq
        %v6070 = vshrl.u32 %v6069, 7
        %v6071 = vsub.s32 %v6068, %v6070
        %v6072 = vrot.slane %v6058, %v6071
        %v6073 = vcombine.low %v5736, %v5742
        %v6074 = vcombine.high %v5736, %v5742
        %v6076 = vunpack.c.l.s4 1983009808
        %v6077 = vunpack.c.0.s8 %v6076
        %v6078 = vlaneseq
        %v6079 = vshrl.u32 %v6078, 7
        %v6080 = vsub.s32 %v6077, %v6079
        %v6081 = vrot.slane %v6073, %v6080
        %v6083 = vunpack.c.l.s4 1983009808
        %v6084 = vunpack.c.0.s8 %v6083
        %v6085 = vlaneseq
        %v6086 = vshrl.u32 %v6085, 7
        %v6087 = vsub.s32 %v6084, %v6086
        %v6088 = vrot.slane %v6074, %v6087
        %v6089 = vcombine.low %v5739, %v5745
        %v6090 = vcombine.high %v5739, %v5745
        %v6092 = vunpack.c.l.s4 1983009808
        %v6093 = vunpack.c.0.s8 %v6092
        %v6094 = vlaneseq
        %v6095 = vshrl.u32 %v6094, 7
        %v6096 = vsub.s32 %v6093, %v6095
        %v6097 = vrot.slane %v6089, %v6096
        %v6099 = vunpack.c.l.s4 1983009808
        %v6100 = vunpack.c.0.s8 %v6099
        %v6101 = vlaneseq
        %v6102 = vshrl.u32 %v6101, 7
        %v6103 = vsub.s32 %v6100, %v6102
        %v6104 = vrot.slane %v6090, %v6103
        %v6105 = vcombine.low %v6049, %v6065
        %v6106 = vcombine.high %v6049, %v6065
        %v6108 = vunpack.c.l.s4 1934713408
        %v6109 = vunpack.c.0.s8 %v6108
        %v6110 = vlaneseq
        %v6111 = vshrl.u32 %v6110, 7
        %v6112 = vsub.s32 %v6109, %v6111
        %v6113 = vrot.slane %v6105, %v6112
        %v6115 = vunpack.c.l.s4 1934713408
        %v6116 = vunpack.c.0.s8 %v6115
        %v6117 = vlaneseq
        %v6118 = vshrl.u32 %v6117, 7
        %v6119 = vsub.s32 %v6116, %v6118
        %v6120 = vrot.slane %v6106, %v6119
        %v6121 = vcombine.low %v6056, %v6072
        %v6122 = vcombine.high %v6056, %v6072
        %v6124 = vunpack.c.l.s4 1934713408
        %v6125 = vunpack.c.0.s8 %v6124
        %v6126 = vlaneseq
        %v6127 = vshrl.u32 %v6126, 7
        %v6128 = vsub.s32 %v6125, %v6127
        %v6129 = vrot.slane %v6121, %v6128
        %v6131 = vunpack.c.l.s4 1934713408
        %v6132 = vunpack.c.0.s8 %v6131
        %v6133 = vlaneseq
        %v6134 = vshrl.u32 %v6133, 7
        %v6135 = vsub.s32 %v6132, %v6134
        %v6136 = vrot.slane %v6122, %v6135
        %v6137 = vcombine.low %v6081, %v6097
        %v6138 = vcombine.high %v6081, %v6097
        %v6140 = vunpack.c.l.s4 1934713408
        %v6141 = vunpack.c.0.s8 %v6140
        %v6142 = vlaneseq
        %v6143 = vshrl.u32 %v6142, 7
        %v6144 = vsub.s32 %v6141, %v6143
        %v6145 = vrot.slane %v6137, %v6144
        %v6147 = vunpack.c.l.s4 1934713408
        %v6148 = vunpack.c.0.s8 %v6147
        %v6149 = vlaneseq
        %v6150 = vshrl.u32 %v6149, 7
        %v6151 = vsub.s32 %v6148, %v6150
        %v6152 = vrot.slane %v6138, %v6151
        %v6153 = vcombine.low %v6088, %v6104
        %v6154 = vcombine.high %v6088, %v6104
        %v6156 = vunpack.c.l.s4 1934713408
        %v6157 = vunpack.c.0.s8 %v6156
        %v6158 = vlaneseq
        %v6159 = vshrl.u32 %v6158, 7
        %v6160 = vsub.s32 %v6157, %v6159
        %v6161 = vrot.slane %v6153, %v6160
        %v6163 = vunpack.c.l.s4 1934713408
        %v6164 = vunpack.c.0.s8 %v6163
        %v6165 = vlaneseq
        %v6166 = vshrl.u32 %v6165, 7
        %v6167 = vsub.s32 %v6164, %v6166
        %v6168 = vrot.slane %v6154, %v6167
        %v6169 = vcombine.low %v6113, %v6145
        %v6170 = vcombine.high %v6113, %v6145
        %v6171 = vcombine.low %v6120, %v6152
        %v6172 = vcombine.high %v6120, %v6152
        %v6173 = vcombine.low %v6129, %v6161
        %v6174 = vcombine.high %v6129, %v6161
        %v6175 = vcombine.low %v6136, %v6168
        %v6176 = vcombine.high %v6136, %v6168
        %v6177 = vcombine.low %v5680, %v5752
        %v6178 = vcombine.high %v5680, %v5752
        %v6180 = vunpack.c.l.s4 1983009808
        %v6181 = vunpack.c.0.s8 %v6180
        %v6182 = vlaneseq
        %v6183 = vshrl.u32 %v6182, 7
        %v6184 = vsub.s32 %v6181, %v6183
        %v6185 = vrot.slane %v6177, %v6184
        %v6187 = vunpack.c.l.s4 1983009808
        %v6188 = vunpack.c.0.s8 %v6187
        %v6189 = vlaneseq
        %v6190 = vshrl.u32 %v6189, 7
        %v6191 = vsub.s32 %v6188, %v6190
        %v6192 = vrot.slane %v6178, %v6191
        %v6193 = vcombine.low %v5749, %v5755
        %v6194 = vcombine.high %v5749, %v5755
        %v6196 = vunpack.c.l.s4 1983009808
        %v6197 = vunpack.c.0.s8 %v6196
        %v6198 = vlaneseq
        %v6199 = vshrl.u32 %v6198, 7
        %v6200 = vsub.s32 %v6197, %v6199
        %v6201 = vrot.slane %v6193, %v6200
        %v6203 = vunpack.c.l.s4 1983009808
        %v6204 = vunpack.c.0.s8 %v6203
        %v6205 = vlaneseq
        %v6206 = vshrl.u32 %v6205, 7
        %v6207 = vsub.s32 %v6204, %v6206
        %v6208 = vrot.slane %v6194, %v6207
        %v6209 = vcombine.low %v5758, %v5764
        %v6210 = vcombine.high %v5758, %v5764
        %v6212 = vunpack.c.l.s4 1983009808
        %v6213 = vunpack.c.0.s8 %v6212
        %v6214 = vlaneseq
        %v6215 = vshrl.u32 %v6214, 7
        %v6216 = vsub.s32 %v6213, %v6215
        %v6217 = vrot.slane %v6209, %v6216
        %v6219 = vunpack.c.l.s4 1983009808
        %v6220 = vunpack.c.0.s8 %v6219
        %v6221 = vlaneseq
        %v6222 = vshrl.u32 %v6221, 7
        %v6223 = vsub.s32 %v6220, %v6222
        %v6224 = vrot.slane %v6210, %v6223
        %v6225 = vcombine.low %v5761, %v5767
        %v6226 = vcombine.high %v5761, %v5767
        %v6228 = vunpack.c.l.s4 1983009808
        %v6229 = vunpack.c.0.s8 %v6228
        %v6230 = vlaneseq
        %v6231 = vshrl.u32 %v6230, 7
        %v6232 = vsub.s32 %v6229, %v6231
        %v6233 = vrot.slane %v6225, %v6232
        %v6235 = vunpack.c.l.s4 1983009808
        %v6236 = vunpack.c.0.s8 %v6235
        %v6237 = vlaneseq
        %v6238 = vshrl.u32 %v6237, 7
        %v6239 = vsub.s32 %v6236, %v6238
        %v6240 = vrot.slane %v6226, %v6239
        %v6241 = vcombine.low %v6185, %v6201
        %v6242 = vcombine.high %v6185, %v6201
        %v6244 = vunpack.c.l.s4 1934713408
        %v6245 = vunpack.c.0.s8 %v6244
        %v6246 = vlaneseq
        %v6247 = vshrl.u32 %v6246, 7
        %v6248 = vsub.s32 %v6245, %v6247
        %v6249 = vrot.slane %v6241, %v6248
        %v6251 = vunpack.c.l.s4 1934713408
        %v6252 = vunpack.c.0.s8 %v6251
        %v6253 = vlaneseq
        %v6254 = vshrl.u32 %v6253, 7
        %v6255 = vsub.s32 %v6252, %v6254
        %v6256 = vrot.slane %v6242, %v6255
        %v6257 = vcombine.low %v6192, %v6208
        %v6258 = vcombine.high %v6192, %v6208
        %v6260 = vunpack.c.l.s4 1934713408
        %v6261 = vunpack.c.0.s8 %v6260
        %v6262 = vlaneseq
        %v6263 = vshrl.u32 %v6262, 7
        %v6264 = vsub.s32 %v6261, %v6263
        %v6265 = vrot.slane %v6257, %v6264
        %v6267 = vunpack.c.l.s4 1934713408
        %v6268 = vunpack.c.0.s8 %v6267
        %v6269 = vlaneseq
        %v6270 = vshrl.u32 %v6269, 7
        %v6271 = vsub.s32 %v6268, %v6270
        %v6272 = vrot.slane %v6258, %v6271
        %v6273 = vcombine.low %v6217, %v6233
        %v6274 = vcombine.high %v6217, %v6233
        %v6276 = vunpack.c.l.s4 1934713408
        %v6277 = vunpack.c.0.s8 %v6276
        %v6278 = vlaneseq
        %v6279 = vshrl.u32 %v6278, 7
        %v6280 = vsub.s32 %v6277, %v6279
        %v6281 = vrot.slane %v6273, %v6280
        %v6283 = vunpack.c.l.s4 1934713408
        %v6284 = vunpack.c.0.s8 %v6283
        %v6285 = vlaneseq
        %v6286 = vshrl.u32 %v6285, 7
        %v6287 = vsub.s32 %v6284, %v6286
        %v6288 = vrot.slane %v6274, %v6287
        %v6289 = vcombine.low %v6224, %v6240
        %v6290 = vcombine.high %v6224, %v6240
        %v6292 = vunpack.c.l.s4 1934713408
        %v6293 = vunpack.c.0.s8 %v6292
        %v6294 = vlaneseq
        %v6295 = vshrl.u32 %v6294, 7
        %v6296 = vsub.s32 %v6293, %v6295
        %v6297 = vrot.slane %v6289, %v6296
        %v6299 = vunpack.c.l.s4 1934713408
        %v6300 = vunpack.c.0.s8 %v6299
        %v6301 = vlaneseq
        %v6302 = vshrl.u32 %v6301, 7
        %v6303 = vsub.s32 %v6300, %v6302
        %v6304 = vrot.slane %v6290, %v6303
        %v6305 = vcombine.low %v6249, %v6281
        %v6306 = vcombine.high %v6249, %v6281
        %v6307 = vcombine.low %v6256, %v6288
        %v6308 = vcombine.high %v6256, %v6288
        %v6309 = vcombine.low %v6265, %v6297
        %v6310 = vcombine.high %v6265, %v6297
        %v6311 = vcombine.low %v6272, %v6304
        %v6312 = vcombine.high %v6272, %v6304
        %v6313 = vsel %vm994, %v5897, -inf
        %6314 = vmax.xlane.f32.xlu0 %v6313
        %v6315 = vpop.xlane.xlu0 %6314
        %v6316 = vsel %vm994, %v6033, -inf
        %6317 = vmax.xlane.f32.xlu0 %v6316
        %v6318 = vpop.xlane.xlu0 %6317
        %v6319 = vsel %vm994, %v6169, -inf
        %6320 = vmax.xlane.f32.xlu0 %v6319
        %v6321 = vpop.xlane.xlu0 %6320
        %v6322 = vsel %vm994, %v6305, -inf
        %6323 = vmax.xlane.f32.xlu0 %v6322
        %v6324 = vpop.xlane.xlu0 %6323
        %v6325 = vsel %vm994, %v5898, -inf
        %6326 = vmax.xlane.f32.xlu0 %v6325
        %v6327 = vpop.xlane.xlu0 %6326
        %v6328 = vsel %vm994, %v6034, -inf
        %6329 = vmax.xlane.f32.xlu0 %v6328
        %v6330 = vpop.xlane.xlu0 %6329
        %v6331 = vsel %vm994, %v6170, -inf
        %6332 = vmax.xlane.f32.xlu0 %v6331
        %v6333 = vpop.xlane.xlu0 %6332
        %v6334 = vsel %vm994, %v6306, -inf
        %6335 = vmax.xlane.f32.xlu0 %v6334
        %v6336 = vpop.xlane.xlu0 %6335
        %v6337 = vsel %vm994, %v5899, -inf
        %6338 = vmax.xlane.f32.xlu0 %v6337
        %v6339 = vpop.xlane.xlu0 %6338
        %v6340 = vsel %vm994, %v6035, -inf
        %6341 = vmax.xlane.f32.xlu0 %v6340
        %v6342 = vpop.xlane.xlu0 %6341
        %v6343 = vsel %vm994, %v6171, -inf
        %6344 = vmax.xlane.f32.xlu0 %v6343
        %v6345 = vpop.xlane.xlu0 %6344
        %v6346 = vsel %vm994, %v6307, -inf
        %6347 = vmax.xlane.f32.xlu0 %v6346
        %v6348 = vpop.xlane.xlu0 %6347
        %v6349 = vsel %vm994, %v5900, -inf
        %6350 = vmax.xlane.f32.xlu0 %v6349
        %v6351 = vpop.xlane.xlu0 %6350
        %v6352 = vsel %vm994, %v6036, -inf
        %6353 = vmax.xlane.f32.xlu0 %v6352
        %v6354 = vpop.xlane.xlu0 %6353
        %v6355 = vsel %vm994, %v6172, -inf
        %6356 = vmax.xlane.f32.xlu0 %v6355
        %v6357 = vpop.xlane.xlu0 %6356
        %v6358 = vsel %vm994, %v6308, -inf
        %6359 = vmax.xlane.f32.xlu0 %v6358
        %v6360 = vpop.xlane.xlu0 %6359
        %v6361 = vsel %vm994, %v5901, -inf
        %6362 = vmax.xlane.f32.xlu0 %v6361
        %v6363 = vpop.xlane.xlu0 %6362
        %v6364 = vsel %vm994, %v6037, -inf
        %6365 = vmax.xlane.f32.xlu0 %v6364
        %v6366 = vpop.xlane.xlu0 %6365
        %v6367 = vsel %vm994, %v6173, -inf
        %6368 = vmax.xlane.f32.xlu0 %v6367
        %v6369 = vpop.xlane.xlu0 %6368
        %v6370 = vsel %vm994, %v6309, -inf
        %6371 = vmax.xlane.f32.xlu0 %v6370
        %v6372 = vpop.xlane.xlu0 %6371
        %v6373 = vsel %vm994, %v5902, -inf
        %6374 = vmax.xlane.f32.xlu0 %v6373
        %v6375 = vpop.xlane.xlu0 %6374
        %v6376 = vsel %vm994, %v6038, -inf
        %6377 = vmax.xlane.f32.xlu0 %v6376
        %v6378 = vpop.xlane.xlu0 %6377
        %v6379 = vsel %vm994, %v6174, -inf
        %6380 = vmax.xlane.f32.xlu0 %v6379
        %v6381 = vpop.xlane.xlu0 %6380
        %v6382 = vsel %vm994, %v6310, -inf
        %6383 = vmax.xlane.f32.xlu0 %v6382
        %v6384 = vpop.xlane.xlu0 %6383
        %v6385 = vsel %vm994, %v5903, -inf
        %6386 = vmax.xlane.f32.xlu0 %v6385
        %v6387 = vpop.xlane.xlu0 %6386
        %v6388 = vsel %vm994, %v6039, -inf
        %6389 = vmax.xlane.f32.xlu0 %v6388
        %v6390 = vpop.xlane.xlu0 %6389
        %v6391 = vsel %vm994, %v6175, -inf
        %6392 = vmax.xlane.f32.xlu0 %v6391
        %v6393 = vpop.xlane.xlu0 %6392
        %v6394 = vsel %vm994, %v6311, -inf
        %6395 = vmax.xlane.f32.xlu0 %v6394
        %v6396 = vpop.xlane.xlu0 %6395
        %v6397 = vsel %vm994, %v5904, -inf
        %6398 = vmax.xlane.f32.xlu0 %v6397
        %v6399 = vpop.xlane.xlu0 %6398
        %v6400 = vsel %vm994, %v6040, -inf
        %6401 = vmax.xlane.f32.xlu0 %v6400
        %v6402 = vpop.xlane.xlu0 %6401
        %v6403 = vsel %vm994, %v6176, -inf
        %6404 = vmax.xlane.f32.xlu0 %v6403
        %v6405 = vpop.xlane.xlu0 %6404
        %v6406 = vsel %vm994, %v6312, -inf
        %6407 = vmax.xlane.f32.xlu0 %v6406
        %v6408 = vpop.xlane.xlu0 %6407
        %6409 = vset.pattern.permute.xlu0 59
        %6410 = vperm.xlu0 %6409, %v177
        %v6411 = vpop.permute.xlu0 %6410
        %6413 = vrot.lane.b32.xlu0 %v177, 88
        %v6414 = vpop.permute.xlu0 %6413
        %v6415 = vsel %vm1097, %v6414, 0
        %6417 = vmatprep.subr.mxu0 %v5678
        %6418 = vmatpush1.msra.mxu0 %v5677
        %6419 = vmatprep.subr.mxu0 0.0
        %6420 = vmatpush1.msra.mxu0 0.0
        %6421 = vmatprep.subr.mxu0 0.0
        %6422 = vmatpush1.msra.mxu0 0.0
        %6423 = vmatprep.subr.mxu0 0.0
        %6424 = vmatpush1.msra.mxu0 0.0
        %6425 = vmatprep.subr.mxu0 0.0
        %6426 = vmatpush1.msra.mxu0 0.0
        %6427 = vmatprep.subr.mxu0 0.0
        %6428 = vmatpush1.msra.mxu0 0.0
        %6429 = vmatprep.subr.mxu0 0.0
        %6430 = vmatpush1.msra.mxu0 0.0
        %6431 = vmatprep.subr.mxu0 0.0
        %6432 = vmatpush1.msra.mxu0 0.0
        %6433 = vmatprep.subr.mxu0 0.0
        %6434 = vmatpush1.msra.mxu0 0.0
        %6435 = vmatprep.subr.mxu0 0.0
        %6436 = vmatpush1.msra.mxu0 0.0
        %6437 = vmatprep.subr.mxu0 0.0
        %6438 = vmatpush1.msra.mxu0 0.0
        %6439 = vmatprep.subr.mxu0 0.0
        %6440 = vmatpush1.msra.mxu0 0.0
        %6441 = vmatprep.subr.mxu0 0.0
        %6442 = vmatpush1.msra.mxu0 0.0
        %6443 = vmatprep.subr.mxu0 0.0
        %6444 = vmatpush1.msra.mxu0 0.0
        %6445 = vmatprep.subr.mxu0 0.0
        %6446 = vmatpush1.msra.mxu0 0.0
        %6447 = vmatprep.subr.mxu0 0.0
        %6448 = vmatpush1.msra.mxu0 0.0
        %6449 = vmatprep.subr.mxu0 0.0
        %6450 = vmatpush1.msra.mxu0 0.0
        %6451 = vmatprep.subr.mxu0 0.0
        %6452 = vmatpush1.msra.mxu0 0.0
        %6453 = vmatprep.subr.mxu0 0.0
        %6454 = vmatpush1.msra.mxu0 0.0
        %6455 = vmatprep.subr.mxu0 0.0
        %6456 = vmatpush1.msra.mxu0 0.0
        %6457 = vmatprep.subr.mxu0 0.0
        %6458 = vmatpush1.msra.mxu0 0.0
        %6459 = vmatprep.subr.mxu0 0.0
        %6460 = vmatpush1.msra.mxu0 0.0
        %6461 = vmatprep.subr.mxu0 0.0
        %6462 = vmatpush1.msra.mxu0 0.0
        %6463 = vmatprep.subr.mxu0 0.0
        %6464 = vmatpush1.msra.mxu0 0.0
        %6465 = vmatprep.subr.mxu0 0.0
        %6466 = vmatpush1.msra.mxu0 0.0
        %6467 = vmatprep.subr.mxu0 0.0
        %6468 = vmatpush1.msra.mxu0 0.0
        %6469 = vmatprep.subr.mxu0 0.0
        %6470 = vmatpush1.msra.mxu0 0.0
        %6471 = vmatprep.subr.mxu0 0.0
        %6472 = vmatpush1.msra.mxu0 0.0
        %6473 = vmatprep.subr.mxu0 0.0
        %6474 = vmatpush1.msra.mxu0 0.0
        %6475 = vmatprep.subr.mxu0 0.0
        %6476 = vmatpush1.msra.mxu0 0.0
        %6477 = vmatprep.subr.mxu0 0.0
        %6478 = vmatpush1.msra.mxu0 0.0
        %6479 = vmatprep.subr.mxu0 0.0
        %6480 = vmatpush1.msra.mxu0 0.0
        %6481 = vmatprep.mubr.f32.mxu0 0.0
        %6482 = vmatmul.mubr.f32.gmra.mrb[0].mxu0 %v6415
        %v6483 = vpop.f32.mrb[0].mxu0
        %v6484 = vadd.f32 %v6411, %v6483
        %v6485 = vpop.f32.mrb[0].mxu0
        %v6486 = vadd.f32 %v6411, %v6485
        %6487 = vdwg.mxu0
        %6488 = vmatprep.subr.mxu0 %v5680
        %6489 = vmatpush1.msra.mxu0 %v5679
        %6490 = vmatprep.subr.mxu0 0.0
        %6491 = vmatpush1.msra.mxu0 0.0
        %6492 = vmatprep.subr.mxu0 0.0
        %6493 = vmatpush1.msra.mxu0 0.0
        %6494 = vmatprep.subr.mxu0 0.0
        %6495 = vmatpush1.msra.mxu0 0.0
        %6496 = vmatprep.subr.mxu0 0.0
        %6497 = vmatpush1.msra.mxu0 0.0
        %6498 = vmatprep.subr.mxu0 0.0
        %6499 = vmatpush1.msra.mxu0 0.0
        %6500 = vmatprep.subr.mxu0 0.0
        %6501 = vmatpush1.msra.mxu0 0.0
        %6502 = vmatprep.subr.mxu0 0.0
        %6503 = vmatpush1.msra.mxu0 0.0
        %6504 = vmatprep.subr.mxu0 0.0
        %6505 = vmatpush1.msra.mxu0 0.0
        %6506 = vmatprep.subr.mxu0 0.0
        %6507 = vmatpush1.msra.mxu0 0.0
        %6508 = vmatprep.subr.mxu0 0.0
        %6509 = vmatpush1.msra.mxu0 0.0
        %6510 = vmatprep.subr.mxu0 0.0
        %6511 = vmatpush1.msra.mxu0 0.0
        %6512 = vmatprep.subr.mxu0 0.0
        %6513 = vmatpush1.msra.mxu0 0.0
        %6514 = vmatprep.subr.mxu0 0.0
        %6515 = vmatpush1.msra.mxu0 0.0
        %6516 = vmatprep.subr.mxu0 0.0
        %6517 = vmatpush1.msra.mxu0 0.0
        %6518 = vmatprep.subr.mxu0 0.0
        %6519 = vmatpush1.msra.mxu0 0.0
        %6520 = vmatprep.subr.mxu0 0.0
        %6521 = vmatpush1.msra.mxu0 0.0
        %6522 = vmatprep.subr.mxu0 0.0
        %6523 = vmatpush1.msra.mxu0 0.0
        %6524 = vmatprep.subr.mxu0 0.0
        %6525 = vmatpush1.msra.mxu0 0.0
        %6526 = vmatprep.subr.mxu0 0.0
        %6527 = vmatpush1.msra.mxu0 0.0
        %6528 = vmatprep.subr.mxu0 0.0
        %6529 = vmatpush1.msra.mxu0 0.0
        %6530 = vmatprep.subr.mxu0 0.0
        %6531 = vmatpush1.msra.mxu0 0.0
        %6532 = vmatprep.subr.mxu0 0.0
        %6533 = vmatpush1.msra.mxu0 0.0
        %6534 = vmatprep.subr.mxu0 0.0
        %6535 = vmatpush1.msra.mxu0 0.0
        %6536 = vmatprep.subr.mxu0 0.0
        %6537 = vmatpush1.msra.mxu0 0.0
        %6538 = vmatprep.subr.mxu0 0.0
        %6539 = vmatpush1.msra.mxu0 0.0
        %6540 = vmatprep.subr.mxu0 0.0
        %6541 = vmatpush1.msra.mxu0 0.0
        %6542 = vmatprep.subr.mxu0 0.0
        %6543 = vmatpush1.msra.mxu0 0.0
        %6544 = vmatprep.subr.mxu0 0.0
        %6545 = vmatpush1.msra.mxu0 0.0
        %6546 = vmatprep.subr.mxu0 0.0
        %6547 = vmatpush1.msra.mxu0 0.0
        %6548 = vmatprep.subr.mxu0 0.0
        %6549 = vmatpush1.msra.mxu0 0.0
        %6550 = vmatprep.subr.mxu0 0.0
        %6551 = vmatpush1.msra.mxu0 0.0
        %6552 = vmatprep.mubr.f32.mxu0 0.0
        %6553 = vmatmul.mubr.f32.gmra.mrb[0].mxu0 %v6415
        %v6554 = vpop.f32.mrb[0].mxu0
        %v6555 = vadd.f32 %v6411, %v6554
        %v6556 = vpop.f32.mrb[0].mxu0
        %v6557 = vadd.f32 %v6411, %v6556
        %6558 = vdwg.mxu0
        %6559 = vrot.lane.b32.xlu0 %v177, 80
        %v6560 = vpop.permute.xlu0 %6559
        %v6593 = vlaneseq
        %v6594 = vshrl.u32 %v6593, 7
        %v6595 = vsub.s32 %v1277, %v6594
        %v6596 = vrot.slane %v6315, %v6595
        %v6597 = vlaneseq
        %v6598 = vshrl.u32 %v6597, 7
        %v6599 = vsub.s32 %v1282, %v6598
        %v6600 = vrot.slane %v6318, %v6599
        %v6601 = vsel %vm1287, %v6600, %v6596
        %v6602 = vlaneseq
        %v6603 = vshrl.u32 %v6602, 7
        %v6604 = vsub.s32 %v1289, %v6603
        %v6605 = vrot.slane %v6321, %v6604
        %v6606 = vsel %vm1294, %v6605, %v6601
        %v6607 = vlaneseq
        %v6608 = vshrl.u32 %v6607, 7
        %v6609 = vsub.s32 %v1296, %v6608
        %v6610 = vrot.slane %v6324, %v6609
        %v6611 = vsel %vm1301, %v6610, %v6606
        %v6612 = vlaneseq
        %v6613 = vshrl.u32 %v6612, 7
        %v6614 = vsub.s32 %v1277, %v6613
        %v6615 = vrot.slane %v6327, %v6614
        %v6616 = vlaneseq
        %v6617 = vshrl.u32 %v6616, 7
        %v6618 = vsub.s32 %v1282, %v6617
        %v6619 = vrot.slane %v6330, %v6618
        %v6620 = vsel %vm1287, %v6619, %v6615
        %v6621 = vlaneseq
        %v6622 = vshrl.u32 %v6621, 7
        %v6623 = vsub.s32 %v1289, %v6622
        %v6624 = vrot.slane %v6333, %v6623
        %v6625 = vsel %vm1294, %v6624, %v6620
        %v6626 = vlaneseq
        %v6627 = vshrl.u32 %v6626, 7
        %v6628 = vsub.s32 %v1296, %v6627
        %v6629 = vrot.slane %v6336, %v6628
        %v6630 = vsel %vm1301, %v6629, %v6625
        %v6631 = vlaneseq
        %v6632 = vshrl.u32 %v6631, 7
        %v6633 = vsub.s32 %v1277, %v6632
        %v6634 = vrot.slane %v6339, %v6633
        %v6635 = vlaneseq
        %v6636 = vshrl.u32 %v6635, 7
        %v6637 = vsub.s32 %v1282, %v6636
        %v6638 = vrot.slane %v6342, %v6637
        %v6639 = vsel %vm1287, %v6638, %v6634
        %v6640 = vlaneseq
        %v6641 = vshrl.u32 %v6640, 7
        %v6642 = vsub.s32 %v1289, %v6641
        %v6643 = vrot.slane %v6345, %v6642
        %v6644 = vsel %vm1294, %v6643, %v6639
        %v6645 = vlaneseq
        %v6646 = vshrl.u32 %v6645, 7
        %v6647 = vsub.s32 %v1296, %v6646
        %v6648 = vrot.slane %v6348, %v6647
        %v6649 = vsel %vm1301, %v6648, %v6644
        %v6650 = vlaneseq
        %v6651 = vshrl.u32 %v6650, 7
        %v6652 = vsub.s32 %v1277, %v6651
        %v6653 = vrot.slane %v6351, %v6652
        %v6654 = vlaneseq
        %v6655 = vshrl.u32 %v6654, 7
        %v6656 = vsub.s32 %v1282, %v6655
        %v6657 = vrot.slane %v6354, %v6656
        %v6658 = vsel %vm1287, %v6657, %v6653
        %v6659 = vlaneseq
        %v6660 = vshrl.u32 %v6659, 7
        %v6661 = vsub.s32 %v1289, %v6660
        %v6662 = vrot.slane %v6357, %v6661
        %v6663 = vsel %vm1294, %v6662, %v6658
        %v6664 = vlaneseq
        %v6665 = vshrl.u32 %v6664, 7
        %v6666 = vsub.s32 %v1296, %v6665
        %v6667 = vrot.slane %v6360, %v6666
        %v6668 = vsel %vm1301, %v6667, %v6663
        %v6669 = vlaneseq
        %v6670 = vshrl.u32 %v6669, 7
        %v6671 = vsub.s32 %v1277, %v6670
        %v6672 = vrot.slane %v6363, %v6671
        %v6673 = vlaneseq
        %v6674 = vshrl.u32 %v6673, 7
        %v6675 = vsub.s32 %v1282, %v6674
        %v6676 = vrot.slane %v6366, %v6675
        %v6677 = vsel %vm1287, %v6676, %v6672
        %v6678 = vlaneseq
        %v6679 = vshrl.u32 %v6678, 7
        %v6680 = vsub.s32 %v1289, %v6679
        %v6681 = vrot.slane %v6369, %v6680
        %v6682 = vsel %vm1294, %v6681, %v6677
        %v6683 = vlaneseq
        %v6684 = vshrl.u32 %v6683, 7
        %v6685 = vsub.s32 %v1296, %v6684
        %v6686 = vrot.slane %v6372, %v6685
        %v6687 = vsel %vm1301, %v6686, %v6682
        %v6688 = vlaneseq
        %v6689 = vshrl.u32 %v6688, 7
        %v6690 = vsub.s32 %v1277, %v6689
        %v6691 = vrot.slane %v6375, %v6690
        %v6692 = vlaneseq
        %v6693 = vshrl.u32 %v6692, 7
        %v6694 = vsub.s32 %v1282, %v6693
        %v6695 = vrot.slane %v6378, %v6694
        %v6696 = vsel %vm1287, %v6695, %v6691
        %v6697 = vlaneseq
        %v6698 = vshrl.u32 %v6697, 7
        %v6699 = vsub.s32 %v1289, %v6698
        %v6700 = vrot.slane %v6381, %v6699
        %v6701 = vsel %vm1294, %v6700, %v6696
        %v6702 = vlaneseq
        %v6703 = vshrl.u32 %v6702, 7
        %v6704 = vsub.s32 %v1296, %v6703
        %v6705 = vrot.slane %v6384, %v6704
        %v6706 = vsel %vm1301, %v6705, %v6701
        %v6707 = vlaneseq
        %v6708 = vshrl.u32 %v6707, 7
        %v6709 = vsub.s32 %v1277, %v6708
        %v6710 = vrot.slane %v6387, %v6709
        %v6711 = vlaneseq
        %v6712 = vshrl.u32 %v6711, 7
        %v6713 = vsub.s32 %v1282, %v6712
        %v6714 = vrot.slane %v6390, %v6713
        %v6715 = vsel %vm1287, %v6714, %v6710
        %v6716 = vlaneseq
        %v6717 = vshrl.u32 %v6716, 7
        %v6718 = vsub.s32 %v1289, %v6717
        %v6719 = vrot.slane %v6393, %v6718
        %v6720 = vsel %vm1294, %v6719, %v6715
        %v6721 = vlaneseq
        %v6722 = vshrl.u32 %v6721, 7
        %v6723 = vsub.s32 %v1296, %v6722
        %v6724 = vrot.slane %v6396, %v6723
        %v6725 = vsel %vm1301, %v6724, %v6720
        %v6726 = vlaneseq
        %v6727 = vshrl.u32 %v6726, 7
        %v6728 = vsub.s32 %v1277, %v6727
        %v6729 = vrot.slane %v6399, %v6728
        %v6730 = vlaneseq
        %v6731 = vshrl.u32 %v6730, 7
        %v6732 = vsub.s32 %v1282, %v6731
        %v6733 = vrot.slane %v6402, %v6732
        %v6734 = vsel %vm1287, %v6733, %v6729
        %v6735 = vlaneseq
        %v6736 = vshrl.u32 %v6735, 7
        %v6737 = vsub.s32 %v1289, %v6736
        %v6738 = vrot.slane %v6405, %v6737
        %v6739 = vsel %vm1294, %v6738, %v6734
        %v6740 = vlaneseq
        %v6741 = vshrl.u32 %v6740, 7
        %v6742 = vsub.s32 %v1296, %v6741
        %v6743 = vrot.slane %v6408, %v6742
        %v6744 = vsel %vm1301, %v6743, %v6739
        %v6745 = vsel %vm1436, %v6630, %v6611
        %v6746 = vsel %vm1438, %v6649, %v6745
        %v6747 = vsel %vm1440, %v6668, %v6746
        %v6748 = vsel %vm1442, %v6687, %v6747
        %v6749 = vsel %vm1444, %v6706, %v6748
        %v6750 = vsel %vm1446, %v6725, %v6749
        %v6751 = vsel %vm1448, %v6744, %v6750
        %v6753 = vsel %vm1097, %v6560, 0
        %6755 = vmatprep.subr.mxu0 0.0
        %6756 = vmatpush1.msra.mxu0 %v6751
        %6757 = vmatprep.subr.mxu0 0.0
        %6758 = vmatpush1.msra.mxu0 0.0
        %6759 = vmatprep.subr.mxu0 0.0
        %6760 = vmatpush1.msra.mxu0 0.0
        %6761 = vmatprep.subr.mxu0 0.0
        %6762 = vmatpush1.msra.mxu0 0.0
        %6763 = vmatprep.subr.mxu0 0.0
        %6764 = vmatpush1.msra.mxu0 0.0
        %6765 = vmatprep.subr.mxu0 0.0
        %6766 = vmatpush1.msra.mxu0 0.0
        %6767 = vmatprep.subr.mxu0 0.0
        %6768 = vmatpush1.msra.mxu0 0.0
        %6769 = vmatprep.subr.mxu0 0.0
        %6770 = vmatpush1.msra.mxu0 0.0
        %6771 = vmatprep.subr.mxu0 0.0
        %6772 = vmatpush1.msra.mxu0 0.0
        %6773 = vmatprep.subr.mxu0 0.0
        %6774 = vmatpush1.msra.mxu0 0.0
        %6775 = vmatprep.subr.mxu0 0.0
        %6776 = vmatpush1.msra.mxu0 0.0
        %6777 = vmatprep.subr.mxu0 0.0
        %6778 = vmatpush1.msra.mxu0 0.0
        %6779 = vmatprep.subr.mxu0 0.0
        %6780 = vmatpush1.msra.mxu0 0.0
        %6781 = vmatprep.subr.mxu0 0.0
        %6782 = vmatpush1.msra.mxu0 0.0
        %6783 = vmatprep.subr.mxu0 0.0
        %6784 = vmatpush1.msra.mxu0 0.0
        %6785 = vmatprep.subr.mxu0 0.0
        %6786 = vmatpush1.msra.mxu0 0.0
        %6787 = vmatprep.subr.mxu0 0.0
        %6788 = vmatpush1.msra.mxu0 0.0
        %6789 = vmatprep.subr.mxu0 0.0
        %6790 = vmatpush1.msra.mxu0 0.0
        %6791 = vmatprep.subr.mxu0 0.0
        %6792 = vmatpush1.msra.mxu0 0.0
        %6793 = vmatprep.subr.mxu0 0.0
        %6794 = vmatpush1.msra.mxu0 0.0
        %6795 = vmatprep.subr.mxu0 0.0
        %6796 = vmatpush1.msra.mxu0 0.0
        %6797 = vmatprep.subr.mxu0 0.0
        %6798 = vmatpush1.msra.mxu0 0.0
        %6799 = vmatprep.subr.mxu0 0.0
        %6800 = vmatpush1.msra.mxu0 0.0
        %6801 = vmatprep.subr.mxu0 0.0
        %6802 = vmatpush1.msra.mxu0 0.0
        %6803 = vmatprep.subr.mxu0 0.0
        %6804 = vmatpush1.msra.mxu0 0.0
        %6805 = vmatprep.subr.mxu0 0.0
        %6806 = vmatpush1.msra.mxu0 0.0
        %6807 = vmatprep.subr.mxu0 0.0
        %6808 = vmatpush1.msra.mxu0 0.0
        %6809 = vmatprep.subr.mxu0 0.0
        %6810 = vmatpush1.msra.mxu0 0.0
        %6811 = vmatprep.subr.mxu0 0.0
        %6812 = vmatpush1.msra.mxu0 0.0
        %6813 = vmatprep.subr.mxu0 0.0
        %6814 = vmatpush1.msra.mxu0 0.0
        %6815 = vmatprep.subr.mxu0 0.0
        %6816 = vmatpush1.msra.mxu0 0.0
        %6817 = vmatprep.subr.mxu0 0.0
        %6818 = vmatpush1.msra.mxu0 0.0
        %6819 = vmatprep.mubr.f32.mxu0 0.0
        %6820 = vmatmul.mubr.f32.gmra.mrb[0].mxu0 %v6753
        %v6821 = vpop.f32.mrb[0].mxu0
        %v6822 = vadd.f32 0.0, %v6821
        %v6823 = vpop.f32.mrb[0].mxu0
        %6824 = vdwg.mxu0
        %6826 = vrot.lane.b32.xlu0 %v6484, 112
        %v6827 = vpop.permute.xlu0 %6826
        %6829 = vrot.lane.b32.xlu0 %v6484, 96
        %v6830 = vpop.permute.xlu0 %6829
        %6832 = vrot.lane.b32.xlu0 %v6484, 80
        %v6833 = vpop.permute.xlu0 %6832
        %6835 = vrot.lane.b32.xlu0 %v6484, 64
        %v6836 = vpop.permute.xlu0 %6835
        %6838 = vrot.lane.b32.xlu0 %v6484, 48
        %v6839 = vpop.permute.xlu0 %6838
        %6841 = vrot.lane.b32.xlu0 %v6484, 32
        %v6842 = vpop.permute.xlu0 %6841
        %6844 = vrot.lane.b32.xlu0 %v6484, 16
        %v6845 = vpop.permute.xlu0 %6844
        %6848 = vrot.lane.b32.xlu0 %v6486, 112
        %v6849 = vpop.permute.xlu0 %6848
        %6851 = vrot.lane.b32.xlu0 %v6486, 96
        %v6852 = vpop.permute.xlu0 %6851
        %6854 = vrot.lane.b32.xlu0 %v6486, 80
        %v6855 = vpop.permute.xlu0 %6854
        %6857 = vrot.lane.b32.xlu0 %v6486, 64
        %v6858 = vpop.permute.xlu0 %6857
        %6860 = vrot.lane.b32.xlu0 %v6486, 48
        %v6861 = vpop.permute.xlu0 %6860
        %6863 = vrot.lane.b32.xlu0 %v6486, 32
        %v6864 = vpop.permute.xlu0 %6863
        %6866 = vrot.lane.b32.xlu0 %v6486, 16
        %v6867 = vpop.permute.xlu0 %6866
        %6870 = vrot.lane.b32.xlu0 %v6555, 112
        %v6871 = vpop.permute.xlu0 %6870
        %6873 = vrot.lane.b32.xlu0 %v6555, 96
        %v6874 = vpop.permute.xlu0 %6873
        %6876 = vrot.lane.b32.xlu0 %v6555, 80
        %v6877 = vpop.permute.xlu0 %6876
        %6879 = vrot.lane.b32.xlu0 %v6555, 64
        %v6880 = vpop.permute.xlu0 %6879
        %6882 = vrot.lane.b32.xlu0 %v6555, 48
        %v6883 = vpop.permute.xlu0 %6882
        %6885 = vrot.lane.b32.xlu0 %v6555, 32
        %v6886 = vpop.permute.xlu0 %6885
        %6888 = vrot.lane.b32.xlu0 %v6555, 16
        %v6889 = vpop.permute.xlu0 %6888
        %6892 = vrot.lane.b32.xlu0 %v6557, 112
        %v6893 = vpop.permute.xlu0 %6892
        %6895 = vrot.lane.b32.xlu0 %v6557, 96
        %v6896 = vpop.permute.xlu0 %6895
        %6898 = vrot.lane.b32.xlu0 %v6557, 80
        %v6899 = vpop.permute.xlu0 %6898
        %6901 = vrot.lane.b32.xlu0 %v6557, 64
        %v6902 = vpop.permute.xlu0 %6901
        %6904 = vrot.lane.b32.xlu0 %v6557, 48
        %v6905 = vpop.permute.xlu0 %6904
        %6907 = vrot.lane.b32.xlu0 %v6557, 32
        %v6908 = vpop.permute.xlu0 %6907
        %6910 = vrot.lane.b32.xlu0 %v6557, 16
        %v6911 = vpop.permute.xlu0 %6910
        %v6913 = vcombine.low %v6484, %v6830
        %v6915 = vunpack.c.l.s4 1983009808
        %v6916 = vunpack.c.0.s8 %v6915
        %v6917 = vlaneseq
        %v6918 = vshrl.u32 %v6917, 7
        %v6919 = vsub.s32 %v6916, %v6918
        %v6920 = vrot.slane %v6913, %v6919
        %v6921 = vcombine.low %v6827, %v6833
        %v6923 = vunpack.c.l.s4 1983009808
        %v6924 = vunpack.c.0.s8 %v6923
        %v6925 = vlaneseq
        %v6926 = vshrl.u32 %v6925, 7
        %v6927 = vsub.s32 %v6924, %v6926
        %v6928 = vrot.slane %v6921, %v6927
        %v6929 = vcombine.low %v6836, %v6842
        %v6931 = vunpack.c.l.s4 1983009808
        %v6932 = vunpack.c.0.s8 %v6931
        %v6933 = vlaneseq
        %v6934 = vshrl.u32 %v6933, 7
        %v6935 = vsub.s32 %v6932, %v6934
        %v6936 = vrot.slane %v6929, %v6935
        %v6937 = vcombine.low %v6839, %v6845
        %v6939 = vunpack.c.l.s4 1983009808
        %v6940 = vunpack.c.0.s8 %v6939
        %v6941 = vlaneseq
        %v6942 = vshrl.u32 %v6941, 7
        %v6943 = vsub.s32 %v6940, %v6942
        %v6944 = vrot.slane %v6937, %v6943
        %v6945 = vcombine.low %v6920, %v6928
        %v6947 = vunpack.c.l.s4 1934713408
        %v6948 = vunpack.c.0.s8 %v6947
        %v6949 = vlaneseq
        %v6950 = vshrl.u32 %v6949, 7
        %v6951 = vsub.s32 %v6948, %v6950
        %v6952 = vrot.slane %v6945, %v6951
        %v6953 = vcombine.low %v6936, %v6944
        %v6955 = vunpack.c.l.s4 1934713408
        %v6956 = vunpack.c.0.s8 %v6955
        %v6957 = vlaneseq
        %v6958 = vshrl.u32 %v6957, 7
        %v6959 = vsub.s32 %v6956, %v6958
        %v6960 = vrot.slane %v6953, %v6959
        %v6961 = vcombine.low %v6952, %v6960
        %v6962 = vcombine.low %v6486, %v6852
        %v6964 = vunpack.c.l.s4 1983009808
        %v6965 = vunpack.c.0.s8 %v6964
        %v6966 = vlaneseq
        %v6967 = vshrl.u32 %v6966, 7
        %v6968 = vsub.s32 %v6965, %v6967
        %v6969 = vrot.slane %v6962, %v6968
        %v6970 = vcombine.low %v6849, %v6855
        %v6972 = vunpack.c.l.s4 1983009808
        %v6973 = vunpack.c.0.s8 %v6972
        %v6974 = vlaneseq
        %v6975 = vshrl.u32 %v6974, 7
        %v6976 = vsub.s32 %v6973, %v6975
        %v6977 = vrot.slane %v6970, %v6976
        %v6978 = vcombine.low %v6858, %v6864
        %v6980 = vunpack.c.l.s4 1983009808
        %v6981 = vunpack.c.0.s8 %v6980
        %v6982 = vlaneseq
        %v6983 = vshrl.u32 %v6982, 7
        %v6984 = vsub.s32 %v6981, %v6983
        %v6985 = vrot.slane %v6978, %v6984
        %v6986 = vcombine.low %v6861, %v6867
        %v6988 = vunpack.c.l.s4 1983009808
        %v6989 = vunpack.c.0.s8 %v6988
        %v6990 = vlaneseq
        %v6991 = vshrl.u32 %v6990, 7
        %v6992 = vsub.s32 %v6989, %v6991
        %v6993 = vrot.slane %v6986, %v6992
        %v6994 = vcombine.low %v6969, %v6977
        %v6996 = vunpack.c.l.s4 1934713408
        %v6997 = vunpack.c.0.s8 %v6996
        %v6998 = vlaneseq
        %v6999 = vshrl.u32 %v6998, 7
        %v7000 = vsub.s32 %v6997, %v6999
        %v7001 = vrot.slane %v6994, %v7000
        %v7002 = vcombine.low %v6985, %v6993
        %v7004 = vunpack.c.l.s4 1934713408
        %v7005 = vunpack.c.0.s8 %v7004
        %v7006 = vlaneseq
        %v7007 = vshrl.u32 %v7006, 7
        %v7008 = vsub.s32 %v7005, %v7007
        %v7009 = vrot.slane %v7002, %v7008
        %v7010 = vcombine.low %v7001, %v7009
        %v7011 = vcombine.low %v6555, %v6874
        %v7013 = vunpack.c.l.s4 1983009808
        %v7014 = vunpack.c.0.s8 %v7013
        %v7015 = vlaneseq
        %v7016 = vshrl.u32 %v7015, 7
        %v7017 = vsub.s32 %v7014, %v7016
        %v7018 = vrot.slane %v7011, %v7017
        %v7019 = vcombine.low %v6871, %v6877
        %v7021 = vunpack.c.l.s4 1983009808
        %v7022 = vunpack.c.0.s8 %v7021
        %v7023 = vlaneseq
        %v7024 = vshrl.u32 %v7023, 7
        %v7025 = vsub.s32 %v7022, %v7024
        %v7026 = vrot.slane %v7019, %v7025
        %v7027 = vcombine.low %v6880, %v6886
        %v7029 = vunpack.c.l.s4 1983009808
        %v7030 = vunpack.c.0.s8 %v7029
        %v7031 = vlaneseq
        %v7032 = vshrl.u32 %v7031, 7
        %v7033 = vsub.s32 %v7030, %v7032
        %v7034 = vrot.slane %v7027, %v7033
        %v7035 = vcombine.low %v6883, %v6889
        %v7037 = vunpack.c.l.s4 1983009808
        %v7038 = vunpack.c.0.s8 %v7037
        %v7039 = vlaneseq
        %v7040 = vshrl.u32 %v7039, 7
        %v7041 = vsub.s32 %v7038, %v7040
        %v7042 = vrot.slane %v7035, %v7041
        %v7043 = vcombine.low %v7018, %v7026
        %v7045 = vunpack.c.l.s4 1934713408
        %v7046 = vunpack.c.0.s8 %v7045
        %v7047 = vlaneseq
        %v7048 = vshrl.u32 %v7047, 7
        %v7049 = vsub.s32 %v7046, %v7048
        %v7050 = vrot.slane %v7043, %v7049
        %v7051 = vcombine.low %v7034, %v7042
        %v7053 = vunpack.c.l.s4 1934713408
        %v7054 = vunpack.c.0.s8 %v7053
        %v7055 = vlaneseq
        %v7056 = vshrl.u32 %v7055, 7
        %v7057 = vsub.s32 %v7054, %v7056
        %v7058 = vrot.slane %v7051, %v7057
        %v7059 = vcombine.low %v7050, %v7058
        %v7060 = vcombine.low %v6557, %v6896
        %v7062 = vunpack.c.l.s4 1983009808
        %v7063 = vunpack.c.0.s8 %v7062
        %v7064 = vlaneseq
        %v7065 = vshrl.u32 %v7064, 7
        %v7066 = vsub.s32 %v7063, %v7065
        %v7067 = vrot.slane %v7060, %v7066
        %v7068 = vcombine.low %v6893, %v6899
        %v7070 = vunpack.c.l.s4 1983009808
        %v7071 = vunpack.c.0.s8 %v7070
        %v7072 = vlaneseq
        %v7073 = vshrl.u32 %v7072, 7
        %v7074 = vsub.s32 %v7071, %v7073
        %v7075 = vrot.slane %v7068, %v7074
        %v7076 = vcombine.low %v6902, %v6908
        %v7078 = vunpack.c.l.s4 1983009808
        %v7079 = vunpack.c.0.s8 %v7078
        %v7080 = vlaneseq
        %v7081 = vshrl.u32 %v7080, 7
        %v7082 = vsub.s32 %v7079, %v7081
        %v7083 = vrot.slane %v7076, %v7082
        %v7084 = vcombine.low %v6905, %v6911
        %v7086 = vunpack.c.l.s4 1983009808
        %v7087 = vunpack.c.0.s8 %v7086
        %v7088 = vlaneseq
        %v7089 = vshrl.u32 %v7088, 7
        %v7090 = vsub.s32 %v7087, %v7089
        %v7091 = vrot.slane %v7084, %v7090
        %v7092 = vcombine.low %v7067, %v7075
        %v7094 = vunpack.c.l.s4 1934713408
        %v7095 = vunpack.c.0.s8 %v7094
        %v7096 = vlaneseq
        %v7097 = vshrl.u32 %v7096, 7
        %v7098 = vsub.s32 %v7095, %v7097
        %v7099 = vrot.slane %v7092, %v7098
        %v7100 = vcombine.low %v7083, %v7091
        %v7102 = vunpack.c.l.s4 1934713408
        %v7103 = vunpack.c.0.s8 %v7102
        %v7104 = vlaneseq
        %v7105 = vshrl.u32 %v7104, 7
        %v7106 = vsub.s32 %v7103, %v7105
        %v7107 = vrot.slane %v7100, %v7106
        %v7108 = vcombine.low %v7099, %v7107
        %v7109 = vlaneseq
        %v7110 = vshrl.u32 %v7109, 7
        %v7111 = vsub.s32 0, %v7110
        %v7112 = vrot.slane %v6822, %v7111
        %7114 = vbcast.lane.b32.xlu0 %v7112, 256
        %v7115 = vpop.permute.xlu0 %7114
        %s7117 = sor.u32 256, 8
        %7118 = vbcast.lane.b32.xlu0 %v7112, %s7117
        %v7119 = vpop.permute.xlu0 %7118
        %s7121 = sor.u32 256, 16
        %7122 = vbcast.lane.b32.xlu0 %v7112, %s7121
        %v7123 = vpop.permute.xlu0 %7122
        %s7125 = sor.u32 256, 24
        %7126 = vbcast.lane.b32.xlu0 %v7112, %s7125
        %v7127 = vpop.permute.xlu0 %7126
        %v7128 = vadd.f32 %v6961, %v7115
        %v7129 = vadd.f32 %v7010, %v7119
        %v7130 = vadd.f32 %v7059, %v7123
        %v7131 = vadd.f32 %v7108, %v7127
        %v7132 = vsel %vm994, %v7128, -inf
        %7133 = vmax.xlane.f32.xlu0 %v7132
        %v7134 = vpop.xlane.xlu0 %7133
        %v7135 = vsel %vm994, %v7129, -inf
        %7136 = vmax.xlane.f32.xlu0 %v7135
        %v7137 = vpop.xlane.xlu0 %7136
        %v7138 = vsel %vm994, %v7130, -inf
        %7139 = vmax.xlane.f32.xlu0 %v7138
        %v7140 = vpop.xlane.xlu0 %7139
        %v7141 = vsel %vm994, %v7131, -inf
        %7142 = vmax.xlane.f32.xlu0 %v7141
        %v7143 = vpop.xlane.xlu0 %7142
        %v7148 = vlaneseq
        %v7149 = vshrl.u32 %v7148, 7
        %v7150 = vsub.s32 %v1277, %v7149
        %v7151 = vrot.slane %v7134, %v7150
        %v7152 = vlaneseq
        %v7153 = vshrl.u32 %v7152, 7
        %v7154 = vsub.s32 %v1282, %v7153
        %v7155 = vrot.slane %v7137, %v7154
        %v7156 = vsel %vm1287, %v7155, %v7151
        %v7157 = vlaneseq
        %v7158 = vshrl.u32 %v7157, 7
        %v7159 = vsub.s32 %v1277, %v7158
        %v7160 = vrot.slane %v7140, %v7159
        %v7161 = vlaneseq
        %v7162 = vshrl.u32 %v7161, 7
        %v7163 = vsub.s32 %v1282, %v7162
        %v7164 = vrot.slane %v7143, %v7163
        %v7165 = vsel %vm1287, %v7164, %v7160
        %v7166 = vsel %vm1436, %v7165, %v7156
        %vm7168 = vcmask 123904
        %v7169 = vsel %vm7168, %v7166, -inf
        %7170 = vmax.xlane.f32.xlu0 %v7169
        %v7171 = vpop.xlane.xlu0 %7170
        %v7173 = vlaneseq
        %v7174 = vshrl.u32 %v7173, 7
        %v7175 = vsub.s32 0, %v7174
        %v7176 = vrot.slane %v7171, %v7175
        %v7177 = vlaneseq
        %v7178 = vshrl.u32 %v7177, 7
        %v7179 = vsub.s32 1, %v7178
        %v7180 = vrot.slane %v7171, %v7179
        %v7183 = vsub.f32 %v7134, %v7176
        %v7184 = vsub.f32 %v7137, %v7176
        %v7185 = vsub.f32 %v7140, %v7180
        %v7186 = vsub.f32 %v7143, %v7180
        %v7187 = vmul.f32 %v7183, 1.442695
        %v7188 = vpow.pop %v7187
        %v7189 = vmul.f32 %v7184, 1.442695
        %v7190 = vpow.pop %v7189
        %v7191 = vmul.f32 %v7185, 1.442695
        %v7192 = vpow.pop %v7191
        %v7193 = vmul.f32 %v7186, 1.442695
        %v7194 = vpow.pop %v7193
        %7199 = vset.pattern.permute.xlu0 0
        %7200 = vperm.xlu0 %7199, %v7188
        %v7201 = vpop.permute.xlu0 %7200
        %7202 = vset.pattern.permute.xlu0 0
        %7203 = vperm.xlu0 %7202, %v7190
        %v7204 = vpop.permute.xlu0 %7203
        %7205 = vset.pattern.permute.xlu0 0
        %7206 = vperm.xlu0 %7205, %v7192
        %v7207 = vpop.permute.xlu0 %7206
        %7208 = vset.pattern.permute.xlu0 0
        %7209 = vperm.xlu0 %7208, %v7194
        %v7210 = vpop.permute.xlu0 %7209
        %v7211 = vlaneseq
        %v7212 = vshrl.u32 %v7211, 7
        %v7213 = vsub.s32 %v1277, %v7212
        %v7214 = vrot.slane %v7201, %v7213
        %v7215 = vlaneseq
        %v7216 = vshrl.u32 %v7215, 7
        %v7217 = vsub.s32 %v1282, %v7216
        %v7218 = vrot.slane %v7204, %v7217
        %v7219 = vsel %vm1287, %v7218, %v7214
        %v7220 = vlaneseq
        %v7221 = vshrl.u32 %v7220, 7
        %v7222 = vsub.s32 %v1277, %v7221
        %v7223 = vrot.slane %v7207, %v7222
        %v7224 = vlaneseq
        %v7225 = vshrl.u32 %v7224, 7
        %v7226 = vsub.s32 %v1282, %v7225
        %v7227 = vrot.slane %v7210, %v7226
        %v7228 = vsel %vm1287, %v7227, %v7223
        %v7229 = vsel %vm1436, %v7228, %v7219
        %v7231 = vsel %vm7168, %v7229, 0.0
        %7232 = vadd.xlane.f32.xlu0 %v7231
        %v7233 = vpop.xlane.xlu0 %7232
        %v7235 = vlaneseq
        %v7236 = vshrl.u32 %v7235, 7
        %v7237 = vsub.s32 0, %v7236
        %v7238 = vrot.slane %v7233, %v7237
        %v7239 = vlaneseq
        %v7240 = vshrl.u32 %v7239, 7
        %v7241 = vsub.s32 1, %v7240
        %v7242 = vrot.slane %v7233, %v7241
        %v7245 = vrcp.pop %v7238
        %v7246 = vmul.f32 %v7188, %v7245
        %v7247 = vmul.f32 %v7190, %v7245
        %v7248 = vrcp.pop %v7242
        %v7249 = vmul.f32 %v7192, %v7248
        %v7250 = vmul.f32 %v7194, %v7248
        %7255 = vset.pattern.permute.xlu0 0
        %7256 = vperm.xlu0 %7255, %v7246
        %v7257 = vpop.permute.xlu0 %7256
        %7258 = vset.pattern.permute.xlu0 0
        %7259 = vperm.xlu0 %7258, %v7247
        %v7260 = vpop.permute.xlu0 %7259
        %7261 = vset.pattern.permute.xlu0 0
        %7262 = vperm.xlu0 %7261, %v7249
        %v7263 = vpop.permute.xlu0 %7262
        %7264 = vset.pattern.permute.xlu0 0
        %7265 = vperm.xlu0 %7264, %v7250
        %v7266 = vpop.permute.xlu0 %7265
        %v7267 = vlaneseq
        %v7268 = vshrl.u32 %v7267, 7
        %v7269 = vsub.s32 %v1277, %v7268
        %v7270 = vrot.slane %v7257, %v7269
        %v7271 = vlaneseq
        %v7272 = vshrl.u32 %v7271, 7
        %v7273 = vsub.s32 %v1282, %v7272
        %v7274 = vrot.slane %v7260, %v7273
        %v7275 = vsel %vm1287, %v7274, %v7270
        %v7276 = vlaneseq
        %v7277 = vshrl.u32 %v7276, 7
        %v7278 = vsub.s32 %v1277, %v7277
        %v7279 = vrot.slane %v7263, %v7278
        %v7280 = vlaneseq
        %v7281 = vshrl.u32 %v7280, 7
        %v7282 = vsub.s32 %v1282, %v7281
        %v7283 = vrot.slane %v7266, %v7282
        %v7284 = vsel %vm1287, %v7283, %v7279
        %v7285 = vsel %vm1436, %v7284, %v7275
        %7287 = vst.msk [vmem:[%s175] sm:$0x3] %vm7168, %v7285
        %s7288 = sand.u32 %s75, 1
        %s7289 = scalar_lea.sflag [#allocation4], %s7288
        %s7290 = sand.u32 %s75, 1
        %s7291 = smul.addr %s7290, 2
        %s7292 = scalar_lea.vmem [#allocation7], %s7291
        // Predicated region
        $region37: #{tpu_custom_call.1} parent=27 // pred_check
          %p7293 = pneg %p85
        $region38: #{tpu_custom_call.1} parent=27 // pred_check_branch
          %7295 = sbr.rel (%p7293) target = $region40
        $region39: #{tpu_custom_call.1} parent=27 // pred_region
          %s7297 = ssub.s32 32, 32
          %7298 = vsyncadd %s7289, %s7297
          %s7299 = smul.addr %s20, 32
          %s7300 = scalar_lea.hbm %s2, %s7299
          %s7302 = sshll.u32 %s7292, 4
          %s7303 = int_to_ptr.vmem [resolvable:$true] %s7302
          %7305 = dma.vmem_to_hbm [thread:$0]  %s7303, 32, %s7300, %s7289
        $region40: #{tpu_custom_call.1} parent=27 // pred_fallthru
          _
      $region28: #{tpu_custom_call.1} parent=5 // pred_fallthru
        _
      %p7306 = scmp.le.s32.totalorder 2, %s15
      // Predicated region
      $region41: #{tpu_custom_call.1} parent=5 // pred_check
        %p7307 = pneg %p7306
      $region42: #{tpu_custom_call.1} parent=5 // pred_check_branch
        %7309 = sbr.rel (%p7307) target = $region44
      $region43: #{tpu_custom_call.1} parent=5 // pred_region
        %s7310 = ssub.s32 %s15, 2
        // Predicated region
        $region45: #{tpu_custom_call.1} parent=43 // pred_check
          %p7311 = pneg %p91
        $region46: #{tpu_custom_call.1} parent=43 // pred_check_branch
          %7313 = sbr.rel (%p7311) target = $region48
        $region47: #{tpu_custom_call.1} parent=43 // pred_region
          %s7314 = sand.u32 %s76, 1
          %s7315 = scalar_lea.sflag [#allocation4], %s7314
          %s7316 = sand.u32 %s76, 1
          %s7317 = smul.addr %s7316, 2
          %s7318 = scalar_lea.vmem [#allocation7], %s7317
          %7319 = dma.done %s7315, 32
        $region48: #{tpu_custom_call.1} parent=43 // pred_fallthru
          _
      $region44: #{tpu_custom_call.1} parent=5 // pred_fallthru
        _
    $region6: #{tpu_custom_call.1} parent=1 // loop_footer
      %s19 = sadd.s32 1, %s15
    $region7: #{tpu_custom_call.1} parent=1 // loop_footer_branch
      %14 = sbr.rel target = $region3
    $region8: #{tpu_custom_call.1} parent=1 // loop_exit
      _
    %7320 = vsyncpa [#allocation3], 1
    %s7321 = scalar_lea.sflag [#allocation3], 1
    %7322 = vsyncpa %s7321, 1
    %7323 = vsyncpa [#allocation6], 1
    %7324 = vsyncpa [#allocation4], 1
    %s7325 = scalar_lea.sflag [#allocation4], 1
    %7326 = vsyncpa %s7325, 1

</llo_original>
